<compile_context>
chip_gen: v5e
topology: v5e:2x2
jax: 0.10.0
libtpu: 0.0.40
codegen_flags: <defaults>
</compile_context>

<pallas_src>
import jax
import jax.numpy as jnp
from jax.experimental import pallas as pl
from jax.experimental.pallas import tpu as pltpu


# ----------------------------------------------------------------------------
# Fused GRU step (traced inside the kernel).
#   gate columns: [ R | Z | N ], each of width W (W = 2H for the direction-fused
#   encoders, W = H for the decoder layers).
#   gx already contains  x@W_ih + b_ih (all gates) + b_hh (r,z gates only).
# ----------------------------------------------------------------------------
def _fused_gru_step(gx, h, whh_bf16, bhh_n, W):
    gh = jnp.dot(h.astype(jnp.bfloat16), whh_bf16,
                 preferred_element_type=jnp.float32)              # (B, 3W) on MXU
    ru = jax.nn.sigmoid(gx[:, :2 * W] + gh[:, :2 * W])            # one EUP push for r&z
    r = ru[:, :W]
    u = ru[:, W:]
    n = jnp.tanh(gx[:, 2 * W:] + r * (gh[:, 2 * W:] + bhh_n))     # b_hh_n stays inside r*(.)
    return (1.0 - u) * n + u * h


# ----------------------------------------------------------------------------
# The one fused kernel: encoders -> latent -> decoder -> logits.
# ----------------------------------------------------------------------------
def make_rvae_kernel(S, Sd, B, H, L, V):
    H2 = 2 * H                                                    # fused bidirectional width

    def kernel(gx_o_ref, gx_p_ref,                                # (S*B, 6H) f32 each
               whh_o_ref, bhhn_o_ref,                             # (2H, 6H) bf16, (1, 2H) f32
               whh_p_ref, bhhn_p_ref,
               ml_w_ref, ml_b_ref, eps_ref,                       # (2H, 2L) bf16, (1, 2L), (B, L)
               gx1_ref, wz1_ref, whh1_ref, bhhn1_ref,             # (Sd*B,3H), (L,3H)bf16, (H,3H)bf16, (1,H)
               wih2_ref, bih2_ref, whh2_ref, bhhn2_ref,           # (H,3H)bf16, (1,3H), (H,3H)bf16, (1,H)
               out_w_ref, out_b_ref,                              # (H, V) bf16, (1, V)
               logits_ref, hT_ref, kld_ref,                       # (B*Sd, V), (2, B, H), (1, 1)
               h2_buf):                                           # scratch: (B, Sd, H) f32
        # ----- original encoder: fwd+bwd block-diagonal fused, h = [h_f | h_b] -----
        whh_o, bhhn_o = whh_o_ref[...], bhhn_o_ref[...]
        h_o = jnp.zeros((B, H2), jnp.float32)
        for t in range(S):                                        # static unroll (S=8)
            h_o = _fused_gru_step(gx_o_ref[t * B:(t + 1) * B, :], h_o, whh_o, bhhn_o, H2)

        # ----- paraphrase encoder, initialised from original encoder hidden -----
        whh_p, bhhn_p = whh_p_ref[...], bhhn_p_ref[...]
        h_p = h_o
        for t in range(S):
            h_p = _fused_gru_step(gx_p_ref[t * B:(t + 1) * B, :], h_p, whh_p, bhhn_p, H2)

        # ----- latent head: context = [h_pf | h_pb] = h_p  ->  mu|logvar -> z, KLD -----
        ml = jnp.dot(h_p.astype(jnp.bfloat16), ml_w_ref[...],
                     preferred_element_type=jnp.float32) + ml_b_ref[...]   # (B, 2L)
        mu = ml[:, :L]
        lv = ml[:, L:]
        std = jnp.exp(0.5 * lv)
        z = eps_ref[...] * std + mu
        term = lv - mu * mu - jnp.exp(lv) + 1.0                   # (B, L)
        kld_ref[...] = jnp.sum(term, keepdims=True) * (-0.5 / B)  # mean over batch of row sums

        # ----- decoder: 2-layer GRU seeded from original encoder hidden -----
        gz = jnp.dot(z.astype(jnp.bfloat16), wz1_ref[...],
                     preferred_element_type=jnp.float32)          # z part of layer-1 input proj
        whh1, bhhn1 = whh1_ref[...], bhhn1_ref[...]
        wih2, bih2 = wih2_ref[...], bih2_ref[...]
        whh2, bhhn2 = whh2_ref[...], bhhn2_ref[...]
        h1 = h_o[:, :H]                                           # fwd-dir hidden -> layer 1
        h2 = h_o[:, H:]                                           # bwd-dir hidden -> layer 2
        for t in range(Sd):                                       # static unroll (Sd=8)
            gx1 = gx1_ref[t * B:(t + 1) * B, :] + gz
            h1 = _fused_gru_step(gx1, h1, whh1, bhhn1, H)
            gx2 = jnp.dot(h1.astype(jnp.bfloat16), wih2,
                          preferred_element_type=jnp.float32) + bih2
            h2 = _fused_gru_step(gx2, h2, whh2, bhhn2, H)
            h2_buf[:, t, :] = h2                                  # stage; off the recurrence chain

        # ----- output projection hoisted out of the loop: one dense (B*Sd, V) matmul/store -----
        flat = h2_buf[...].reshape(B * Sd, H)
        logits_ref[...] = (jnp.dot(flat.astype(jnp.bfloat16), out_w_ref[...],
                                   preferred_element_type=jnp.float32)
                           + out_b_ref[...]).astype(logits_ref.dtype)
        hT_ref[0] = h1
        hT_ref[1] = h2

    return kernel


# ----------------------------------------------------------------------------
# Model configuration / parameters
# ----------------------------------------------------------------------------
class Params:
    word_vocab_size = 128
    char_vocab_size = 32
    word_embed_size = 24
    char_embed_size = 8
    char_feat_size = 8          # width-1 TDNN output channels
    encoder_rnn_size = 32
    decoder_rnn_size = 32       # == encoder_rnn_size so encoder hidden can seed decoder
    latent_variable_size = 16

    @property
    def embed_size(self):
        return self.word_embed_size + self.char_feat_size


def _gru_raw(key, in_dim, hid):
    """Standard GRU weights, gate order [r | z | n] along the fused 3H axis."""
    k1, k2, k3, k4 = jax.random.split(key, 4)
    return dict(
        wih=0.1 * jax.random.normal(k1, (in_dim, 3 * hid), jnp.float32),
        whh=0.1 * jax.random.normal(k2, (hid, 3 * hid), jnp.float32),
        bih=0.1 * jax.random.normal(k3, (1, 3 * hid), jnp.float32),
        bhh=0.1 * jax.random.normal(k4, (1, 3 * hid), jnp.float32),
    )


def _bidir_fuse(fwd, bwd, H):
    """Fuse fwd/bwd GRU directions.  Hidden layout [h_f | h_b] (width 2H); fused gate
    column layout [r_f r_b | z_f z_b | n_f n_b] (width 6H).  W_hh becomes a block
    matrix; W_ih / biases are zero-padded per direction so the wrapper assembles gx
    with plain adds.  b_hh for r,z is folded into the bias; b_hh_n stays separate."""
    def col(w, g):
        return w[:, g * H:(g + 1) * H]

    whh = jnp.zeros((2 * H, 6 * H), jnp.float32)
    for g in range(3):
        whh = whh.at[:H, (2 * g) * H:(2 * g + 1) * H].set(col(fwd["whh"], g))
        whh = whh.at[H:, (2 * g + 1) * H:(2 * g + 2) * H].set(col(bwd["whh"], g))

    def pad_dir(gru, off):
        E = gru["wih"].shape[0]
        wp = jnp.zeros((E, 6 * H), jnp.float32)
        bp = jnp.zeros((1, 6 * H), jnp.float32)
        for g in range(3):
            lo, hi = (2 * g + off) * H, (2 * g + 1 + off) * H
            wp = wp.at[:, lo:hi].set(col(gru["wih"], g))
            bp = bp.at[:, lo:hi].set(col(gru["bih"], g))
            if g < 2:                                   # fold b_hh for r,z into the gx bias
                bp = bp.at[:, lo:hi].add(col(gru["bhh"], g))
        return wp, bp

    wih_f, bias_f = pad_dir(fwd, 0)
    wih_b, bias_b = pad_dir(bwd, 1)
    bhh_n = jnp.concatenate([col(fwd["bhh"], 2), col(bwd["bhh"], 2)], axis=1)   # (1, 2H)
    return dict(whh=whh.astype(jnp.bfloat16), bhh_n=bhh_n,
                wih_f=wih_f, bias_f=bias_f, wih_b=wih_b, bias_b=bias_b)


def init_weights(key, p: Params):
    ks = jax.random.split(key, 16)
    H, L, E, We = p.encoder_rnn_size, p.latent_variable_size, p.embed_size, p.word_embed_size
    Hd = p.decoder_rnn_size
    assert Hd == H, "decoder hidden must equal encoder hidden to seed from encoder state"

    of = _gru_raw(ks[4], E, H)
    ob = _gru_raw(ks[5], E, H)
    pf = _gru_raw(ks[6], E, H)
    pb = _gru_raw(ks[7], E, H)
    d1 = _gru_raw(ks[12], We + L, Hd)
    d2 = _gru_raw(ks[13], Hd, Hd)
    mu_w = 0.1 * jax.random.normal(ks[8], (2 * H, L), jnp.float32)
    mu_b = 0.1 * jax.random.normal(ks[9], (1, L), jnp.float32)
    lv_w = 0.1 * jax.random.normal(ks[10], (2 * H, L), jnp.float32)
    lv_b = 0.1 * jax.random.normal(ks[11], (1, L), jnp.float32)

    def fold_bias(gru, hid):     # b_ih + [b_hh_r, b_hh_z, 0]  (b_hh_n handled in-kernel)
        return gru["bih"] + jnp.concatenate(
            [gru["bhh"][:, :2 * hid], jnp.zeros((1, hid), jnp.float32)], axis=1)

    return {
        "word_emb": 0.1 * jax.random.normal(ks[0], (p.word_vocab_size, We), jnp.float32),
        "char_emb": 0.1 * jax.random.normal(ks[1], (p.char_vocab_size, p.char_embed_size), jnp.float32),
        "char_proj_w": 0.1 * jax.random.normal(ks[2], (p.char_embed_size, p.char_feat_size), jnp.float32),
        "char_proj_b": 0.1 * jax.random.normal(ks[3], (p.char_feat_size,), jnp.float32),
        "oenc": _bidir_fuse(of, ob, H),
        "penc": _bidir_fuse(pf, pb, H),
        # mu and logvar heads concatenated along N -> one in-kernel matmul
        "ml_w": jnp.concatenate([mu_w, lv_w], axis=1).astype(jnp.bfloat16),
        "ml_b": jnp.concatenate([mu_b, lv_b], axis=1),
        # decoder layer 1: x = [word_emb | z]; emb part projected in XLA (hoisted), z part in-kernel
        "dec1_wih_emb": d1["wih"][:We],
        "dec1_wih_z": d1["wih"][We:].astype(jnp.bfloat16),
        "dec1_bias": fold_bias(d1, Hd),
        "dec1_whh": d1["whh"].astype(jnp.bfloat16),
        "dec1_bhh_n": d1["bhh"][:, 2 * Hd:],
        # decoder layer 2 (its input h1 is produced in-kernel)
        "dec2_wih": d2["wih"].astype(jnp.bfloat16),
        "dec2_bias": fold_bias(d2, Hd),
        "dec2_whh": d2["whh"].astype(jnp.bfloat16),
        "dec2_bhh_n": d2["bhh"][:, 2 * Hd:],
        "out_w": (0.1 * jax.random.normal(ks[14], (Hd, p.word_vocab_size), jnp.float32)).astype(jnp.bfloat16),
        "out_b": 0.1 * jax.random.normal(ks[15], (1, p.word_vocab_size), jnp.float32),
    }


# ----------------------------------------------------------------------------
# Forward pass (XLA glue: embedding gathers + hoisted x-projections; Pallas: everything else)
# ----------------------------------------------------------------------------
def embed_tm(word_ids, char_ids, W):
    """Word embedding ++ char features, produced TIME-MAJOR (only int ids are transposed)."""
    # TODO(synk): the original Embedding uses a multi-width char TDNN; its source was not
    #             provided, so it is reduced to a width-1 conv (linear proj + max-pool).
    wid_tm = word_ids.T                                           # (S, B) int
    cid_tm = jnp.transpose(char_ids, (1, 0, 2))                   # (S, B, Lc) int
    we = jnp.take(W["word_emb"], wid_tm, axis=0)                  # (S, B, We)
    ce = jnp.take(W["char_emb"], cid_tm, axis=0)                  # (S, B, Lc, Ce)
    proj = jnp.einsum("sblc,cf->sblf", ce, W["char_proj_w"]) + W["char_proj_b"]
    cf = jnp.max(proj, axis=2)                                    # (S, B, Cf)
    return jnp.concatenate([we, cf], axis=-1)                     # (S, B, E)


def rvae_forward(p: Params, W, drop_prob,
                 orig_word, orig_char, para_word, para_char, dec_word, key):
    B, S = orig_word.shape
    Sd = dec_word.shape[1]
    H, Hd, L, We, V = (p.encoder_rnn_size, p.decoder_rnn_size,
                       p.latent_variable_size, p.word_embed_size, p.word_vocab_size)

    # ----- embeddings (time-major) + hoisted encoder input projections (no seq dependence) -----
    orig_x = embed_tm(orig_word, orig_char, W)                    # (S, B, E)
    para_x = embed_tm(para_word, para_char, W)

    def enc_gx(x, enc):
        gxf = jnp.dot(x, enc["wih_f"]) + enc["bias_f"]            # fwd gate cols, bwd cols zero
        gxb = jnp.dot(x, enc["wih_b"]) + enc["bias_b"]            # bwd gate cols, fwd cols zero
        return (gxf + gxb[::-1]).reshape(S * B, 6 * H)            # bwd direction time-reversed

    gx_o = enc_gx(orig_x, W["oenc"])
    gx_p = enc_gx(para_x, W["penc"])

    eps = jax.random.normal(key, (B, L), jnp.float32)

    # ----- decoder word embedding (+ word dropout), hoisted emb-part of layer-1 projection -----
    # TODO(synk): Decoder internals are unspecified upstream; assumed 2-layer GRU over
    #             [word_emb | z] with inverted-dropout on the input embedding.
    dec_emb = jnp.take(W["word_emb"], dec_word.T, axis=0)         # (Sd, B, We)
    if drop_prob > 0.0:
        mask = jax.random.bernoulli(jax.random.fold_in(key, 1),
                                    1.0 - drop_prob, dec_emb.shape)
        dec_emb = dec_emb * mask.astype(jnp.float32) / (1.0 - drop_prob)
    gx1 = (jnp.dot(dec_emb, W["dec1_wih_emb"]) + W["dec1_bias"]).reshape(Sd * B, 3 * Hd)

    # ----- the single fused Pallas kernel -----
    logits_flat, final_state, kld = pl.pallas_call(
        make_rvae_kernel(S, Sd, B, Hd, L, V),
        out_shape=(jax.ShapeDtypeStruct((B * Sd, V), jnp.float32),
                   jax.ShapeDtypeStruct((2, B, Hd), jnp.float32),
                   jax.ShapeDtypeStruct((1, 1), jnp.float32)),
        scratch_shapes=[pltpu.VMEM((B, Sd, Hd), jnp.float32)],
    )(gx_o, gx_p,
      W["oenc"]["whh"], W["oenc"]["bhh_n"],
      W["penc"]["whh"], W["penc"]["bhh_n"],
      W["ml_w"], W["ml_b"], eps,
      gx1, W["dec1_wih_z"], W["dec1_whh"], W["dec1_bhh_n"],
      W["dec2_wih"], W["dec2_bias"], W["dec2_whh"], W["dec2_bhh_n"],
      W["out_w"], W["out_b"])

    logits = logits_flat.reshape(B, Sd, V)                        # free reshape, no transpose
    return logits, final_state, kld[0, 0]


# ----------------------------------------------------------------------------
if __name__ == "__main__":
    p = Params()
    key = jax.random.PRNGKey(0)
    wkey, dkey = jax.random.split(key)
    W = init_weights(wkey, p)

    B, S, Lc = 2, 8, 6
    ks = jax.random.split(dkey, 6)
    orig_word = jax.random.randint(ks[0], (B, S), 0, p.word_vocab_size)
    orig_char = jax.random.randint(ks[1], (B, S, Lc), 0, p.char_vocab_size)
    para_word = jax.random.randint(ks[2], (B, S), 0, p.word_vocab_size)
    para_char = jax.random.randint(ks[3], (B, S, Lc), 0, p.char_vocab_size)
    dec_word = jax.random.randint(ks[4], (B, S), 0, p.word_vocab_size)

    fwd = jax.jit(lambda W, ow, oc, pw, pc, dw, k:
                  rvae_forward(p, W, 0.0, ow, oc, pw, pc, dw, k))
    logits, final_state, kld = fwd(W, orig_word, orig_char, para_word, para_char,
                                   dec_word, ks[5])
    jax.block_until_ready((logits, final_state, kld))

    assert logits.shape == (B, S, p.word_vocab_size)
    assert final_state.shape == (2, B, p.decoder_rnn_size)
    assert kld.shape == ()
    assert bool(jnp.all(jnp.isfinite(logits))) and bool(jnp.isfinite(kld))
    print("KERNEL_OK")
</pallas_src>

<mosaic_0001>
module attributes {stable_mosaic.version = 11 : i64} {
  func.func @kernel(%arg0: memref<16x192xf32, #tpu.memory_space<vmem>>, %arg1: memref<16x192xf32, #tpu.memory_space<vmem>>, %arg2: memref<64x192xbf16, #tpu.memory_space<vmem>>, %arg3: memref<1x64xf32, #tpu.memory_space<vmem>>, %arg4: memref<64x192xbf16, #tpu.memory_space<vmem>>, %arg5: memref<1x64xf32, #tpu.memory_space<vmem>>, %arg6: memref<64x32xbf16, #tpu.memory_space<vmem>>, %arg7: memref<1x32xf32, #tpu.memory_space<vmem>>, %arg8: memref<2x16xf32, #tpu.memory_space<vmem>>, %arg9: memref<16x96xf32, #tpu.memory_space<vmem>>, %arg10: memref<16x96xbf16, #tpu.memory_space<vmem>>, %arg11: memref<32x96xbf16, #tpu.memory_space<vmem>>, %arg12: memref<1x32xf32, #tpu.memory_space<vmem>>, %arg13: memref<32x96xbf16, #tpu.memory_space<vmem>>, %arg14: memref<1x96xf32, #tpu.memory_space<vmem>>, %arg15: memref<32x96xbf16, #tpu.memory_space<vmem>>, %arg16: memref<1x32xf32, #tpu.memory_space<vmem>>, %arg17: memref<32x128xbf16, #tpu.memory_space<vmem>>, %arg18: memref<1x128xf32, #tpu.memory_space<vmem>>, %arg19: memref<16x128xf32, #tpu.memory_space<vmem>>, %arg20: memref<2x2x32xf32, #tpu.memory_space<vmem>>, %arg21: memref<1x1xf32, #tpu.memory_space<vmem>>, %arg22: memref<2x8x32xf32, #tpu.memory_space<vmem>>) attributes {dimension_semantics = [], scalar_prefetch = 0 : i64, scratch_operands = 1 : i64, tpu.core_type = #tpu.core_type<tc>} {
    %c0 = arith.constant 0 : index
    %c0_0 = arith.constant 0 : index
    %0 = vector.load %arg2[%c0, %c0_0] : memref<64x192xbf16, #tpu.memory_space<vmem>>, vector<64x192xbf16>
    %c0_1 = arith.constant 0 : index
    %c0_2 = arith.constant 0 : index
    %1 = vector.load %arg3[%c0_1, %c0_2] : memref<1x64xf32, #tpu.memory_space<vmem>>, vector<1x64xf32>
    %cst = arith.constant 0.000000e+00 : f32
    %2 = vector.broadcast %cst : f32 to vector<2x64xf32>
    %c0_3 = arith.constant 0 : index
    %c0_4 = arith.constant 0 : index
    %3 = vector.load %arg0[%c0_3, %c0_4] : memref<16x192xf32, #tpu.memory_space<vmem>>, vector<2x192xf32>
    %4 = arith.truncf %2 : vector<2x64xf32> to vector<2x64xbf16>
    %cst_5 = arith.constant dense<0.000000e+00> : vector<2x192xf32>
    %5 = tpu.matmul %4, %0, %cst_5 {dimension_numbers = #tpu.dot_dimension_numbers<[1], [0], [0], [1], [0, 0, 1, 1], [], []>} : vector<2x64xbf16>, vector<64x192xbf16>, vector<2x192xf32> -> vector<2x192xf32>
    %6 = vector.extract_strided_slice %3 {offsets = [0, 0], sizes = [2, 128], strides = [1, 1]} : vector<2x192xf32> to vector<2x128xf32>
    %7 = vector.extract_strided_slice %5 {offsets = [0, 0], sizes = [2, 128], strides = [1, 1]} : vector<2x192xf32> to vector<2x128xf32>
    %8 = arith.addf %6, %7 : vector<2x128xf32>
    %9 = arith.negf %8 : vector<2x128xf32>
    %10 = math.exp %9 : vector<2x128xf32>
    %cst_6 = arith.constant 1.000000e+00 : f32
    %11 = vector.broadcast %cst_6 : f32 to vector<2x128xf32>
    %12 = arith.addf %11, %10 : vector<2x128xf32>
    %13 = arith.divf %11, %12 : vector<2x128xf32>
    %14 = vector.extract_strided_slice %13 {offsets = [0, 0], sizes = [2, 64], strides = [1, 1]} : vector<2x128xf32> to vector<2x64xf32>
    %15 = vector.extract_strided_slice %13 {offsets = [0, 64], sizes = [2, 64], strides = [1, 1]} : vector<2x128xf32> to vector<2x64xf32>
    %16 = vector.extract_strided_slice %3 {offsets = [0, 128], sizes = [2, 64], strides = [1, 1]} : vector<2x192xf32> to vector<2x64xf32>
    %17 = vector.extract_strided_slice %5 {offsets = [0, 128], sizes = [2, 64], strides = [1, 1]} : vector<2x192xf32> to vector<2x64xf32>
    %18 = vector.broadcast %1 : vector<1x64xf32> to vector<2x64xf32>
    %19 = arith.addf %17, %18 : vector<2x64xf32>
    %20 = arith.mulf %14, %19 : vector<2x64xf32>
    %21 = arith.addf %16, %20 : vector<2x64xf32>
    %22 = math.tanh %21 : vector<2x64xf32>
    %cst_7 = arith.constant 1.000000e+00 : f32
    %23 = vector.broadcast %cst_7 : f32 to vector<2x64xf32>
    %24 = arith.subf %23, %15 : vector<2x64xf32>
    %25 = arith.mulf %24, %22 : vector<2x64xf32>
    %26 = arith.mulf %15, %2 : vector<2x64xf32>
    %27 = arith.addf %25, %26 : vector<2x64xf32>
    %c2 = arith.constant 2 : index
    %c0_8 = arith.constant 0 : index
    %28 = vector.load %arg0[%c2, %c0_8] : memref<16x192xf32, #tpu.memory_space<vmem>>, vector<2x192xf32>
    %29 = arith.truncf %27 : vector<2x64xf32> to vector<2x64xbf16>
    %cst_9 = arith.constant dense<0.000000e+00> : vector<2x192xf32>
    %30 = tpu.matmul %29, %0, %cst_9 {dimension_numbers = #tpu.dot_dimension_numbers<[1], [0], [0], [1], [0, 0, 1, 1], [], []>} : vector<2x64xbf16>, vector<64x192xbf16>, vector<2x192xf32> -> vector<2x192xf32>
    %31 = vector.extract_strided_slice %28 {offsets = [0, 0], sizes = [2, 128], strides = [1, 1]} : vector<2x192xf32> to vector<2x128xf32>
    %32 = vector.extract_strided_slice %30 {offsets = [0, 0], sizes = [2, 128], strides = [1, 1]} : vector<2x192xf32> to vector<2x128xf32>
    %33 = arith.addf %31, %32 : vector<2x128xf32>
    %34 = arith.negf %33 : vector<2x128xf32>
    %35 = math.exp %34 : vector<2x128xf32>
    %cst_10 = arith.constant 1.000000e+00 : f32
    %36 = vector.broadcast %cst_10 : f32 to vector<2x128xf32>
    %37 = arith.addf %36, %35 : vector<2x128xf32>
    %38 = arith.divf %36, %37 : vector<2x128xf32>
    %39 = vector.extract_strided_slice %38 {offsets = [0, 0], sizes = [2, 64], strides = [1, 1]} : vector<2x128xf32> to vector<2x64xf32>
    %40 = vector.extract_strided_slice %38 {offsets = [0, 64], sizes = [2, 64], strides = [1, 1]} : vector<2x128xf32> to vector<2x64xf32>
    %41 = vector.extract_strided_slice %28 {offsets = [0, 128], sizes = [2, 64], strides = [1, 1]} : vector<2x192xf32> to vector<2x64xf32>
    %42 = vector.extract_strided_slice %30 {offsets = [0, 128], sizes = [2, 64], strides = [1, 1]} : vector<2x192xf32> to vector<2x64xf32>
    %43 = vector.broadcast %1 : vector<1x64xf32> to vector<2x64xf32>
    %44 = arith.addf %42, %43 : vector<2x64xf32>
    %45 = arith.mulf %39, %44 : vector<2x64xf32>
    %46 = arith.addf %41, %45 : vector<2x64xf32>
    %47 = math.tanh %46 : vector<2x64xf32>
    %cst_11 = arith.constant 1.000000e+00 : f32
    %48 = vector.broadcast %cst_11 : f32 to vector<2x64xf32>
    %49 = arith.subf %48, %40 : vector<2x64xf32>
    %50 = arith.mulf %49, %47 : vector<2x64xf32>
    %51 = arith.mulf %40, %27 : vector<2x64xf32>
    %52 = arith.addf %50, %51 : vector<2x64xf32>
    %c4 = arith.constant 4 : index
    %c0_12 = arith.constant 0 : index
    %53 = vector.load %arg0[%c4, %c0_12] : memref<16x192xf32, #tpu.memory_space<vmem>>, vector<2x192xf32>
    %54 = arith.truncf %52 : vector<2x64xf32> to vector<2x64xbf16>
    %cst_13 = arith.constant dense<0.000000e+00> : vector<2x192xf32>
    %55 = tpu.matmul %54, %0, %cst_13 {dimension_numbers = #tpu.dot_dimension_numbers<[1], [0], [0], [1], [0, 0, 1, 1], [], []>} : vector<2x64xbf16>, vector<64x192xbf16>, vector<2x192xf32> -> vector<2x192xf32>
    %56 = vector.extract_strided_slice %53 {offsets = [0, 0], sizes = [2, 128], strides = [1, 1]} : vector<2x192xf32> to vector<2x128xf32>
    %57 = vector.extract_strided_slice %55 {offsets = [0, 0], sizes = [2, 128], strides = [1, 1]} : vector<2x192xf32> to vector<2x128xf32>
    %58 = arith.addf %56, %57 : vector<2x128xf32>
    %59 = arith.negf %58 : vector<2x128xf32>
    %60 = math.exp %59 : vector<2x128xf32>
    %cst_14 = arith.constant 1.000000e+00 : f32
    %61 = vector.broadcast %cst_14 : f32 to vector<2x128xf32>
    %62 = arith.addf %61, %60 : vector<2x128xf32>
    %63 = arith.divf %61, %62 : vector<2x128xf32>
    %64 = vector.extract_strided_slice %63 {offsets = [0, 0], sizes = [2, 64], strides = [1, 1]} : vector<2x128xf32> to vector<2x64xf32>
    %65 = vector.extract_strided_slice %63 {offsets = [0, 64], sizes = [2, 64], strides = [1, 1]} : vector<2x128xf32> to vector<2x64xf32>
    %66 = vector.extract_strided_slice %53 {offsets = [0, 128], sizes = [2, 64], strides = [1, 1]} : vector<2x192xf32> to vector<2x64xf32>
    %67 = vector.extract_strided_slice %55 {offsets = [0, 128], sizes = [2, 64], strides = [1, 1]} : vector<2x192xf32> to vector<2x64xf32>
    %68 = vector.broadcast %1 : vector<1x64xf32> to vector<2x64xf32>
    %69 = arith.addf %67, %68 : vector<2x64xf32>
    %70 = arith.mulf %64, %69 : vector<2x64xf32>
    %71 = arith.addf %66, %70 : vector<2x64xf32>
    %72 = math.tanh %71 : vector<2x64xf32>
    %cst_15 = arith.constant 1.000000e+00 : f32
    %73 = vector.broadcast %cst_15 : f32 to vector<2x64xf32>
    %74 = arith.subf %73, %65 : vector<2x64xf32>
    %75 = arith.mulf %74, %72 : vector<2x64xf32>
    %76 = arith.mulf %65, %52 : vector<2x64xf32>
    %77 = arith.addf %75, %76 : vector<2x64xf32>
    %c6 = arith.constant 6 : index
    %c0_16 = arith.constant 0 : index
    %78 = vector.load %arg0[%c6, %c0_16] : memref<16x192xf32, #tpu.memory_space<vmem>>, vector<2x192xf32>
    %79 = arith.truncf %77 : vector<2x64xf32> to vector<2x64xbf16>
    %cst_17 = arith.constant dense<0.000000e+00> : vector<2x192xf32>
    %80 = tpu.matmul %79, %0, %cst_17 {dimension_numbers = #tpu.dot_dimension_numbers<[1], [0], [0], [1], [0, 0, 1, 1], [], []>} : vector<2x64xbf16>, vector<64x192xbf16>, vector<2x192xf32> -> vector<2x192xf32>
    %81 = vector.extract_strided_slice %78 {offsets = [0, 0], sizes = [2, 128], strides = [1, 1]} : vector<2x192xf32> to vector<2x128xf32>
    %82 = vector.extract_strided_slice %80 {offsets = [0, 0], sizes = [2, 128], strides = [1, 1]} : vector<2x192xf32> to vector<2x128xf32>
    %83 = arith.addf %81, %82 : vector<2x128xf32>
    %84 = arith.negf %83 : vector<2x128xf32>
    %85 = math.exp %84 : vector<2x128xf32>
    %cst_18 = arith.constant 1.000000e+00 : f32
    %86 = vector.broadcast %cst_18 : f32 to vector<2x128xf32>
    %87 = arith.addf %86, %85 : vector<2x128xf32>
    %88 = arith.divf %86, %87 : vector<2x128xf32>
    %89 = vector.extract_strided_slice %88 {offsets = [0, 0], sizes = [2, 64], strides = [1, 1]} : vector<2x128xf32> to vector<2x64xf32>
    %90 = vector.extract_strided_slice %88 {offsets = [0, 64], sizes = [2, 64], strides = [1, 1]} : vector<2x128xf32> to vector<2x64xf32>
    %91 = vector.extract_strided_slice %78 {offsets = [0, 128], sizes = [2, 64], strides = [1, 1]} : vector<2x192xf32> to vector<2x64xf32>
    %92 = vector.extract_strided_slice %80 {offsets = [0, 128], sizes = [2, 64], strides = [1, 1]} : vector<2x192xf32> to vector<2x64xf32>
    %93 = vector.broadcast %1 : vector<1x64xf32> to vector<2x64xf32>
    %94 = arith.addf %92, %93 : vector<2x64xf32>
    %95 = arith.mulf %89, %94 : vector<2x64xf32>
    %96 = arith.addf %91, %95 : vector<2x64xf32>
    %97 = math.tanh %96 : vector<2x64xf32>
    %cst_19 = arith.constant 1.000000e+00 : f32
    %98 = vector.broadcast %cst_19 : f32 to vector<2x64xf32>
    %99 = arith.subf %98, %90 : vector<2x64xf32>
    %100 = arith.mulf %99, %97 : vector<2x64xf32>
    %101 = arith.mulf %90, %77 : vector<2x64xf32>
    %102 = arith.addf %100, %101 : vector<2x64xf32>
    %c8 = arith.constant 8 : index
    %c0_20 = arith.constant 0 : index
    %103 = vector.load %arg0[%c8, %c0_20] : memref<16x192xf32, #tpu.memory_space<vmem>>, vector<2x192xf32>
    %104 = arith.truncf %102 : vector<2x64xf32> to vector<2x64xbf16>
    %cst_21 = arith.constant dense<0.000000e+00> : vector<2x192xf32>
    %105 = tpu.matmul %104, %0, %cst_21 {dimension_numbers = #tpu.dot_dimension_numbers<[1], [0], [0], [1], [0, 0, 1, 1], [], []>} : vector<2x64xbf16>, vector<64x192xbf16>, vector<2x192xf32> -> vector<2x192xf32>
    %106 = vector.extract_strided_slice %103 {offsets = [0, 0], sizes = [2, 128], strides = [1, 1]} : vector<2x192xf32> to vector<2x128xf32>
    %107 = vector.extract_strided_slice %105 {offsets = [0, 0], sizes = [2, 128], strides = [1, 1]} : vector<2x192xf32> to vector<2x128xf32>
    %108 = arith.addf %106, %107 : vector<2x128xf32>
    %109 = arith.negf %108 : vector<2x128xf32>
    %110 = math.exp %109 : vector<2x128xf32>
    %cst_22 = arith.constant 1.000000e+00 : f32
    %111 = vector.broadcast %cst_22 : f32 to vector<2x128xf32>
    %112 = arith.addf %111, %110 : vector<2x128xf32>
    %113 = arith.divf %111, %112 : vector<2x128xf32>
    %114 = vector.extract_strided_slice %113 {offsets = [0, 0], sizes = [2, 64], strides = [1, 1]} : vector<2x128xf32> to vector<2x64xf32>
    %115 = vector.extract_strided_slice %113 {offsets = [0, 64], sizes = [2, 64], strides = [1, 1]} : vector<2x128xf32> to vector<2x64xf32>
    %116 = vector.extract_strided_slice %103 {offsets = [0, 128], sizes = [2, 64], strides = [1, 1]} : vector<2x192xf32> to vector<2x64xf32>
    %117 = vector.extract_strided_slice %105 {offsets = [0, 128], sizes = [2, 64], strides = [1, 1]} : vector<2x192xf32> to vector<2x64xf32>
    %118 = vector.broadcast %1 : vector<1x64xf32> to vector<2x64xf32>
    %119 = arith.addf %117, %118 : vector<2x64xf32>
    %120 = arith.mulf %114, %119 : vector<2x64xf32>
    %121 = arith.addf %116, %120 : vector<2x64xf32>
    %122 = math.tanh %121 : vector<2x64xf32>
    %cst_23 = arith.constant 1.000000e+00 : f32
    %123 = vector.broadcast %cst_23 : f32 to vector<2x64xf32>
    %124 = arith.subf %123, %115 : vector<2x64xf32>
    %125 = arith.mulf %124, %122 : vector<2x64xf32>
    %126 = arith.mulf %115, %102 : vector<2x64xf32>
    %127 = arith.addf %125, %126 : vector<2x64xf32>
    %c10 = arith.constant 10 : index
    %c0_24 = arith.constant 0 : index
    %128 = vector.load %arg0[%c10, %c0_24] : memref<16x192xf32, #tpu.memory_space<vmem>>, vector<2x192xf32>
    %129 = arith.truncf %127 : vector<2x64xf32> to vector<2x64xbf16>
    %cst_25 = arith.constant dense<0.000000e+00> : vector<2x192xf32>
    %130 = tpu.matmul %129, %0, %cst_25 {dimension_numbers = #tpu.dot_dimension_numbers<[1], [0], [0], [1], [0, 0, 1, 1], [], []>} : vector<2x64xbf16>, vector<64x192xbf16>, vector<2x192xf32> -> vector<2x192xf32>
    %131 = vector.extract_strided_slice %128 {offsets = [0, 0], sizes = [2, 128], strides = [1, 1]} : vector<2x192xf32> to vector<2x128xf32>
    %132 = vector.extract_strided_slice %130 {offsets = [0, 0], sizes = [2, 128], strides = [1, 1]} : vector<2x192xf32> to vector<2x128xf32>
    %133 = arith.addf %131, %132 : vector<2x128xf32>
    %134 = arith.negf %133 : vector<2x128xf32>
    %135 = math.exp %134 : vector<2x128xf32>
    %cst_26 = arith.constant 1.000000e+00 : f32
    %136 = vector.broadcast %cst_26 : f32 to vector<2x128xf32>
    %137 = arith.addf %136, %135 : vector<2x128xf32>
    %138 = arith.divf %136, %137 : vector<2x128xf32>
    %139 = vector.extract_strided_slice %138 {offsets = [0, 0], sizes = [2, 64], strides = [1, 1]} : vector<2x128xf32> to vector<2x64xf32>
    %140 = vector.extract_strided_slice %138 {offsets = [0, 64], sizes = [2, 64], strides = [1, 1]} : vector<2x128xf32> to vector<2x64xf32>
    %141 = vector.extract_strided_slice %128 {offsets = [0, 128], sizes = [2, 64], strides = [1, 1]} : vector<2x192xf32> to vector<2x64xf32>
    %142 = vector.extract_strided_slice %130 {offsets = [0, 128], sizes = [2, 64], strides = [1, 1]} : vector<2x192xf32> to vector<2x64xf32>
    %143 = vector.broadcast %1 : vector<1x64xf32> to vector<2x64xf32>
    %144 = arith.addf %142, %143 : vector<2x64xf32>
    %145 = arith.mulf %139, %144 : vector<2x64xf32>
    %146 = arith.addf %141, %145 : vector<2x64xf32>
    %147 = math.tanh %146 : vector<2x64xf32>
    %cst_27 = arith.constant 1.000000e+00 : f32
    %148 = vector.broadcast %cst_27 : f32 to vector<2x64xf32>
    %149 = arith.subf %148, %140 : vector<2x64xf32>
    %150 = arith.mulf %149, %147 : vector<2x64xf32>
    %151 = arith.mulf %140, %127 : vector<2x64xf32>
    %152 = arith.addf %150, %151 : vector<2x64xf32>
    %c12 = arith.constant 12 : index
    %c0_28 = arith.constant 0 : index
    %153 = vector.load %arg0[%c12, %c0_28] : memref<16x192xf32, #tpu.memory_space<vmem>>, vector<2x192xf32>
    %154 = arith.truncf %152 : vector<2x64xf32> to vector<2x64xbf16>
    %cst_29 = arith.constant dense<0.000000e+00> : vector<2x192xf32>
    %155 = tpu.matmul %154, %0, %cst_29 {dimension_numbers = #tpu.dot_dimension_numbers<[1], [0], [0], [1], [0, 0, 1, 1], [], []>} : vector<2x64xbf16>, vector<64x192xbf16>, vector<2x192xf32> -> vector<2x192xf32>
    %156 = vector.extract_strided_slice %153 {offsets = [0, 0], sizes = [2, 128], strides = [1, 1]} : vector<2x192xf32> to vector<2x128xf32>
    %157 = vector.extract_strided_slice %155 {offsets = [0, 0], sizes = [2, 128], strides = [1, 1]} : vector<2x192xf32> to vector<2x128xf32>
    %158 = arith.addf %156, %157 : vector<2x128xf32>
    %159 = arith.negf %158 : vector<2x128xf32>
    %160 = math.exp %159 : vector<2x128xf32>
    %cst_30 = arith.constant 1.000000e+00 : f32
    %161 = vector.broadcast %cst_30 : f32 to vector<2x128xf32>
    %162 = arith.addf %161, %160 : vector<2x128xf32>
    %163 = arith.divf %161, %162 : vector<2x128xf32>
    %164 = vector.extract_strided_slice %163 {offsets = [0, 0], sizes = [2, 64], strides = [1, 1]} : vector<2x128xf32> to vector<2x64xf32>
    %165 = vector.extract_strided_slice %163 {offsets = [0, 64], sizes = [2, 64], strides = [1, 1]} : vector<2x128xf32> to vector<2x64xf32>
    %166 = vector.extract_strided_slice %153 {offsets = [0, 128], sizes = [2, 64], strides = [1, 1]} : vector<2x192xf32> to vector<2x64xf32>
    %167 = vector.extract_strided_slice %155 {offsets = [0, 128], sizes = [2, 64], strides = [1, 1]} : vector<2x192xf32> to vector<2x64xf32>
    %168 = vector.broadcast %1 : vector<1x64xf32> to vector<2x64xf32>
    %169 = arith.addf %167, %168 : vector<2x64xf32>
    %170 = arith.mulf %164, %169 : vector<2x64xf32>
    %171 = arith.addf %166, %170 : vector<2x64xf32>
    %172 = math.tanh %171 : vector<2x64xf32>
    %cst_31 = arith.constant 1.000000e+00 : f32
    %173 = vector.broadcast %cst_31 : f32 to vector<2x64xf32>
    %174 = arith.subf %173, %165 : vector<2x64xf32>
    %175 = arith.mulf %174, %172 : vector<2x64xf32>
    %176 = arith.mulf %165, %152 : vector<2x64xf32>
    %177 = arith.addf %175, %176 : vector<2x64xf32>
    %c14 = arith.constant 14 : index
    %c0_32 = arith.constant 0 : index
    %178 = vector.load %arg0[%c14, %c0_32] : memref<16x192xf32, #tpu.memory_space<vmem>>, vector<2x192xf32>
    %179 = arith.truncf %177 : vector<2x64xf32> to vector<2x64xbf16>
    %cst_33 = arith.constant dense<0.000000e+00> : vector<2x192xf32>
    %180 = tpu.matmul %179, %0, %cst_33 {dimension_numbers = #tpu.dot_dimension_numbers<[1], [0], [0], [1], [0, 0, 1, 1], [], []>} : vector<2x64xbf16>, vector<64x192xbf16>, vector<2x192xf32> -> vector<2x192xf32>
    %181 = vector.extract_strided_slice %178 {offsets = [0, 0], sizes = [2, 128], strides = [1, 1]} : vector<2x192xf32> to vector<2x128xf32>
    %182 = vector.extract_strided_slice %180 {offsets = [0, 0], sizes = [2, 128], strides = [1, 1]} : vector<2x192xf32> to vector<2x128xf32>
    %183 = arith.addf %181, %182 : vector<2x128xf32>
    %184 = arith.negf %183 : vector<2x128xf32>
    %185 = math.exp %184 : vector<2x128xf32>
    %cst_34 = arith.constant 1.000000e+00 : f32
    %186 = vector.broadcast %cst_34 : f32 to vector<2x128xf32>
    %187 = arith.addf %186, %185 : vector<2x128xf32>
    %188 = arith.divf %186, %187 : vector<2x128xf32>
    %189 = vector.extract_strided_slice %188 {offsets = [0, 0], sizes = [2, 64], strides = [1, 1]} : vector<2x128xf32> to vector<2x64xf32>
    %190 = vector.extract_strided_slice %188 {offsets = [0, 64], sizes = [2, 64], strides = [1, 1]} : vector<2x128xf32> to vector<2x64xf32>
    %191 = vector.extract_strided_slice %178 {offsets = [0, 128], sizes = [2, 64], strides = [1, 1]} : vector<2x192xf32> to vector<2x64xf32>
    %192 = vector.extract_strided_slice %180 {offsets = [0, 128], sizes = [2, 64], strides = [1, 1]} : vector<2x192xf32> to vector<2x64xf32>
    %193 = vector.broadcast %1 : vector<1x64xf32> to vector<2x64xf32>
    %194 = arith.addf %192, %193 : vector<2x64xf32>
    %195 = arith.mulf %189, %194 : vector<2x64xf32>
    %196 = arith.addf %191, %195 : vector<2x64xf32>
    %197 = math.tanh %196 : vector<2x64xf32>
    %cst_35 = arith.constant 1.000000e+00 : f32
    %198 = vector.broadcast %cst_35 : f32 to vector<2x64xf32>
    %199 = arith.subf %198, %190 : vector<2x64xf32>
    %200 = arith.mulf %199, %197 : vector<2x64xf32>
    %201 = arith.mulf %190, %177 : vector<2x64xf32>
    %202 = arith.addf %200, %201 : vector<2x64xf32>
    %c0_36 = arith.constant 0 : index
    %c0_37 = arith.constant 0 : index
    %203 = vector.load %arg4[%c0_36, %c0_37] : memref<64x192xbf16, #tpu.memory_space<vmem>>, vector<64x192xbf16>
    %c0_38 = arith.constant 0 : index
    %c0_39 = arith.constant 0 : index
    %204 = vector.load %arg5[%c0_38, %c0_39] : memref<1x64xf32, #tpu.memory_space<vmem>>, vector<1x64xf32>
    %c0_40 = arith.constant 0 : index
    %c0_41 = arith.constant 0 : index
    %205 = vector.load %arg1[%c0_40, %c0_41] : memref<16x192xf32, #tpu.memory_space<vmem>>, vector<2x192xf32>
    %206 = arith.truncf %202 : vector<2x64xf32> to vector<2x64xbf16>
    %cst_42 = arith.constant dense<0.000000e+00> : vector<2x192xf32>
    %207 = tpu.matmul %206, %203, %cst_42 {dimension_numbers = #tpu.dot_dimension_numbers<[1], [0], [0], [1], [0, 0, 1, 1], [], []>} : vector<2x64xbf16>, vector<64x192xbf16>, vector<2x192xf32> -> vector<2x192xf32>
    %208 = vector.extract_strided_slice %205 {offsets = [0, 0], sizes = [2, 128], strides = [1, 1]} : vector<2x192xf32> to vector<2x128xf32>
    %209 = vector.extract_strided_slice %207 {offsets = [0, 0], sizes = [2, 128], strides = [1, 1]} : vector<2x192xf32> to vector<2x128xf32>
    %210 = arith.addf %208, %209 : vector<2x128xf32>
    %211 = arith.negf %210 : vector<2x128xf32>
    %212 = math.exp %211 : vector<2x128xf32>
    %cst_43 = arith.constant 1.000000e+00 : f32
    %213 = vector.broadcast %cst_43 : f32 to vector<2x128xf32>
    %214 = arith.addf %213, %212 : vector<2x128xf32>
    %215 = arith.divf %213, %214 : vector<2x128xf32>
    %216 = vector.extract_strided_slice %215 {offsets = [0, 0], sizes = [2, 64], strides = [1, 1]} : vector<2x128xf32> to vector<2x64xf32>
    %217 = vector.extract_strided_slice %215 {offsets = [0, 64], sizes = [2, 64], strides = [1, 1]} : vector<2x128xf32> to vector<2x64xf32>
    %218 = vector.extract_strided_slice %205 {offsets = [0, 128], sizes = [2, 64], strides = [1, 1]} : vector<2x192xf32> to vector<2x64xf32>
    %219 = vector.extract_strided_slice %207 {offsets = [0, 128], sizes = [2, 64], strides = [1, 1]} : vector<2x192xf32> to vector<2x64xf32>
    %220 = vector.broadcast %204 : vector<1x64xf32> to vector<2x64xf32>
    %221 = arith.addf %219, %220 : vector<2x64xf32>
    %222 = arith.mulf %216, %221 : vector<2x64xf32>
    %223 = arith.addf %218, %222 : vector<2x64xf32>
    %224 = math.tanh %223 : vector<2x64xf32>
    %cst_44 = arith.constant 1.000000e+00 : f32
    %225 = vector.broadcast %cst_44 : f32 to vector<2x64xf32>
    %226 = arith.subf %225, %217 : vector<2x64xf32>
    %227 = arith.mulf %226, %224 : vector<2x64xf32>
    %228 = arith.mulf %217, %202 : vector<2x64xf32>
    %229 = arith.addf %227, %228 : vector<2x64xf32>
    %c2_45 = arith.constant 2 : index
    %c0_46 = arith.constant 0 : index
    %230 = vector.load %arg1[%c2_45, %c0_46] : memref<16x192xf32, #tpu.memory_space<vmem>>, vector<2x192xf32>
    %231 = arith.truncf %229 : vector<2x64xf32> to vector<2x64xbf16>
    %cst_47 = arith.constant dense<0.000000e+00> : vector<2x192xf32>
    %232 = tpu.matmul %231, %203, %cst_47 {dimension_numbers = #tpu.dot_dimension_numbers<[1], [0], [0], [1], [0, 0, 1, 1], [], []>} : vector<2x64xbf16>, vector<64x192xbf16>, vector<2x192xf32> -> vector<2x192xf32>
    %233 = vector.extract_strided_slice %230 {offsets = [0, 0], sizes = [2, 128], strides = [1, 1]} : vector<2x192xf32> to vector<2x128xf32>
    %234 = vector.extract_strided_slice %232 {offsets = [0, 0], sizes = [2, 128], strides = [1, 1]} : vector<2x192xf32> to vector<2x128xf32>
    %235 = arith.addf %233, %234 : vector<2x128xf32>
    %236 = arith.negf %235 : vector<2x128xf32>
    %237 = math.exp %236 : vector<2x128xf32>
    %cst_48 = arith.constant 1.000000e+00 : f32
    %238 = vector.broadcast %cst_48 : f32 to vector<2x128xf32>
    %239 = arith.addf %238, %237 : vector<2x128xf32>
    %240 = arith.divf %238, %239 : vector<2x128xf32>
    %241 = vector.extract_strided_slice %240 {offsets = [0, 0], sizes = [2, 64], strides = [1, 1]} : vector<2x128xf32> to vector<2x64xf32>
    %242 = vector.extract_strided_slice %240 {offsets = [0, 64], sizes = [2, 64], strides = [1, 1]} : vector<2x128xf32> to vector<2x64xf32>
    %243 = vector.extract_strided_slice %230 {offsets = [0, 128], sizes = [2, 64], strides = [1, 1]} : vector<2x192xf32> to vector<2x64xf32>
    %244 = vector.extract_strided_slice %232 {offsets = [0, 128], sizes = [2, 64], strides = [1, 1]} : vector<2x192xf32> to vector<2x64xf32>
    %245 = vector.broadcast %204 : vector<1x64xf32> to vector<2x64xf32>
    %246 = arith.addf %244, %245 : vector<2x64xf32>
    %247 = arith.mulf %241, %246 : vector<2x64xf32>
    %248 = arith.addf %243, %247 : vector<2x64xf32>
    %249 = math.tanh %248 : vector<2x64xf32>
    %cst_49 = arith.constant 1.000000e+00 : f32
    %250 = vector.broadcast %cst_49 : f32 to vector<2x64xf32>
    %251 = arith.subf %250, %242 : vector<2x64xf32>
    %252 = arith.mulf %251, %249 : vector<2x64xf32>
    %253 = arith.mulf %242, %229 : vector<2x64xf32>
    %254 = arith.addf %252, %253 : vector<2x64xf32>
    %c4_50 = arith.constant 4 : index
    %c0_51 = arith.constant 0 : index
    %255 = vector.load %arg1[%c4_50, %c0_51] : memref<16x192xf32, #tpu.memory_space<vmem>>, vector<2x192xf32>
    %256 = arith.truncf %254 : vector<2x64xf32> to vector<2x64xbf16>
    %cst_52 = arith.constant dense<0.000000e+00> : vector<2x192xf32>
    %257 = tpu.matmul %256, %203, %cst_52 {dimension_numbers = #tpu.dot_dimension_numbers<[1], [0], [0], [1], [0, 0, 1, 1], [], []>} : vector<2x64xbf16>, vector<64x192xbf16>, vector<2x192xf32> -> vector<2x192xf32>
    %258 = vector.extract_strided_slice %255 {offsets = [0, 0], sizes = [2, 128], strides = [1, 1]} : vector<2x192xf32> to vector<2x128xf32>
    %259 = vector.extract_strided_slice %257 {offsets = [0, 0], sizes = [2, 128], strides = [1, 1]} : vector<2x192xf32> to vector<2x128xf32>
    %260 = arith.addf %258, %259 : vector<2x128xf32>
    %261 = arith.negf %260 : vector<2x128xf32>
    %262 = math.exp %261 : vector<2x128xf32>
    %cst_53 = arith.constant 1.000000e+00 : f32
    %263 = vector.broadcast %cst_53 : f32 to vector<2x128xf32>
    %264 = arith.addf %263, %262 : vector<2x128xf32>
    %265 = arith.divf %263, %264 : vector<2x128xf32>
    %266 = vector.extract_strided_slice %265 {offsets = [0, 0], sizes = [2, 64], strides = [1, 1]} : vector<2x128xf32> to vector<2x64xf32>
    %267 = vector.extract_strided_slice %265 {offsets = [0, 64], sizes = [2, 64], strides = [1, 1]} : vector<2x128xf32> to vector<2x64xf32>
    %268 = vector.extract_strided_slice %255 {offsets = [0, 128], sizes = [2, 64], strides = [1, 1]} : vector<2x192xf32> to vector<2x64xf32>
    %269 = vector.extract_strided_slice %257 {offsets = [0, 128], sizes = [2, 64], strides = [1, 1]} : vector<2x192xf32> to vector<2x64xf32>
    %270 = vector.broadcast %204 : vector<1x64xf32> to vector<2x64xf32>
    %271 = arith.addf %269, %270 : vector<2x64xf32>
    %272 = arith.mulf %266, %271 : vector<2x64xf32>
    %273 = arith.addf %268, %272 : vector<2x64xf32>
    %274 = math.tanh %273 : vector<2x64xf32>
    %cst_54 = arith.constant 1.000000e+00 : f32
    %275 = vector.broadcast %cst_54 : f32 to vector<2x64xf32>
    %276 = arith.subf %275, %267 : vector<2x64xf32>
    %277 = arith.mulf %276, %274 : vector<2x64xf32>
    %278 = arith.mulf %267, %254 : vector<2x64xf32>
    %279 = arith.addf %277, %278 : vector<2x64xf32>
    %c6_55 = arith.constant 6 : index
    %c0_56 = arith.constant 0 : index
    %280 = vector.load %arg1[%c6_55, %c0_56] : memref<16x192xf32, #tpu.memory_space<vmem>>, vector<2x192xf32>
    %281 = arith.truncf %279 : vector<2x64xf32> to vector<2x64xbf16>
    %cst_57 = arith.constant dense<0.000000e+00> : vector<2x192xf32>
    %282 = tpu.matmul %281, %203, %cst_57 {dimension_numbers = #tpu.dot_dimension_numbers<[1], [0], [0], [1], [0, 0, 1, 1], [], []>} : vector<2x64xbf16>, vector<64x192xbf16>, vector<2x192xf32> -> vector<2x192xf32>
    %283 = vector.extract_strided_slice %280 {offsets = [0, 0], sizes = [2, 128], strides = [1, 1]} : vector<2x192xf32> to vector<2x128xf32>
    %284 = vector.extract_strided_slice %282 {offsets = [0, 0], sizes = [2, 128], strides = [1, 1]} : vector<2x192xf32> to vector<2x128xf32>
    %285 = arith.addf %283, %284 : vector<2x128xf32>
    %286 = arith.negf %285 : vector<2x128xf32>
    %287 = math.exp %286 : vector<2x128xf32>
    %cst_58 = arith.constant 1.000000e+00 : f32
    %288 = vector.broadcast %cst_58 : f32 to vector<2x128xf32>
    %289 = arith.addf %288, %287 : vector<2x128xf32>
    %290 = arith.divf %288, %289 : vector<2x128xf32>
    %291 = vector.extract_strided_slice %290 {offsets = [0, 0], sizes = [2, 64], strides = [1, 1]} : vector<2x128xf32> to vector<2x64xf32>
    %292 = vector.extract_strided_slice %290 {offsets = [0, 64], sizes = [2, 64], strides = [1, 1]} : vector<2x128xf32> to vector<2x64xf32>
    %293 = vector.extract_strided_slice %280 {offsets = [0, 128], sizes = [2, 64], strides = [1, 1]} : vector<2x192xf32> to vector<2x64xf32>
    %294 = vector.extract_strided_slice %282 {offsets = [0, 128], sizes = [2, 64], strides = [1, 1]} : vector<2x192xf32> to vector<2x64xf32>
    %295 = vector.broadcast %204 : vector<1x64xf32> to vector<2x64xf32>
    %296 = arith.addf %294, %295 : vector<2x64xf32>
    %297 = arith.mulf %291, %296 : vector<2x64xf32>
    %298 = arith.addf %293, %297 : vector<2x64xf32>
    %299 = math.tanh %298 : vector<2x64xf32>
    %cst_59 = arith.constant 1.000000e+00 : f32
    %300 = vector.broadcast %cst_59 : f32 to vector<2x64xf32>
    %301 = arith.subf %300, %292 : vector<2x64xf32>
    %302 = arith.mulf %301, %299 : vector<2x64xf32>
    %303 = arith.mulf %292, %279 : vector<2x64xf32>
    %304 = arith.addf %302, %303 : vector<2x64xf32>
    %c8_60 = arith.constant 8 : index
    %c0_61 = arith.constant 0 : index
    %305 = vector.load %arg1[%c8_60, %c0_61] : memref<16x192xf32, #tpu.memory_space<vmem>>, vector<2x192xf32>
    %306 = arith.truncf %304 : vector<2x64xf32> to vector<2x64xbf16>
    %cst_62 = arith.constant dense<0.000000e+00> : vector<2x192xf32>
    %307 = tpu.matmul %306, %203, %cst_62 {dimension_numbers = #tpu.dot_dimension_numbers<[1], [0], [0], [1], [0, 0, 1, 1], [], []>} : vector<2x64xbf16>, vector<64x192xbf16>, vector<2x192xf32> -> vector<2x192xf32>
    %308 = vector.extract_strided_slice %305 {offsets = [0, 0], sizes = [2, 128], strides = [1, 1]} : vector<2x192xf32> to vector<2x128xf32>
    %309 = vector.extract_strided_slice %307 {offsets = [0, 0], sizes = [2, 128], strides = [1, 1]} : vector<2x192xf32> to vector<2x128xf32>
    %310 = arith.addf %308, %309 : vector<2x128xf32>
    %311 = arith.negf %310 : vector<2x128xf32>
    %312 = math.exp %311 : vector<2x128xf32>
    %cst_63 = arith.constant 1.000000e+00 : f32
    %313 = vector.broadcast %cst_63 : f32 to vector<2x128xf32>
    %314 = arith.addf %313, %312 : vector<2x128xf32>
    %315 = arith.divf %313, %314 : vector<2x128xf32>
    %316 = vector.extract_strided_slice %315 {offsets = [0, 0], sizes = [2, 64], strides = [1, 1]} : vector<2x128xf32> to vector<2x64xf32>
    %317 = vector.extract_strided_slice %315 {offsets = [0, 64], sizes = [2, 64], strides = [1, 1]} : vector<2x128xf32> to vector<2x64xf32>
    %318 = vector.extract_strided_slice %305 {offsets = [0, 128], sizes = [2, 64], strides = [1, 1]} : vector<2x192xf32> to vector<2x64xf32>
    %319 = vector.extract_strided_slice %307 {offsets = [0, 128], sizes = [2, 64], strides = [1, 1]} : vector<2x192xf32> to vector<2x64xf32>
    %320 = vector.broadcast %204 : vector<1x64xf32> to vector<2x64xf32>
    %321 = arith.addf %319, %320 : vector<2x64xf32>
    %322 = arith.mulf %316, %321 : vector<2x64xf32>
    %323 = arith.addf %318, %322 : vector<2x64xf32>
    %324 = math.tanh %323 : vector<2x64xf32>
    %cst_64 = arith.constant 1.000000e+00 : f32
    %325 = vector.broadcast %cst_64 : f32 to vector<2x64xf32>
    %326 = arith.subf %325, %317 : vector<2x64xf32>
    %327 = arith.mulf %326, %324 : vector<2x64xf32>
    %328 = arith.mulf %317, %304 : vector<2x64xf32>
    %329 = arith.addf %327, %328 : vector<2x64xf32>
    %c10_65 = arith.constant 10 : index
    %c0_66 = arith.constant 0 : index
    %330 = vector.load %arg1[%c10_65, %c0_66] : memref<16x192xf32, #tpu.memory_space<vmem>>, vector<2x192xf32>
    %331 = arith.truncf %329 : vector<2x64xf32> to vector<2x64xbf16>
    %cst_67 = arith.constant dense<0.000000e+00> : vector<2x192xf32>
    %332 = tpu.matmul %331, %203, %cst_67 {dimension_numbers = #tpu.dot_dimension_numbers<[1], [0], [0], [1], [0, 0, 1, 1], [], []>} : vector<2x64xbf16>, vector<64x192xbf16>, vector<2x192xf32> -> vector<2x192xf32>
    %333 = vector.extract_strided_slice %330 {offsets = [0, 0], sizes = [2, 128], strides = [1, 1]} : vector<2x192xf32> to vector<2x128xf32>
    %334 = vector.extract_strided_slice %332 {offsets = [0, 0], sizes = [2, 128], strides = [1, 1]} : vector<2x192xf32> to vector<2x128xf32>
    %335 = arith.addf %333, %334 : vector<2x128xf32>
    %336 = arith.negf %335 : vector<2x128xf32>
    %337 = math.exp %336 : vector<2x128xf32>
    %cst_68 = arith.constant 1.000000e+00 : f32
    %338 = vector.broadcast %cst_68 : f32 to vector<2x128xf32>
    %339 = arith.addf %338, %337 : vector<2x128xf32>
    %340 = arith.divf %338, %339 : vector<2x128xf32>
    %341 = vector.extract_strided_slice %340 {offsets = [0, 0], sizes = [2, 64], strides = [1, 1]} : vector<2x128xf32> to vector<2x64xf32>
    %342 = vector.extract_strided_slice %340 {offsets = [0, 64], sizes = [2, 64], strides = [1, 1]} : vector<2x128xf32> to vector<2x64xf32>
    %343 = vector.extract_strided_slice %330 {offsets = [0, 128], sizes = [2, 64], strides = [1, 1]} : vector<2x192xf32> to vector<2x64xf32>
    %344 = vector.extract_strided_slice %332 {offsets = [0, 128], sizes = [2, 64], strides = [1, 1]} : vector<2x192xf32> to vector<2x64xf32>
    %345 = vector.broadcast %204 : vector<1x64xf32> to vector<2x64xf32>
    %346 = arith.addf %344, %345 : vector<2x64xf32>
    %347 = arith.mulf %341, %346 : vector<2x64xf32>
    %348 = arith.addf %343, %347 : vector<2x64xf32>
    %349 = math.tanh %348 : vector<2x64xf32>
    %cst_69 = arith.constant 1.000000e+00 : f32
    %350 = vector.broadcast %cst_69 : f32 to vector<2x64xf32>
    %351 = arith.subf %350, %342 : vector<2x64xf32>
    %352 = arith.mulf %351, %349 : vector<2x64xf32>
    %353 = arith.mulf %342, %329 : vector<2x64xf32>
    %354 = arith.addf %352, %353 : vector<2x64xf32>
    %c12_70 = arith.constant 12 : index
    %c0_71 = arith.constant 0 : index
    %355 = vector.load %arg1[%c12_70, %c0_71] : memref<16x192xf32, #tpu.memory_space<vmem>>, vector<2x192xf32>
    %356 = arith.truncf %354 : vector<2x64xf32> to vector<2x64xbf16>
    %cst_72 = arith.constant dense<0.000000e+00> : vector<2x192xf32>
    %357 = tpu.matmul %356, %203, %cst_72 {dimension_numbers = #tpu.dot_dimension_numbers<[1], [0], [0], [1], [0, 0, 1, 1], [], []>} : vector<2x64xbf16>, vector<64x192xbf16>, vector<2x192xf32> -> vector<2x192xf32>
    %358 = vector.extract_strided_slice %355 {offsets = [0, 0], sizes = [2, 128], strides = [1, 1]} : vector<2x192xf32> to vector<2x128xf32>
    %359 = vector.extract_strided_slice %357 {offsets = [0, 0], sizes = [2, 128], strides = [1, 1]} : vector<2x192xf32> to vector<2x128xf32>
    %360 = arith.addf %358, %359 : vector<2x128xf32>
    %361 = arith.negf %360 : vector<2x128xf32>
    %362 = math.exp %361 : vector<2x128xf32>
    %cst_73 = arith.constant 1.000000e+00 : f32
    %363 = vector.broadcast %cst_73 : f32 to vector<2x128xf32>
    %364 = arith.addf %363, %362 : vector<2x128xf32>
    %365 = arith.divf %363, %364 : vector<2x128xf32>
    %366 = vector.extract_strided_slice %365 {offsets = [0, 0], sizes = [2, 64], strides = [1, 1]} : vector<2x128xf32> to vector<2x64xf32>
    %367 = vector.extract_strided_slice %365 {offsets = [0, 64], sizes = [2, 64], strides = [1, 1]} : vector<2x128xf32> to vector<2x64xf32>
    %368 = vector.extract_strided_slice %355 {offsets = [0, 128], sizes = [2, 64], strides = [1, 1]} : vector<2x192xf32> to vector<2x64xf32>
    %369 = vector.extract_strided_slice %357 {offsets = [0, 128], sizes = [2, 64], strides = [1, 1]} : vector<2x192xf32> to vector<2x64xf32>
    %370 = vector.broadcast %204 : vector<1x64xf32> to vector<2x64xf32>
    %371 = arith.addf %369, %370 : vector<2x64xf32>
    %372 = arith.mulf %366, %371 : vector<2x64xf32>
    %373 = arith.addf %368, %372 : vector<2x64xf32>
    %374 = math.tanh %373 : vector<2x64xf32>
    %cst_74 = arith.constant 1.000000e+00 : f32
    %375 = vector.broadcast %cst_74 : f32 to vector<2x64xf32>
    %376 = arith.subf %375, %367 : vector<2x64xf32>
    %377 = arith.mulf %376, %374 : vector<2x64xf32>
    %378 = arith.mulf %367, %354 : vector<2x64xf32>
    %379 = arith.addf %377, %378 : vector<2x64xf32>
    %c14_75 = arith.constant 14 : index
    %c0_76 = arith.constant 0 : index
    %380 = vector.load %arg1[%c14_75, %c0_76] : memref<16x192xf32, #tpu.memory_space<vmem>>, vector<2x192xf32>
    %381 = arith.truncf %379 : vector<2x64xf32> to vector<2x64xbf16>
    %cst_77 = arith.constant dense<0.000000e+00> : vector<2x192xf32>
    %382 = tpu.matmul %381, %203, %cst_77 {dimension_numbers = #tpu.dot_dimension_numbers<[1], [0], [0], [1], [0, 0, 1, 1], [], []>} : vector<2x64xbf16>, vector<64x192xbf16>, vector<2x192xf32> -> vector<2x192xf32>
    %383 = vector.extract_strided_slice %380 {offsets = [0, 0], sizes = [2, 128], strides = [1, 1]} : vector<2x192xf32> to vector<2x128xf32>
    %384 = vector.extract_strided_slice %382 {offsets = [0, 0], sizes = [2, 128], strides = [1, 1]} : vector<2x192xf32> to vector<2x128xf32>
    %385 = arith.addf %383, %384 : vector<2x128xf32>
    %386 = arith.negf %385 : vector<2x128xf32>
    %387 = math.exp %386 : vector<2x128xf32>
    %cst_78 = arith.constant 1.000000e+00 : f32
    %388 = vector.broadcast %cst_78 : f32 to vector<2x128xf32>
    %389 = arith.addf %388, %387 : vector<2x128xf32>
    %390 = arith.divf %388, %389 : vector<2x128xf32>
    %391 = vector.extract_strided_slice %390 {offsets = [0, 0], sizes = [2, 64], strides = [1, 1]} : vector<2x128xf32> to vector<2x64xf32>
    %392 = vector.extract_strided_slice %390 {offsets = [0, 64], sizes = [2, 64], strides = [1, 1]} : vector<2x128xf32> to vector<2x64xf32>
    %393 = vector.extract_strided_slice %380 {offsets = [0, 128], sizes = [2, 64], strides = [1, 1]} : vector<2x192xf32> to vector<2x64xf32>
    %394 = vector.extract_strided_slice %382 {offsets = [0, 128], sizes = [2, 64], strides = [1, 1]} : vector<2x192xf32> to vector<2x64xf32>
    %395 = vector.broadcast %204 : vector<1x64xf32> to vector<2x64xf32>
    %396 = arith.addf %394, %395 : vector<2x64xf32>
    %397 = arith.mulf %391, %396 : vector<2x64xf32>
    %398 = arith.addf %393, %397 : vector<2x64xf32>
    %399 = math.tanh %398 : vector<2x64xf32>
    %cst_79 = arith.constant 1.000000e+00 : f32
    %400 = vector.broadcast %cst_79 : f32 to vector<2x64xf32>
    %401 = arith.subf %400, %392 : vector<2x64xf32>
    %402 = arith.mulf %401, %399 : vector<2x64xf32>
    %403 = arith.mulf %392, %379 : vector<2x64xf32>
    %404 = arith.addf %402, %403 : vector<2x64xf32>
    %405 = arith.truncf %404 : vector<2x64xf32> to vector<2x64xbf16>
    %c0_80 = arith.constant 0 : index
    %c0_81 = arith.constant 0 : index
    %406 = vector.load %arg6[%c0_80, %c0_81] : memref<64x32xbf16, #tpu.memory_space<vmem>>, vector<64x32xbf16>
    %cst_82 = arith.constant dense<0.000000e+00> : vector<2x32xf32>
    %407 = tpu.matmul %405, %406, %cst_82 {dimension_numbers = #tpu.dot_dimension_numbers<[1], [0], [0], [1], [0, 0, 1, 1], [], []>} : vector<2x64xbf16>, vector<64x32xbf16>, vector<2x32xf32> -> vector<2x32xf32>
    %c0_83 = arith.constant 0 : index
    %c0_84 = arith.constant 0 : index
    %408 = vector.load %arg7[%c0_83, %c0_84] : memref<1x32xf32, #tpu.memory_space<vmem>>, vector<1x32xf32>
    %409 = vector.broadcast %408 : vector<1x32xf32> to vector<2x32xf32>
    %410 = arith.addf %407, %409 : vector<2x32xf32>
    %411 = vector.extract_strided_slice %410 {offsets = [0, 0], sizes = [2, 16], strides = [1, 1]} : vector<2x32xf32> to vector<2x16xf32>
    %412 = vector.extract_strided_slice %410 {offsets = [0, 16], sizes = [2, 16], strides = [1, 1]} : vector<2x32xf32> to vector<2x16xf32>
    %cst_85 = arith.constant 5.000000e-01 : f32
    %413 = vector.broadcast %cst_85 : f32 to vector<2x16xf32>
    %414 = arith.mulf %413, %412 : vector<2x16xf32>
    %415 = math.exp %414 : vector<2x16xf32>
    %c0_86 = arith.constant 0 : index
    %c0_87 = arith.constant 0 : index
    %416 = vector.load %arg8[%c0_86, %c0_87] : memref<2x16xf32, #tpu.memory_space<vmem>>, vector<2x16xf32>
    %417 = arith.mulf %416, %415 : vector<2x16xf32>
    %418 = arith.addf %417, %411 : vector<2x16xf32>
    %419 = arith.mulf %411, %411 : vector<2x16xf32>
    %420 = arith.subf %412, %419 : vector<2x16xf32>
    %421 = math.exp %412 : vector<2x16xf32>
    %422 = arith.subf %420, %421 : vector<2x16xf32>
    %cst_88 = arith.constant 1.000000e+00 : f32
    %423 = vector.broadcast %cst_88 : f32 to vector<2x16xf32>
    %424 = arith.addf %422, %423 : vector<2x16xf32>
    %425 = vector.shape_cast %424 : vector<2x16xf32> to vector<1x2x16xf32>
    %cst_89 = arith.constant dense<0.000000e+00> : vector<1xf32>
    %426 = vector.multi_reduction <add>, %425, %cst_89 [1, 2] : vector<1x2x16xf32> to vector<1xf32>
    %427 = vector.shape_cast %426 : vector<1xf32> to vector<1x1x1xf32>
    %428 = vector.extract %427[0, 0, 0] : f32 from vector<1x1x1xf32>
    %429 = vector.broadcast %428 : f32 to vector<1x1xf32>
    %cst_90 = arith.constant -2.500000e-01 : f32
    %430 = vector.broadcast %cst_90 : f32 to vector<1x1xf32>
    %431 = arith.mulf %429, %430 : vector<1x1xf32>
    %c0_91 = arith.constant 0 : index
    %c0_92 = arith.constant 0 : index
    %432 = vector.load %arg21[%c0_91, %c0_92] : memref<1x1xf32, #tpu.memory_space<vmem>>, vector<1x1xf32>
    tpu.vector_store %arg21[%c0_91, %c0_92], %431 {strides = array<i32>} : memref<1x1xf32, #tpu.memory_space<vmem>>, vector<1x1xf32>,
    %433 = arith.truncf %418 : vector<2x16xf32> to vector<2x16xbf16>
    %c0_93 = arith.constant 0 : index
    %c0_94 = arith.constant 0 : index
    %434 = vector.load %arg10[%c0_93, %c0_94] : memref<16x96xbf16, #tpu.memory_space<vmem>>, vector<16x96xbf16>
    %cst_95 = arith.constant dense<0.000000e+00> : vector<2x96xf32>
    %435 = tpu.matmul %433, %434, %cst_95 {dimension_numbers = #tpu.dot_dimension_numbers<[1], [0], [0], [1], [0, 0, 1, 1], [], []>} : vector<2x16xbf16>, vector<16x96xbf16>, vector<2x96xf32> -> vector<2x96xf32>
    %c0_96 = arith.constant 0 : index
    %c0_97 = arith.constant 0 : index
    %436 = vector.load %arg11[%c0_96, %c0_97] : memref<32x96xbf16, #tpu.memory_space<vmem>>, vector<32x96xbf16>
    %c0_98 = arith.constant 0 : index
    %c0_99 = arith.constant 0 : index
    %437 = vector.load %arg12[%c0_98, %c0_99] : memref<1x32xf32, #tpu.memory_space<vmem>>, vector<1x32xf32>
    %c0_100 = arith.constant 0 : index
    %c0_101 = arith.constant 0 : index
    %438 = vector.load %arg13[%c0_100, %c0_101] : memref<32x96xbf16, #tpu.memory_space<vmem>>, vector<32x96xbf16>
    %c0_102 = arith.constant 0 : index
    %c0_103 = arith.constant 0 : index
    %439 = vector.load %arg14[%c0_102, %c0_103] : memref<1x96xf32, #tpu.memory_space<vmem>>, vector<1x96xf32>
    %c0_104 = arith.constant 0 : index
    %c0_105 = arith.constant 0 : index
    %440 = vector.load %arg15[%c0_104, %c0_105] : memref<32x96xbf16, #tpu.memory_space<vmem>>, vector<32x96xbf16>
    %c0_106 = arith.constant 0 : index
    %c0_107 = arith.constant 0 : index
    %441 = vector.load %arg16[%c0_106, %c0_107] : memref<1x32xf32, #tpu.memory_space<vmem>>, vector<1x32xf32>
    %442 = vector.extract_strided_slice %202 {offsets = [0, 0], sizes = [2, 32], strides = [1, 1]} : vector<2x64xf32> to vector<2x32xf32>
    %443 = vector.extract_strided_slice %202 {offsets = [0, 32], sizes = [2, 32], strides = [1, 1]} : vector<2x64xf32> to vector<2x32xf32>
    %c0_108 = arith.constant 0 : index
    %c0_109 = arith.constant 0 : index
    %444 = vector.load %arg9[%c0_108, %c0_109] : memref<16x96xf32, #tpu.memory_space<vmem>>, vector<2x96xf32>
    %445 = arith.addf %444, %435 : vector<2x96xf32>
    %446 = arith.truncf %442 : vector<2x32xf32> to vector<2x32xbf16>
    %cst_110 = arith.constant dense<0.000000e+00> : vector<2x96xf32>
    %447 = tpu.matmul %446, %436, %cst_110 {dimension_numbers = #tpu.dot_dimension_numbers<[1], [0], [0], [1], [0, 0, 1, 1], [], []>} : vector<2x32xbf16>, vector<32x96xbf16>, vector<2x96xf32> -> vector<2x96xf32>
    %448 = vector.extract_strided_slice %445 {offsets = [0, 0], sizes = [2, 64], strides = [1, 1]} : vector<2x96xf32> to vector<2x64xf32>
    %449 = vector.extract_strided_slice %447 {offsets = [0, 0], sizes = [2, 64], strides = [1, 1]} : vector<2x96xf32> to vector<2x64xf32>
    %450 = arith.addf %448, %449 : vector<2x64xf32>
    %451 = arith.negf %450 : vector<2x64xf32>
    %452 = math.exp %451 : vector<2x64xf32>
    %cst_111 = arith.constant 1.000000e+00 : f32
    %453 = vector.broadcast %cst_111 : f32 to vector<2x64xf32>
    %454 = arith.addf %453, %452 : vector<2x64xf32>
    %455 = arith.divf %453, %454 : vector<2x64xf32>
    %456 = vector.extract_strided_slice %455 {offsets = [0, 0], sizes = [2, 32], strides = [1, 1]} : vector<2x64xf32> to vector<2x32xf32>
    %457 = vector.extract_strided_slice %455 {offsets = [0, 32], sizes = [2, 32], strides = [1, 1]} : vector<2x64xf32> to vector<2x32xf32>
    %458 = vector.extract_strided_slice %445 {offsets = [0, 64], sizes = [2, 32], strides = [1, 1]} : vector<2x96xf32> to vector<2x32xf32>
    %459 = vector.extract_strided_slice %447 {offsets = [0, 64], sizes = [2, 32], strides = [1, 1]} : vector<2x96xf32> to vector<2x32xf32>
    %460 = vector.broadcast %437 : vector<1x32xf32> to vector<2x32xf32>
    %461 = arith.addf %459, %460 : vector<2x32xf32>
    %462 = arith.mulf %456, %461 : vector<2x32xf32>
    %463 = arith.addf %458, %462 : vector<2x32xf32>
    %464 = math.tanh %463 : vector<2x32xf32>
    %cst_112 = arith.constant 1.000000e+00 : f32
    %465 = vector.broadcast %cst_112 : f32 to vector<2x32xf32>
    %466 = arith.subf %465, %457 : vector<2x32xf32>
    %467 = arith.mulf %466, %464 : vector<2x32xf32>
    %468 = arith.mulf %457, %442 : vector<2x32xf32>
    %469 = arith.addf %467, %468 : vector<2x32xf32>
    %470 = arith.truncf %469 : vector<2x32xf32> to vector<2x32xbf16>
    %cst_113 = arith.constant dense<0.000000e+00> : vector<2x96xf32>
    %471 = tpu.matmul %470, %438, %cst_113 {dimension_numbers = #tpu.dot_dimension_numbers<[1], [0], [0], [1], [0, 0, 1, 1], [], []>} : vector<2x32xbf16>, vector<32x96xbf16>, vector<2x96xf32> -> vector<2x96xf32>
    %472 = vector.broadcast %439 : vector<1x96xf32> to vector<2x96xf32>
    %473 = arith.addf %471, %472 : vector<2x96xf32>
    %474 = arith.truncf %443 : vector<2x32xf32> to vector<2x32xbf16>
    %cst_114 = arith.constant dense<0.000000e+00> : vector<2x96xf32>
    %475 = tpu.matmul %474, %440, %cst_114 {dimension_numbers = #tpu.dot_dimension_numbers<[1], [0], [0], [1], [0, 0, 1, 1], [], []>} : vector<2x32xbf16>, vector<32x96xbf16>, vector<2x96xf32> -> vector<2x96xf32>
    %476 = vector.extract_strided_slice %473 {offsets = [0, 0], sizes = [2, 64], strides = [1, 1]} : vector<2x96xf32> to vector<2x64xf32>
    %477 = vector.extract_strided_slice %475 {offsets = [0, 0], sizes = [2, 64], strides = [1, 1]} : vector<2x96xf32> to vector<2x64xf32>
    %478 = arith.addf %476, %477 : vector<2x64xf32>
    %479 = arith.negf %478 : vector<2x64xf32>
    %480 = math.exp %479 : vector<2x64xf32>
    %cst_115 = arith.constant 1.000000e+00 : f32
    %481 = vector.broadcast %cst_115 : f32 to vector<2x64xf32>
    %482 = arith.addf %481, %480 : vector<2x64xf32>
    %483 = arith.divf %481, %482 : vector<2x64xf32>
    %484 = vector.extract_strided_slice %483 {offsets = [0, 0], sizes = [2, 32], strides = [1, 1]} : vector<2x64xf32> to vector<2x32xf32>
    %485 = vector.extract_strided_slice %483 {offsets = [0, 32], sizes = [2, 32], strides = [1, 1]} : vector<2x64xf32> to vector<2x32xf32>
    %486 = vector.extract_strided_slice %473 {offsets = [0, 64], sizes = [2, 32], strides = [1, 1]} : vector<2x96xf32> to vector<2x32xf32>
    %487 = vector.extract_strided_slice %475 {offsets = [0, 64], sizes = [2, 32], strides = [1, 1]} : vector<2x96xf32> to vector<2x32xf32>
    %488 = vector.broadcast %441 : vector<1x32xf32> to vector<2x32xf32>
    %489 = arith.addf %487, %488 : vector<2x32xf32>
    %490 = arith.mulf %484, %489 : vector<2x32xf32>
    %491 = arith.addf %486, %490 : vector<2x32xf32>
    %492 = math.tanh %491 : vector<2x32xf32>
    %cst_116 = arith.constant 1.000000e+00 : f32
    %493 = vector.broadcast %cst_116 : f32 to vector<2x32xf32>
    %494 = arith.subf %493, %485 : vector<2x32xf32>
    %495 = arith.mulf %494, %492 : vector<2x32xf32>
    %496 = arith.mulf %485, %443 : vector<2x32xf32>
    %497 = arith.addf %495, %496 : vector<2x32xf32>
    %c0_117 = arith.constant 0 : index
    %c0_118 = arith.constant 0 : index
    %c0_119 = arith.constant 0 : index
    %498 = vector.load %arg22[%c0_117, %c0_118, %c0_119] : memref<2x8x32xf32, #tpu.memory_space<vmem>>, vector<2x1x32xf32>
    %499 = vector.shape_cast %498 : vector<2x1x32xf32> to vector<2x32xf32>
    %500 = vector.shape_cast %497 : vector<2x32xf32> to vector<2x1x32xf32>
    tpu.vector_store %arg22[%c0_117, %c0_118, %c0_119], %500 {strides = array<i32>} : memref<2x8x32xf32, #tpu.memory_space<vmem>>, vector<2x1x32xf32>,
    %c2_120 = arith.constant 2 : index
    %c0_121 = arith.constant 0 : index
    %501 = vector.load %arg9[%c2_120, %c0_121] : memref<16x96xf32, #tpu.memory_space<vmem>>, vector<2x96xf32>
    %502 = arith.addf %501, %435 : vector<2x96xf32>
    %503 = arith.truncf %469 : vector<2x32xf32> to vector<2x32xbf16>
    %cst_122 = arith.constant dense<0.000000e+00> : vector<2x96xf32>
    %504 = tpu.matmul %503, %436, %cst_122 {dimension_numbers = #tpu.dot_dimension_numbers<[1], [0], [0], [1], [0, 0, 1, 1], [], []>} : vector<2x32xbf16>, vector<32x96xbf16>, vector<2x96xf32> -> vector<2x96xf32>
    %505 = vector.extract_strided_slice %502 {offsets = [0, 0], sizes = [2, 64], strides = [1, 1]} : vector<2x96xf32> to vector<2x64xf32>
    %506 = vector.extract_strided_slice %504 {offsets = [0, 0], sizes = [2, 64], strides = [1, 1]} : vector<2x96xf32> to vector<2x64xf32>
    %507 = arith.addf %505, %506 : vector<2x64xf32>
    %508 = arith.negf %507 : vector<2x64xf32>
    %509 = math.exp %508 : vector<2x64xf32>
    %cst_123 = arith.constant 1.000000e+00 : f32
    %510 = vector.broadcast %cst_123 : f32 to vector<2x64xf32>
    %511 = arith.addf %510, %509 : vector<2x64xf32>
    %512 = arith.divf %510, %511 : vector<2x64xf32>
    %513 = vector.extract_strided_slice %512 {offsets = [0, 0], sizes = [2, 32], strides = [1, 1]} : vector<2x64xf32> to vector<2x32xf32>
    %514 = vector.extract_strided_slice %512 {offsets = [0, 32], sizes = [2, 32], strides = [1, 1]} : vector<2x64xf32> to vector<2x32xf32>
    %515 = vector.extract_strided_slice %502 {offsets = [0, 64], sizes = [2, 32], strides = [1, 1]} : vector<2x96xf32> to vector<2x32xf32>
    %516 = vector.extract_strided_slice %504 {offsets = [0, 64], sizes = [2, 32], strides = [1, 1]} : vector<2x96xf32> to vector<2x32xf32>
    %517 = vector.broadcast %437 : vector<1x32xf32> to vector<2x32xf32>
    %518 = arith.addf %516, %517 : vector<2x32xf32>
    %519 = arith.mulf %513, %518 : vector<2x32xf32>
    %520 = arith.addf %515, %519 : vector<2x32xf32>
    %521 = math.tanh %520 : vector<2x32xf32>
    %cst_124 = arith.constant 1.000000e+00 : f32
    %522 = vector.broadcast %cst_124 : f32 to vector<2x32xf32>
    %523 = arith.subf %522, %514 : vector<2x32xf32>
    %524 = arith.mulf %523, %521 : vector<2x32xf32>
    %525 = arith.mulf %514, %469 : vector<2x32xf32>
    %526 = arith.addf %524, %525 : vector<2x32xf32>
    %527 = arith.truncf %526 : vector<2x32xf32> to vector<2x32xbf16>
    %cst_125 = arith.constant dense<0.000000e+00> : vector<2x96xf32>
    %528 = tpu.matmul %527, %438, %cst_125 {dimension_numbers = #tpu.dot_dimension_numbers<[1], [0], [0], [1], [0, 0, 1, 1], [], []>} : vector<2x32xbf16>, vector<32x96xbf16>, vector<2x96xf32> -> vector<2x96xf32>
    %529 = vector.broadcast %439 : vector<1x96xf32> to vector<2x96xf32>
    %530 = arith.addf %528, %529 : vector<2x96xf32>
    %531 = arith.truncf %497 : vector<2x32xf32> to vector<2x32xbf16>
    %cst_126 = arith.constant dense<0.000000e+00> : vector<2x96xf32>
    %532 = tpu.matmul %531, %440, %cst_126 {dimension_numbers = #tpu.dot_dimension_numbers<[1], [0], [0], [1], [0, 0, 1, 1], [], []>} : vector<2x32xbf16>, vector<32x96xbf16>, vector<2x96xf32> -> vector<2x96xf32>
    %533 = vector.extract_strided_slice %530 {offsets = [0, 0], sizes = [2, 64], strides = [1, 1]} : vector<2x96xf32> to vector<2x64xf32>
    %534 = vector.extract_strided_slice %532 {offsets = [0, 0], sizes = [2, 64], strides = [1, 1]} : vector<2x96xf32> to vector<2x64xf32>
    %535 = arith.addf %533, %534 : vector<2x64xf32>
    %536 = arith.negf %535 : vector<2x64xf32>
    %537 = math.exp %536 : vector<2x64xf32>
    %cst_127 = arith.constant 1.000000e+00 : f32
    %538 = vector.broadcast %cst_127 : f32 to vector<2x64xf32>
    %539 = arith.addf %538, %537 : vector<2x64xf32>
    %540 = arith.divf %538, %539 : vector<2x64xf32>
    %541 = vector.extract_strided_slice %540 {offsets = [0, 0], sizes = [2, 32], strides = [1, 1]} : vector<2x64xf32> to vector<2x32xf32>
    %542 = vector.extract_strided_slice %540 {offsets = [0, 32], sizes = [2, 32], strides = [1, 1]} : vector<2x64xf32> to vector<2x32xf32>
    %543 = vector.extract_strided_slice %530 {offsets = [0, 64], sizes = [2, 32], strides = [1, 1]} : vector<2x96xf32> to vector<2x32xf32>
    %544 = vector.extract_strided_slice %532 {offsets = [0, 64], sizes = [2, 32], strides = [1, 1]} : vector<2x96xf32> to vector<2x32xf32>
    %545 = vector.broadcast %441 : vector<1x32xf32> to vector<2x32xf32>
    %546 = arith.addf %544, %545 : vector<2x32xf32>
    %547 = arith.mulf %541, %546 : vector<2x32xf32>
    %548 = arith.addf %543, %547 : vector<2x32xf32>
    %549 = math.tanh %548 : vector<2x32xf32>
    %cst_128 = arith.constant 1.000000e+00 : f32
    %550 = vector.broadcast %cst_128 : f32 to vector<2x32xf32>
    %551 = arith.subf %550, %542 : vector<2x32xf32>
    %552 = arith.mulf %551, %549 : vector<2x32xf32>
    %553 = arith.mulf %542, %497 : vector<2x32xf32>
    %554 = arith.addf %552, %553 : vector<2x32xf32>
    %c0_129 = arith.constant 0 : index
    %c1 = arith.constant 1 : index
    %c0_130 = arith.constant 0 : index
    %555 = vector.load %arg22[%c0_129, %c1, %c0_130] : memref<2x8x32xf32, #tpu.memory_space<vmem>>, vector<2x1x32xf32>
    %556 = vector.shape_cast %555 : vector<2x1x32xf32> to vector<2x32xf32>
    %557 = vector.shape_cast %554 : vector<2x32xf32> to vector<2x1x32xf32>
    tpu.vector_store %arg22[%c0_129, %c1, %c0_130], %557 {strides = array<i32>} : memref<2x8x32xf32, #tpu.memory_space<vmem>>, vector<2x1x32xf32>,
    %c4_131 = arith.constant 4 : index
    %c0_132 = arith.constant 0 : index
    %558 = vector.load %arg9[%c4_131, %c0_132] : memref<16x96xf32, #tpu.memory_space<vmem>>, vector<2x96xf32>
    %559 = arith.addf %558, %435 : vector<2x96xf32>
    %560 = arith.truncf %526 : vector<2x32xf32> to vector<2x32xbf16>
    %cst_133 = arith.constant dense<0.000000e+00> : vector<2x96xf32>
    %561 = tpu.matmul %560, %436, %cst_133 {dimension_numbers = #tpu.dot_dimension_numbers<[1], [0], [0], [1], [0, 0, 1, 1], [], []>} : vector<2x32xbf16>, vector<32x96xbf16>, vector<2x96xf32> -> vector<2x96xf32>
    %562 = vector.extract_strided_slice %559 {offsets = [0, 0], sizes = [2, 64], strides = [1, 1]} : vector<2x96xf32> to vector<2x64xf32>
    %563 = vector.extract_strided_slice %561 {offsets = [0, 0], sizes = [2, 64], strides = [1, 1]} : vector<2x96xf32> to vector<2x64xf32>
    %564 = arith.addf %562, %563 : vector<2x64xf32>
    %565 = arith.negf %564 : vector<2x64xf32>
    %566 = math.exp %565 : vector<2x64xf32>
    %cst_134 = arith.constant 1.000000e+00 : f32
    %567 = vector.broadcast %cst_134 : f32 to vector<2x64xf32>
    %568 = arith.addf %567, %566 : vector<2x64xf32>
    %569 = arith.divf %567, %568 : vector<2x64xf32>
    %570 = vector.extract_strided_slice %569 {offsets = [0, 0], sizes = [2, 32], strides = [1, 1]} : vector<2x64xf32> to vector<2x32xf32>
    %571 = vector.extract_strided_slice %569 {offsets = [0, 32], sizes = [2, 32], strides = [1, 1]} : vector<2x64xf32> to vector<2x32xf32>
    %572 = vector.extract_strided_slice %559 {offsets = [0, 64], sizes = [2, 32], strides = [1, 1]} : vector<2x96xf32> to vector<2x32xf32>
    %573 = vector.extract_strided_slice %561 {offsets = [0, 64], sizes = [2, 32], strides = [1, 1]} : vector<2x96xf32> to vector<2x32xf32>
    %574 = vector.broadcast %437 : vector<1x32xf32> to vector<2x32xf32>
    %575 = arith.addf %573, %574 : vector<2x32xf32>
    %576 = arith.mulf %570, %575 : vector<2x32xf32>
    %577 = arith.addf %572, %576 : vector<2x32xf32>
    %578 = math.tanh %577 : vector<2x32xf32>
    %cst_135 = arith.constant 1.000000e+00 : f32
    %579 = vector.broadcast %cst_135 : f32 to vector<2x32xf32>
    %580 = arith.subf %579, %571 : vector<2x32xf32>
    %581 = arith.mulf %580, %578 : vector<2x32xf32>
    %582 = arith.mulf %571, %526 : vector<2x32xf32>
    %583 = arith.addf %581, %582 : vector<2x32xf32>
    %584 = arith.truncf %583 : vector<2x32xf32> to vector<2x32xbf16>
    %cst_136 = arith.constant dense<0.000000e+00> : vector<2x96xf32>
    %585 = tpu.matmul %584, %438, %cst_136 {dimension_numbers = #tpu.dot_dimension_numbers<[1], [0], [0], [1], [0, 0, 1, 1], [], []>} : vector<2x32xbf16>, vector<32x96xbf16>, vector<2x96xf32> -> vector<2x96xf32>
    %586 = vector.broadcast %439 : vector<1x96xf32> to vector<2x96xf32>
    %587 = arith.addf %585, %586 : vector<2x96xf32>
    %588 = arith.truncf %554 : vector<2x32xf32> to vector<2x32xbf16>
    %cst_137 = arith.constant dense<0.000000e+00> : vector<2x96xf32>
    %589 = tpu.matmul %588, %440, %cst_137 {dimension_numbers = #tpu.dot_dimension_numbers<[1], [0], [0], [1], [0, 0, 1, 1], [], []>} : vector<2x32xbf16>, vector<32x96xbf16>, vector<2x96xf32> -> vector<2x96xf32>
    %590 = vector.extract_strided_slice %587 {offsets = [0, 0], sizes = [2, 64], strides = [1, 1]} : vector<2x96xf32> to vector<2x64xf32>
    %591 = vector.extract_strided_slice %589 {offsets = [0, 0], sizes = [2, 64], strides = [1, 1]} : vector<2x96xf32> to vector<2x64xf32>
    %592 = arith.addf %590, %591 : vector<2x64xf32>
    %593 = arith.negf %592 : vector<2x64xf32>
    %594 = math.exp %593 : vector<2x64xf32>
    %cst_138 = arith.constant 1.000000e+00 : f32
    %595 = vector.broadcast %cst_138 : f32 to vector<2x64xf32>
    %596 = arith.addf %595, %594 : vector<2x64xf32>
    %597 = arith.divf %595, %596 : vector<2x64xf32>
    %598 = vector.extract_strided_slice %597 {offsets = [0, 0], sizes = [2, 32], strides = [1, 1]} : vector<2x64xf32> to vector<2x32xf32>
    %599 = vector.extract_strided_slice %597 {offsets = [0, 32], sizes = [2, 32], strides = [1, 1]} : vector<2x64xf32> to vector<2x32xf32>
    %600 = vector.extract_strided_slice %587 {offsets = [0, 64], sizes = [2, 32], strides = [1, 1]} : vector<2x96xf32> to vector<2x32xf32>
    %601 = vector.extract_strided_slice %589 {offsets = [0, 64], sizes = [2, 32], strides = [1, 1]} : vector<2x96xf32> to vector<2x32xf32>
    %602 = vector.broadcast %441 : vector<1x32xf32> to vector<2x32xf32>
    %603 = arith.addf %601, %602 : vector<2x32xf32>
    %604 = arith.mulf %598, %603 : vector<2x32xf32>
    %605 = arith.addf %600, %604 : vector<2x32xf32>
    %606 = math.tanh %605 : vector<2x32xf32>
    %cst_139 = arith.constant 1.000000e+00 : f32
    %607 = vector.broadcast %cst_139 : f32 to vector<2x32xf32>
    %608 = arith.subf %607, %599 : vector<2x32xf32>
    %609 = arith.mulf %608, %606 : vector<2x32xf32>
    %610 = arith.mulf %599, %554 : vector<2x32xf32>
    %611 = arith.addf %609, %610 : vector<2x32xf32>
    %c0_140 = arith.constant 0 : index
    %c2_141 = arith.constant 2 : index
    %c0_142 = arith.constant 0 : index
    %612 = vector.load %arg22[%c0_140, %c2_141, %c0_142] : memref<2x8x32xf32, #tpu.memory_space<vmem>>, vector<2x1x32xf32>
    %613 = vector.shape_cast %612 : vector<2x1x32xf32> to vector<2x32xf32>
    %614 = vector.shape_cast %611 : vector<2x32xf32> to vector<2x1x32xf32>
    tpu.vector_store %arg22[%c0_140, %c2_141, %c0_142], %614 {strides = array<i32>} : memref<2x8x32xf32, #tpu.memory_space<vmem>>, vector<2x1x32xf32>,
    %c6_143 = arith.constant 6 : index
    %c0_144 = arith.constant 0 : index
    %615 = vector.load %arg9[%c6_143, %c0_144] : memref<16x96xf32, #tpu.memory_space<vmem>>, vector<2x96xf32>
    %616 = arith.addf %615, %435 : vector<2x96xf32>
    %617 = arith.truncf %583 : vector<2x32xf32> to vector<2x32xbf16>
    %cst_145 = arith.constant dense<0.000000e+00> : vector<2x96xf32>
    %618 = tpu.matmul %617, %436, %cst_145 {dimension_numbers = #tpu.dot_dimension_numbers<[1], [0], [0], [1], [0, 0, 1, 1], [], []>} : vector<2x32xbf16>, vector<32x96xbf16>, vector<2x96xf32> -> vector<2x96xf32>
    %619 = vector.extract_strided_slice %616 {offsets = [0, 0], sizes = [2, 64], strides = [1, 1]} : vector<2x96xf32> to vector<2x64xf32>
    %620 = vector.extract_strided_slice %618 {offsets = [0, 0], sizes = [2, 64], strides = [1, 1]} : vector<2x96xf32> to vector<2x64xf32>
    %621 = arith.addf %619, %620 : vector<2x64xf32>
    %622 = arith.negf %621 : vector<2x64xf32>
    %623 = math.exp %622 : vector<2x64xf32>
    %cst_146 = arith.constant 1.000000e+00 : f32
    %624 = vector.broadcast %cst_146 : f32 to vector<2x64xf32>
    %625 = arith.addf %624, %623 : vector<2x64xf32>
    %626 = arith.divf %624, %625 : vector<2x64xf32>
    %627 = vector.extract_strided_slice %626 {offsets = [0, 0], sizes = [2, 32], strides = [1, 1]} : vector<2x64xf32> to vector<2x32xf32>
    %628 = vector.extract_strided_slice %626 {offsets = [0, 32], sizes = [2, 32], strides = [1, 1]} : vector<2x64xf32> to vector<2x32xf32>
    %629 = vector.extract_strided_slice %616 {offsets = [0, 64], sizes = [2, 32], strides = [1, 1]} : vector<2x96xf32> to vector<2x32xf32>
    %630 = vector.extract_strided_slice %618 {offsets = [0, 64], sizes = [2, 32], strides = [1, 1]} : vector<2x96xf32> to vector<2x32xf32>
    %631 = vector.broadcast %437 : vector<1x32xf32> to vector<2x32xf32>
    %632 = arith.addf %630, %631 : vector<2x32xf32>
    %633 = arith.mulf %627, %632 : vector<2x32xf32>
    %634 = arith.addf %629, %633 : vector<2x32xf32>
    %635 = math.tanh %634 : vector<2x32xf32>
    %cst_147 = arith.constant 1.000000e+00 : f32
    %636 = vector.broadcast %cst_147 : f32 to vector<2x32xf32>
    %637 = arith.subf %636, %628 : vector<2x32xf32>
    %638 = arith.mulf %637, %635 : vector<2x32xf32>
    %639 = arith.mulf %628, %583 : vector<2x32xf32>
    %640 = arith.addf %638, %639 : vector<2x32xf32>
    %641 = arith.truncf %640 : vector<2x32xf32> to vector<2x32xbf16>
    %cst_148 = arith.constant dense<0.000000e+00> : vector<2x96xf32>
    %642 = tpu.matmul %641, %438, %cst_148 {dimension_numbers = #tpu.dot_dimension_numbers<[1], [0], [0], [1], [0, 0, 1, 1], [], []>} : vector<2x32xbf16>, vector<32x96xbf16>, vector<2x96xf32> -> vector<2x96xf32>
    %643 = vector.broadcast %439 : vector<1x96xf32> to vector<2x96xf32>
    %644 = arith.addf %642, %643 : vector<2x96xf32>
    %645 = arith.truncf %611 : vector<2x32xf32> to vector<2x32xbf16>
    %cst_149 = arith.constant dense<0.000000e+00> : vector<2x96xf32>
    %646 = tpu.matmul %645, %440, %cst_149 {dimension_numbers = #tpu.dot_dimension_numbers<[1], [0], [0], [1], [0, 0, 1, 1], [], []>} : vector<2x32xbf16>, vector<32x96xbf16>, vector<2x96xf32> -> vector<2x96xf32>
    %647 = vector.extract_strided_slice %644 {offsets = [0, 0], sizes = [2, 64], strides = [1, 1]} : vector<2x96xf32> to vector<2x64xf32>
    %648 = vector.extract_strided_slice %646 {offsets = [0, 0], sizes = [2, 64], strides = [1, 1]} : vector<2x96xf32> to vector<2x64xf32>
    %649 = arith.addf %647, %648 : vector<2x64xf32>
    %650 = arith.negf %649 : vector<2x64xf32>
    %651 = math.exp %650 : vector<2x64xf32>
    %cst_150 = arith.constant 1.000000e+00 : f32
    %652 = vector.broadcast %cst_150 : f32 to vector<2x64xf32>
    %653 = arith.addf %652, %651 : vector<2x64xf32>
    %654 = arith.divf %652, %653 : vector<2x64xf32>
    %655 = vector.extract_strided_slice %654 {offsets = [0, 0], sizes = [2, 32], strides = [1, 1]} : vector<2x64xf32> to vector<2x32xf32>
    %656 = vector.extract_strided_slice %654 {offsets = [0, 32], sizes = [2, 32], strides = [1, 1]} : vector<2x64xf32> to vector<2x32xf32>
    %657 = vector.extract_strided_slice %644 {offsets = [0, 64], sizes = [2, 32], strides = [1, 1]} : vector<2x96xf32> to vector<2x32xf32>
    %658 = vector.extract_strided_slice %646 {offsets = [0, 64], sizes = [2, 32], strides = [1, 1]} : vector<2x96xf32> to vector<2x32xf32>
    %659 = vector.broadcast %441 : vector<1x32xf32> to vector<2x32xf32>
    %660 = arith.addf %658, %659 : vector<2x32xf32>
    %661 = arith.mulf %655, %660 : vector<2x32xf32>
    %662 = arith.addf %657, %661 : vector<2x32xf32>
    %663 = math.tanh %662 : vector<2x32xf32>
    %cst_151 = arith.constant 1.000000e+00 : f32
    %664 = vector.broadcast %cst_151 : f32 to vector<2x32xf32>
    %665 = arith.subf %664, %656 : vector<2x32xf32>
    %666 = arith.mulf %665, %663 : vector<2x32xf32>
    %667 = arith.mulf %656, %611 : vector<2x32xf32>
    %668 = arith.addf %666, %667 : vector<2x32xf32>
    %c0_152 = arith.constant 0 : index
    %c3 = arith.constant 3 : index
    %c0_153 = arith.constant 0 : index
    %669 = vector.load %arg22[%c0_152, %c3, %c0_153] : memref<2x8x32xf32, #tpu.memory_space<vmem>>, vector<2x1x32xf32>
    %670 = vector.shape_cast %669 : vector<2x1x32xf32> to vector<2x32xf32>
    %671 = vector.shape_cast %668 : vector<2x32xf32> to vector<2x1x32xf32>
    tpu.vector_store %arg22[%c0_152, %c3, %c0_153], %671 {strides = array<i32>} : memref<2x8x32xf32, #tpu.memory_space<vmem>>, vector<2x1x32xf32>,
    %c8_154 = arith.constant 8 : index
    %c0_155 = arith.constant 0 : index
    %672 = vector.load %arg9[%c8_154, %c0_155] : memref<16x96xf32, #tpu.memory_space<vmem>>, vector<2x96xf32>
    %673 = arith.addf %672, %435 : vector<2x96xf32>
    %674 = arith.truncf %640 : vector<2x32xf32> to vector<2x32xbf16>
    %cst_156 = arith.constant dense<0.000000e+00> : vector<2x96xf32>
    %675 = tpu.matmul %674, %436, %cst_156 {dimension_numbers = #tpu.dot_dimension_numbers<[1], [0], [0], [1], [0, 0, 1, 1], [], []>} : vector<2x32xbf16>, vector<32x96xbf16>, vector<2x96xf32> -> vector<2x96xf32>
    %676 = vector.extract_strided_slice %673 {offsets = [0, 0], sizes = [2, 64], strides = [1, 1]} : vector<2x96xf32> to vector<2x64xf32>
    %677 = vector.extract_strided_slice %675 {offsets = [0, 0], sizes = [2, 64], strides = [1, 1]} : vector<2x96xf32> to vector<2x64xf32>
    %678 = arith.addf %676, %677 : vector<2x64xf32>
    %679 = arith.negf %678 : vector<2x64xf32>
    %680 = math.exp %679 : vector<2x64xf32>
    %cst_157 = arith.constant 1.000000e+00 : f32
    %681 = vector.broadcast %cst_157 : f32 to vector<2x64xf32>
    %682 = arith.addf %681, %680 : vector<2x64xf32>
    %683 = arith.divf %681, %682 : vector<2x64xf32>
    %684 = vector.extract_strided_slice %683 {offsets = [0, 0], sizes = [2, 32], strides = [1, 1]} : vector<2x64xf32> to vector<2x32xf32>
    %685 = vector.extract_strided_slice %683 {offsets = [0, 32], sizes = [2, 32], strides = [1, 1]} : vector<2x64xf32> to vector<2x32xf32>
    %686 = vector.extract_strided_slice %673 {offsets = [0, 64], sizes = [2, 32], strides = [1, 1]} : vector<2x96xf32> to vector<2x32xf32>
    %687 = vector.extract_strided_slice %675 {offsets = [0, 64], sizes = [2, 32], strides = [1, 1]} : vector<2x96xf32> to vector<2x32xf32>
    %688 = vector.broadcast %437 : vector<1x32xf32> to vector<2x32xf32>
    %689 = arith.addf %687, %688 : vector<2x32xf32>
    %690 = arith.mulf %684, %689 : vector<2x32xf32>
    %691 = arith.addf %686, %690 : vector<2x32xf32>
    %692 = math.tanh %691 : vector<2x32xf32>
    %cst_158 = arith.constant 1.000000e+00 : f32
    %693 = vector.broadcast %cst_158 : f32 to vector<2x32xf32>
    %694 = arith.subf %693, %685 : vector<2x32xf32>
    %695 = arith.mulf %694, %692 : vector<2x32xf32>
    %696 = arith.mulf %685, %640 : vector<2x32xf32>
    %697 = arith.addf %695, %696 : vector<2x32xf32>
    %698 = arith.truncf %697 : vector<2x32xf32> to vector<2x32xbf16>
    %cst_159 = arith.constant dense<0.000000e+00> : vector<2x96xf32>
    %699 = tpu.matmul %698, %438, %cst_159 {dimension_numbers = #tpu.dot_dimension_numbers<[1], [0], [0], [1], [0, 0, 1, 1], [], []>} : vector<2x32xbf16>, vector<32x96xbf16>, vector<2x96xf32> -> vector<2x96xf32>
    %700 = vector.broadcast %439 : vector<1x96xf32> to vector<2x96xf32>
    %701 = arith.addf %699, %700 : vector<2x96xf32>
    %702 = arith.truncf %668 : vector<2x32xf32> to vector<2x32xbf16>
    %cst_160 = arith.constant dense<0.000000e+00> : vector<2x96xf32>
    %703 = tpu.matmul %702, %440, %cst_160 {dimension_numbers = #tpu.dot_dimension_numbers<[1], [0], [0], [1], [0, 0, 1, 1], [], []>} : vector<2x32xbf16>, vector<32x96xbf16>, vector<2x96xf32> -> vector<2x96xf32>
    %704 = vector.extract_strided_slice %701 {offsets = [0, 0], sizes = [2, 64], strides = [1, 1]} : vector<2x96xf32> to vector<2x64xf32>
    %705 = vector.extract_strided_slice %703 {offsets = [0, 0], sizes = [2, 64], strides = [1, 1]} : vector<2x96xf32> to vector<2x64xf32>
    %706 = arith.addf %704, %705 : vector<2x64xf32>
    %707 = arith.negf %706 : vector<2x64xf32>
    %708 = math.exp %707 : vector<2x64xf32>
    %cst_161 = arith.constant 1.000000e+00 : f32
    %709 = vector.broadcast %cst_161 : f32 to vector<2x64xf32>
    %710 = arith.addf %709, %708 : vector<2x64xf32>
    %711 = arith.divf %709, %710 : vector<2x64xf32>
    %712 = vector.extract_strided_slice %711 {offsets = [0, 0], sizes = [2, 32], strides = [1, 1]} : vector<2x64xf32> to vector<2x32xf32>
    %713 = vector.extract_strided_slice %711 {offsets = [0, 32], sizes = [2, 32], strides = [1, 1]} : vector<2x64xf32> to vector<2x32xf32>
    %714 = vector.extract_strided_slice %701 {offsets = [0, 64], sizes = [2, 32], strides = [1, 1]} : vector<2x96xf32> to vector<2x32xf32>
    %715 = vector.extract_strided_slice %703 {offsets = [0, 64], sizes = [2, 32], strides = [1, 1]} : vector<2x96xf32> to vector<2x32xf32>
    %716 = vector.broadcast %441 : vector<1x32xf32> to vector<2x32xf32>
    %717 = arith.addf %715, %716 : vector<2x32xf32>
    %718 = arith.mulf %712, %717 : vector<2x32xf32>
    %719 = arith.addf %714, %718 : vector<2x32xf32>
    %720 = math.tanh %719 : vector<2x32xf32>
    %cst_162 = arith.constant 1.000000e+00 : f32
    %721 = vector.broadcast %cst_162 : f32 to vector<2x32xf32>
    %722 = arith.subf %721, %713 : vector<2x32xf32>
    %723 = arith.mulf %722, %720 : vector<2x32xf32>
    %724 = arith.mulf %713, %668 : vector<2x32xf32>
    %725 = arith.addf %723, %724 : vector<2x32xf32>
    %c0_163 = arith.constant 0 : index
    %c4_164 = arith.constant 4 : index
    %c0_165 = arith.constant 0 : index
    %726 = vector.load %arg22[%c0_163, %c4_164, %c0_165] : memref<2x8x32xf32, #tpu.memory_space<vmem>>, vector<2x1x32xf32>
    %727 = vector.shape_cast %726 : vector<2x1x32xf32> to vector<2x32xf32>
    %728 = vector.shape_cast %725 : vector<2x32xf32> to vector<2x1x32xf32>
    tpu.vector_store %arg22[%c0_163, %c4_164, %c0_165], %728 {strides = array<i32>} : memref<2x8x32xf32, #tpu.memory_space<vmem>>, vector<2x1x32xf32>,
    %c10_166 = arith.constant 10 : index
    %c0_167 = arith.constant 0 : index
    %729 = vector.load %arg9[%c10_166, %c0_167] : memref<16x96xf32, #tpu.memory_space<vmem>>, vector<2x96xf32>
    %730 = arith.addf %729, %435 : vector<2x96xf32>
    %731 = arith.truncf %697 : vector<2x32xf32> to vector<2x32xbf16>
    %cst_168 = arith.constant dense<0.000000e+00> : vector<2x96xf32>
    %732 = tpu.matmul %731, %436, %cst_168 {dimension_numbers = #tpu.dot_dimension_numbers<[1], [0], [0], [1], [0, 0, 1, 1], [], []>} : vector<2x32xbf16>, vector<32x96xbf16>, vector<2x96xf32> -> vector<2x96xf32>
    %733 = vector.extract_strided_slice %730 {offsets = [0, 0], sizes = [2, 64], strides = [1, 1]} : vector<2x96xf32> to vector<2x64xf32>
    %734 = vector.extract_strided_slice %732 {offsets = [0, 0], sizes = [2, 64], strides = [1, 1]} : vector<2x96xf32> to vector<2x64xf32>
    %735 = arith.addf %733, %734 : vector<2x64xf32>
    %736 = arith.negf %735 : vector<2x64xf32>
    %737 = math.exp %736 : vector<2x64xf32>
    %cst_169 = arith.constant 1.000000e+00 : f32
    %738 = vector.broadcast %cst_169 : f32 to vector<2x64xf32>
    %739 = arith.addf %738, %737 : vector<2x64xf32>
    %740 = arith.divf %738, %739 : vector<2x64xf32>
    %741 = vector.extract_strided_slice %740 {offsets = [0, 0], sizes = [2, 32], strides = [1, 1]} : vector<2x64xf32> to vector<2x32xf32>
    %742 = vector.extract_strided_slice %740 {offsets = [0, 32], sizes = [2, 32], strides = [1, 1]} : vector<2x64xf32> to vector<2x32xf32>
    %743 = vector.extract_strided_slice %730 {offsets = [0, 64], sizes = [2, 32], strides = [1, 1]} : vector<2x96xf32> to vector<2x32xf32>
    %744 = vector.extract_strided_slice %732 {offsets = [0, 64], sizes = [2, 32], strides = [1, 1]} : vector<2x96xf32> to vector<2x32xf32>
    %745 = vector.broadcast %437 : vector<1x32xf32> to vector<2x32xf32>
    %746 = arith.addf %744, %745 : vector<2x32xf32>
    %747 = arith.mulf %741, %746 : vector<2x32xf32>
    %748 = arith.addf %743, %747 : vector<2x32xf32>
    %749 = math.tanh %748 : vector<2x32xf32>
    %cst_170 = arith.constant 1.000000e+00 : f32
    %750 = vector.broadcast %cst_170 : f32 to vector<2x32xf32>
    %751 = arith.subf %750, %742 : vector<2x32xf32>
    %752 = arith.mulf %751, %749 : vector<2x32xf32>
    %753 = arith.mulf %742, %697 : vector<2x32xf32>
    %754 = arith.addf %752, %753 : vector<2x32xf32>
    %755 = arith.truncf %754 : vector<2x32xf32> to vector<2x32xbf16>
    %cst_171 = arith.constant dense<0.000000e+00> : vector<2x96xf32>
    %756 = tpu.matmul %755, %438, %cst_171 {dimension_numbers = #tpu.dot_dimension_numbers<[1], [0], [0], [1], [0, 0, 1, 1], [], []>} : vector<2x32xbf16>, vector<32x96xbf16>, vector<2x96xf32> -> vector<2x96xf32>
    %757 = vector.broadcast %439 : vector<1x96xf32> to vector<2x96xf32>
    %758 = arith.addf %756, %757 : vector<2x96xf32>
    %759 = arith.truncf %725 : vector<2x32xf32> to vector<2x32xbf16>
    %cst_172 = arith.constant dense<0.000000e+00> : vector<2x96xf32>
    %760 = tpu.matmul %759, %440, %cst_172 {dimension_numbers = #tpu.dot_dimension_numbers<[1], [0], [0], [1], [0, 0, 1, 1], [], []>} : vector<2x32xbf16>, vector<32x96xbf16>, vector<2x96xf32> -> vector<2x96xf32>
    %761 = vector.extract_strided_slice %758 {offsets = [0, 0], sizes = [2, 64], strides = [1, 1]} : vector<2x96xf32> to vector<2x64xf32>
    %762 = vector.extract_strided_slice %760 {offsets = [0, 0], sizes = [2, 64], strides = [1, 1]} : vector<2x96xf32> to vector<2x64xf32>
    %763 = arith.addf %761, %762 : vector<2x64xf32>
    %764 = arith.negf %763 : vector<2x64xf32>
    %765 = math.exp %764 : vector<2x64xf32>
    %cst_173 = arith.constant 1.000000e+00 : f32
    %766 = vector.broadcast %cst_173 : f32 to vector<2x64xf32>
    %767 = arith.addf %766, %765 : vector<2x64xf32>
    %768 = arith.divf %766, %767 : vector<2x64xf32>
    %769 = vector.extract_strided_slice %768 {offsets = [0, 0], sizes = [2, 32], strides = [1, 1]} : vector<2x64xf32> to vector<2x32xf32>
    %770 = vector.extract_strided_slice %768 {offsets = [0, 32], sizes = [2, 32], strides = [1, 1]} : vector<2x64xf32> to vector<2x32xf32>
    %771 = vector.extract_strided_slice %758 {offsets = [0, 64], sizes = [2, 32], strides = [1, 1]} : vector<2x96xf32> to vector<2x32xf32>
    %772 = vector.extract_strided_slice %760 {offsets = [0, 64], sizes = [2, 32], strides = [1, 1]} : vector<2x96xf32> to vector<2x32xf32>
    %773 = vector.broadcast %441 : vector<1x32xf32> to vector<2x32xf32>
    %774 = arith.addf %772, %773 : vector<2x32xf32>
    %775 = arith.mulf %769, %774 : vector<2x32xf32>
    %776 = arith.addf %771, %775 : vector<2x32xf32>
    %777 = math.tanh %776 : vector<2x32xf32>
    %cst_174 = arith.constant 1.000000e+00 : f32
    %778 = vector.broadcast %cst_174 : f32 to vector<2x32xf32>
    %779 = arith.subf %778, %770 : vector<2x32xf32>
    %780 = arith.mulf %779, %777 : vector<2x32xf32>
    %781 = arith.mulf %770, %725 : vector<2x32xf32>
    %782 = arith.addf %780, %781 : vector<2x32xf32>
    %c0_175 = arith.constant 0 : index
    %c5 = arith.constant 5 : index
    %c0_176 = arith.constant 0 : index
    %783 = vector.load %arg22[%c0_175, %c5, %c0_176] : memref<2x8x32xf32, #tpu.memory_space<vmem>>, vector<2x1x32xf32>
    %784 = vector.shape_cast %783 : vector<2x1x32xf32> to vector<2x32xf32>
    %785 = vector.shape_cast %782 : vector<2x32xf32> to vector<2x1x32xf32>
    tpu.vector_store %arg22[%c0_175, %c5, %c0_176], %785 {strides = array<i32>} : memref<2x8x32xf32, #tpu.memory_space<vmem>>, vector<2x1x32xf32>,
    %c12_177 = arith.constant 12 : index
    %c0_178 = arith.constant 0 : index
    %786 = vector.load %arg9[%c12_177, %c0_178] : memref<16x96xf32, #tpu.memory_space<vmem>>, vector<2x96xf32>
    %787 = arith.addf %786, %435 : vector<2x96xf32>
    %788 = arith.truncf %754 : vector<2x32xf32> to vector<2x32xbf16>
    %cst_179 = arith.constant dense<0.000000e+00> : vector<2x96xf32>
    %789 = tpu.matmul %788, %436, %cst_179 {dimension_numbers = #tpu.dot_dimension_numbers<[1], [0], [0], [1], [0, 0, 1, 1], [], []>} : vector<2x32xbf16>, vector<32x96xbf16>, vector<2x96xf32> -> vector<2x96xf32>
    %790 = vector.extract_strided_slice %787 {offsets = [0, 0], sizes = [2, 64], strides = [1, 1]} : vector<2x96xf32> to vector<2x64xf32>
    %791 = vector.extract_strided_slice %789 {offsets = [0, 0], sizes = [2, 64], strides = [1, 1]} : vector<2x96xf32> to vector<2x64xf32>
    %792 = arith.addf %790, %791 : vector<2x64xf32>
    %793 = arith.negf %792 : vector<2x64xf32>
    %794 = math.exp %793 : vector<2x64xf32>
    %cst_180 = arith.constant 1.000000e+00 : f32
    %795 = vector.broadcast %cst_180 : f32 to vector<2x64xf32>
    %796 = arith.addf %795, %794 : vector<2x64xf32>
    %797 = arith.divf %795, %796 : vector<2x64xf32>
    %798 = vector.extract_strided_slice %797 {offsets = [0, 0], sizes = [2, 32], strides = [1, 1]} : vector<2x64xf32> to vector<2x32xf32>
    %799 = vector.extract_strided_slice %797 {offsets = [0, 32], sizes = [2, 32], strides = [1, 1]} : vector<2x64xf32> to vector<2x32xf32>
    %800 = vector.extract_strided_slice %787 {offsets = [0, 64], sizes = [2, 32], strides = [1, 1]} : vector<2x96xf32> to vector<2x32xf32>
    %801 = vector.extract_strided_slice %789 {offsets = [0, 64], sizes = [2, 32], strides = [1, 1]} : vector<2x96xf32> to vector<2x32xf32>
    %802 = vector.broadcast %437 : vector<1x32xf32> to vector<2x32xf32>
    %803 = arith.addf %801, %802 : vector<2x32xf32>
    %804 = arith.mulf %798, %803 : vector<2x32xf32>
    %805 = arith.addf %800, %804 : vector<2x32xf32>
    %806 = math.tanh %805 : vector<2x32xf32>
    %cst_181 = arith.constant 1.000000e+00 : f32
    %807 = vector.broadcast %cst_181 : f32 to vector<2x32xf32>
    %808 = arith.subf %807, %799 : vector<2x32xf32>
    %809 = arith.mulf %808, %806 : vector<2x32xf32>
    %810 = arith.mulf %799, %754 : vector<2x32xf32>
    %811 = arith.addf %809, %810 : vector<2x32xf32>
    %812 = arith.truncf %811 : vector<2x32xf32> to vector<2x32xbf16>
    %cst_182 = arith.constant dense<0.000000e+00> : vector<2x96xf32>
    %813 = tpu.matmul %812, %438, %cst_182 {dimension_numbers = #tpu.dot_dimension_numbers<[1], [0], [0], [1], [0, 0, 1, 1], [], []>} : vector<2x32xbf16>, vector<32x96xbf16>, vector<2x96xf32> -> vector<2x96xf32>
    %814 = vector.broadcast %439 : vector<1x96xf32> to vector<2x96xf32>
    %815 = arith.addf %813, %814 : vector<2x96xf32>
    %816 = arith.truncf %782 : vector<2x32xf32> to vector<2x32xbf16>
    %cst_183 = arith.constant dense<0.000000e+00> : vector<2x96xf32>
    %817 = tpu.matmul %816, %440, %cst_183 {dimension_numbers = #tpu.dot_dimension_numbers<[1], [0], [0], [1], [0, 0, 1, 1], [], []>} : vector<2x32xbf16>, vector<32x96xbf16>, vector<2x96xf32> -> vector<2x96xf32>
    %818 = vector.extract_strided_slice %815 {offsets = [0, 0], sizes = [2, 64], strides = [1, 1]} : vector<2x96xf32> to vector<2x64xf32>
    %819 = vector.extract_strided_slice %817 {offsets = [0, 0], sizes = [2, 64], strides = [1, 1]} : vector<2x96xf32> to vector<2x64xf32>
    %820 = arith.addf %818, %819 : vector<2x64xf32>
    %821 = arith.negf %820 : vector<2x64xf32>
    %822 = math.exp %821 : vector<2x64xf32>
    %cst_184 = arith.constant 1.000000e+00 : f32
    %823 = vector.broadcast %cst_184 : f32 to vector<2x64xf32>
    %824 = arith.addf %823, %822 : vector<2x64xf32>
    %825 = arith.divf %823, %824 : vector<2x64xf32>
    %826 = vector.extract_strided_slice %825 {offsets = [0, 0], sizes = [2, 32], strides = [1, 1]} : vector<2x64xf32> to vector<2x32xf32>
    %827 = vector.extract_strided_slice %825 {offsets = [0, 32], sizes = [2, 32], strides = [1, 1]} : vector<2x64xf32> to vector<2x32xf32>
    %828 = vector.extract_strided_slice %815 {offsets = [0, 64], sizes = [2, 32], strides = [1, 1]} : vector<2x96xf32> to vector<2x32xf32>
    %829 = vector.extract_strided_slice %817 {offsets = [0, 64], sizes = [2, 32], strides = [1, 1]} : vector<2x96xf32> to vector<2x32xf32>
    %830 = vector.broadcast %441 : vector<1x32xf32> to vector<2x32xf32>
    %831 = arith.addf %829, %830 : vector<2x32xf32>
    %832 = arith.mulf %826, %831 : vector<2x32xf32>
    %833 = arith.addf %828, %832 : vector<2x32xf32>
    %834 = math.tanh %833 : vector<2x32xf32>
    %cst_185 = arith.constant 1.000000e+00 : f32
    %835 = vector.broadcast %cst_185 : f32 to vector<2x32xf32>
    %836 = arith.subf %835, %827 : vector<2x32xf32>
    %837 = arith.mulf %836, %834 : vector<2x32xf32>
    %838 = arith.mulf %827, %782 : vector<2x32xf32>
    %839 = arith.addf %837, %838 : vector<2x32xf32>
    %c0_186 = arith.constant 0 : index
    %c6_187 = arith.constant 6 : index
    %c0_188 = arith.constant 0 : index
    %840 = vector.load %arg22[%c0_186, %c6_187, %c0_188] : memref<2x8x32xf32, #tpu.memory_space<vmem>>, vector<2x1x32xf32>
    %841 = vector.shape_cast %840 : vector<2x1x32xf32> to vector<2x32xf32>
    %842 = vector.shape_cast %839 : vector<2x32xf32> to vector<2x1x32xf32>
    tpu.vector_store %arg22[%c0_186, %c6_187, %c0_188], %842 {strides = array<i32>} : memref<2x8x32xf32, #tpu.memory_space<vmem>>, vector<2x1x32xf32>,
    %c14_189 = arith.constant 14 : index
    %c0_190 = arith.constant 0 : index
    %843 = vector.load %arg9[%c14_189, %c0_190] : memref<16x96xf32, #tpu.memory_space<vmem>>, vector<2x96xf32>
    %844 = arith.addf %843, %435 : vector<2x96xf32>
    %845 = arith.truncf %811 : vector<2x32xf32> to vector<2x32xbf16>
    %cst_191 = arith.constant dense<0.000000e+00> : vector<2x96xf32>
    %846 = tpu.matmul %845, %436, %cst_191 {dimension_numbers = #tpu.dot_dimension_numbers<[1], [0], [0], [1], [0, 0, 1, 1], [], []>} : vector<2x32xbf16>, vector<32x96xbf16>, vector<2x96xf32> -> vector<2x96xf32>
    %847 = vector.extract_strided_slice %844 {offsets = [0, 0], sizes = [2, 64], strides = [1, 1]} : vector<2x96xf32> to vector<2x64xf32>
    %848 = vector.extract_strided_slice %846 {offsets = [0, 0], sizes = [2, 64], strides = [1, 1]} : vector<2x96xf32> to vector<2x64xf32>
    %849 = arith.addf %847, %848 : vector<2x64xf32>
    %850 = arith.negf %849 : vector<2x64xf32>
    %851 = math.exp %850 : vector<2x64xf32>
    %cst_192 = arith.constant 1.000000e+00 : f32
    %852 = vector.broadcast %cst_192 : f32 to vector<2x64xf32>
    %853 = arith.addf %852, %851 : vector<2x64xf32>
    %854 = arith.divf %852, %853 : vector<2x64xf32>
    %855 = vector.extract_strided_slice %854 {offsets = [0, 0], sizes = [2, 32], strides = [1, 1]} : vector<2x64xf32> to vector<2x32xf32>
    %856 = vector.extract_strided_slice %854 {offsets = [0, 32], sizes = [2, 32], strides = [1, 1]} : vector<2x64xf32> to vector<2x32xf32>
    %857 = vector.extract_strided_slice %844 {offsets = [0, 64], sizes = [2, 32], strides = [1, 1]} : vector<2x96xf32> to vector<2x32xf32>
    %858 = vector.extract_strided_slice %846 {offsets = [0, 64], sizes = [2, 32], strides = [1, 1]} : vector<2x96xf32> to vector<2x32xf32>
    %859 = vector.broadcast %437 : vector<1x32xf32> to vector<2x32xf32>
    %860 = arith.addf %858, %859 : vector<2x32xf32>
    %861 = arith.mulf %855, %860 : vector<2x32xf32>
    %862 = arith.addf %857, %861 : vector<2x32xf32>
    %863 = math.tanh %862 : vector<2x32xf32>
    %cst_193 = arith.constant 1.000000e+00 : f32
    %864 = vector.broadcast %cst_193 : f32 to vector<2x32xf32>
    %865 = arith.subf %864, %856 : vector<2x32xf32>
    %866 = arith.mulf %865, %863 : vector<2x32xf32>
    %867 = arith.mulf %856, %811 : vector<2x32xf32>
    %868 = arith.addf %866, %867 : vector<2x32xf32>
    %869 = arith.truncf %868 : vector<2x32xf32> to vector<2x32xbf16>
    %cst_194 = arith.constant dense<0.000000e+00> : vector<2x96xf32>
    %870 = tpu.matmul %869, %438, %cst_194 {dimension_numbers = #tpu.dot_dimension_numbers<[1], [0], [0], [1], [0, 0, 1, 1], [], []>} : vector<2x32xbf16>, vector<32x96xbf16>, vector<2x96xf32> -> vector<2x96xf32>
    %871 = vector.broadcast %439 : vector<1x96xf32> to vector<2x96xf32>
    %872 = arith.addf %870, %871 : vector<2x96xf32>
    %873 = arith.truncf %839 : vector<2x32xf32> to vector<2x32xbf16>
    %cst_195 = arith.constant dense<0.000000e+00> : vector<2x96xf32>
    %874 = tpu.matmul %873, %440, %cst_195 {dimension_numbers = #tpu.dot_dimension_numbers<[1], [0], [0], [1], [0, 0, 1, 1], [], []>} : vector<2x32xbf16>, vector<32x96xbf16>, vector<2x96xf32> -> vector<2x96xf32>
    %875 = vector.extract_strided_slice %872 {offsets = [0, 0], sizes = [2, 64], strides = [1, 1]} : vector<2x96xf32> to vector<2x64xf32>
    %876 = vector.extract_strided_slice %874 {offsets = [0, 0], sizes = [2, 64], strides = [1, 1]} : vector<2x96xf32> to vector<2x64xf32>
    %877 = arith.addf %875, %876 : vector<2x64xf32>
    %878 = arith.negf %877 : vector<2x64xf32>
    %879 = math.exp %878 : vector<2x64xf32>
    %cst_196 = arith.constant 1.000000e+00 : f32
    %880 = vector.broadcast %cst_196 : f32 to vector<2x64xf32>
    %881 = arith.addf %880, %879 : vector<2x64xf32>
    %882 = arith.divf %880, %881 : vector<2x64xf32>
    %883 = vector.extract_strided_slice %882 {offsets = [0, 0], sizes = [2, 32], strides = [1, 1]} : vector<2x64xf32> to vector<2x32xf32>
    %884 = vector.extract_strided_slice %882 {offsets = [0, 32], sizes = [2, 32], strides = [1, 1]} : vector<2x64xf32> to vector<2x32xf32>
    %885 = vector.extract_strided_slice %872 {offsets = [0, 64], sizes = [2, 32], strides = [1, 1]} : vector<2x96xf32> to vector<2x32xf32>
    %886 = vector.extract_strided_slice %874 {offsets = [0, 64], sizes = [2, 32], strides = [1, 1]} : vector<2x96xf32> to vector<2x32xf32>
    %887 = vector.broadcast %441 : vector<1x32xf32> to vector<2x32xf32>
    %888 = arith.addf %886, %887 : vector<2x32xf32>
    %889 = arith.mulf %883, %888 : vector<2x32xf32>
    %890 = arith.addf %885, %889 : vector<2x32xf32>
    %891 = math.tanh %890 : vector<2x32xf32>
    %cst_197 = arith.constant 1.000000e+00 : f32
    %892 = vector.broadcast %cst_197 : f32 to vector<2x32xf32>
    %893 = arith.subf %892, %884 : vector<2x32xf32>
    %894 = arith.mulf %893, %891 : vector<2x32xf32>
    %895 = arith.mulf %884, %839 : vector<2x32xf32>
    %896 = arith.addf %894, %895 : vector<2x32xf32>
    %c0_198 = arith.constant 0 : index
    %c7 = arith.constant 7 : index
    %c0_199 = arith.constant 0 : index
    %897 = vector.load %arg22[%c0_198, %c7, %c0_199] : memref<2x8x32xf32, #tpu.memory_space<vmem>>, vector<2x1x32xf32>
    %898 = vector.shape_cast %897 : vector<2x1x32xf32> to vector<2x32xf32>
    %899 = vector.shape_cast %896 : vector<2x32xf32> to vector<2x1x32xf32>
    tpu.vector_store %arg22[%c0_198, %c7, %c0_199], %899 {strides = array<i32>} : memref<2x8x32xf32, #tpu.memory_space<vmem>>, vector<2x1x32xf32>,
    %c0_200 = arith.constant 0 : index
    %c0_201 = arith.constant 0 : index
    %c0_202 = arith.constant 0 : index
    %900 = vector.load %arg22[%c0_200, %c0_201, %c0_202] : memref<2x8x32xf32, #tpu.memory_space<vmem>>, vector<2x8x32xf32>
    %901 = vector.shape_cast %900 : vector<2x8x32xf32> to vector<16x32xf32>
    %902 = arith.truncf %901 : vector<16x32xf32> to vector<16x32xbf16>
    %c0_203 = arith.constant 0 : index
    %c0_204 = arith.constant 0 : index
    %903 = vector.load %arg17[%c0_203, %c0_204] : memref<32x128xbf16, #tpu.memory_space<vmem>>, vector<32x128xbf16>
    %cst_205 = arith.constant dense<0.000000e+00> : vector<16x128xf32>
    %904 = tpu.matmul %902, %903, %cst_205 {dimension_numbers = #tpu.dot_dimension_numbers<[1], [0], [0], [1], [0, 0, 1, 1], [], []>} : vector<16x32xbf16>, vector<32x128xbf16>, vector<16x128xf32> -> vector<16x128xf32>
    %c0_206 = arith.constant 0 : index
    %c0_207 = arith.constant 0 : index
    %905 = vector.load %arg18[%c0_206, %c0_207] : memref<1x128xf32, #tpu.memory_space<vmem>>, vector<1x128xf32>
    %906 = vector.broadcast %905 : vector<1x128xf32> to vector<16x128xf32>
    %907 = arith.addf %904, %906 : vector<16x128xf32>
    %c0_208 = arith.constant 0 : index
    %c0_209 = arith.constant 0 : index
    %908 = vector.load %arg19[%c0_208, %c0_209] : memref<16x128xf32, #tpu.memory_space<vmem>>, vector<16x128xf32>
    tpu.vector_store %arg19[%c0_208, %c0_209], %907 {strides = array<i32>} : memref<16x128xf32, #tpu.memory_space<vmem>>, vector<16x128xf32>,
    %c0_210 = arith.constant 0 : index
    %c0_211 = arith.constant 0 : index
    %c0_212 = arith.constant 0 : index
    %909 = vector.load %arg20[%c0_210, %c0_211, %c0_212] : memref<2x2x32xf32, #tpu.memory_space<vmem>>, vector<1x2x32xf32>
    %910 = vector.shape_cast %909 : vector<1x2x32xf32> to vector<2x32xf32>
    %911 = vector.shape_cast %868 : vector<2x32xf32> to vector<1x2x32xf32>
    tpu.vector_store %arg20[%c0_210, %c0_211, %c0_212], %911 {strides = array<i32>} : memref<2x2x32xf32, #tpu.memory_space<vmem>>, vector<1x2x32xf32>,
    %c1_213 = arith.constant 1 : index
    %c0_214 = arith.constant 0 : index
    %c0_215 = arith.constant 0 : index
    %912 = vector.load %arg20[%c1_213, %c0_214, %c0_215] : memref<2x2x32xf32, #tpu.memory_space<vmem>>, vector<1x2x32xf32>
    %913 = vector.shape_cast %912 : vector<1x2x32xf32> to vector<2x32xf32>
    %914 = vector.shape_cast %896 : vector<2x32xf32> to vector<1x2x32xf32>
    tpu.vector_store %arg20[%c1_213, %c0_214, %c0_215], %914 {strides = array<i32>} : memref<2x2x32xf32, #tpu.memory_space<vmem>>, vector<1x2x32xf32>,
    return
  }
}

</mosaic_0001>

<llo_original>
// kernel: _lambda_.1
$region0: #{_lambda_.1}
  #allocation0 [shape = 'u32[]', space=smem, size = 0x4, offset = 0x4, fixed_abs, tag = 'smem constant byte address 0x4 - core index']
  #allocation1 [shape = 'u32[72,128]{1,0:T(1,128)}', space=vmem, size = 0x9000, scoped, tag = 'internal scratch']
  #allocation2 [shape = 'f32[2,8,32]{2,1,0:T(8,128)}', space=vmem, size = 0x2000, scoped, tag = 'scratch operand']
  %s0 = inlined_call_operand.vmem [shape: f32[16,192], index: 0, kind: input, shape index: {}]
  %s1 = inlined_call_operand.vmem [shape: f32[16,192], index: 1, kind: input, shape index: {}]
  %s2 = inlined_call_operand.vmem [shape: bf16[64,192], index: 2, kind: input, shape index: {}]
  %s3 = inlined_call_operand.vmem [shape: f32[1,64], index: 3, kind: input, shape index: {}]
  %s4 = inlined_call_operand.vmem [shape: bf16[64,192], index: 4, kind: input, shape index: {}]
  %s5 = inlined_call_operand.vmem [shape: f32[1,64], index: 5, kind: input, shape index: {}]
  %s6 = inlined_call_operand.vmem [shape: bf16[64,32], index: 6, kind: input, shape index: {}]
  %s7 = inlined_call_operand.vmem [shape: f32[1,32], index: 7, kind: input, shape index: {}]
  %s8 = inlined_call_operand.vmem [shape: f32[2,16], index: 8, kind: input, shape index: {}]
  %s9 = inlined_call_operand.vmem [shape: f32[16,96], index: 9, kind: input, shape index: {}]
  %s10 = inlined_call_operand.vmem [shape: bf16[16,96], index: 10, kind: input, shape index: {}]
  %s11 = inlined_call_operand.vmem [shape: bf16[32,96], index: 11, kind: input, shape index: {}]
  %s12 = inlined_call_operand.vmem [shape: f32[1,32], index: 12, kind: input, shape index: {}]
  %s13 = inlined_call_operand.vmem [shape: bf16[32,96], index: 13, kind: input, shape index: {}]
  %s14 = inlined_call_operand.vmem [shape: f32[1,96], index: 14, kind: input, shape index: {}]
  %s15 = inlined_call_operand.vmem [shape: bf16[32,96], index: 15, kind: input, shape index: {}]
  %s16 = inlined_call_operand.vmem [shape: f32[1,32], index: 16, kind: input, shape index: {}]
  %s17 = inlined_call_operand.vmem [shape: bf16[32,128], index: 17, kind: input, shape index: {}]
  %s18 = inlined_call_operand.vmem [shape: f32[1,128], index: 18, kind: input, shape index: {}]
  %s19 = inlined_call_operand.hbm [shape: f32[16,128], index: 19, kind: output, shape index: {0}]
  %s20 = inlined_call_operand.hbm [shape: f32[2,2,32], index: 20, kind: output, shape index: {1}]
  %s21 = inlined_call_operand.hbm [shape: f32[1,1], index: 21, kind: output, shape index: {2}]
  %22 = xla_tuple %s19, %s20, %s21
  %s23 = sld [smem:[#allocation0]]
  $region102: #{_lambda_.1} parent=0
    _
  %s25 = ssub.s32 1, %s23
  %s26 = scalar_select 0, %s25, %s23
  $region1: #{_lambda_.1} parent=0
    #allocation3 [shape = 'u8[8192]{0}', space=vmem, size = 0x2000, scoped, tag = 'output window, operand 0, single buffered']
    #allocation4 [shape = 's32[1]{0}', space=sflag, size = 0x4, scoped, tag = 'scoped memory for _lambda_.1']
    #allocation5 [shape = 'u8[2048]{0}', space=vmem, size = 0x800, scoped, tag = 'output window, operand 1, single buffered']
    #allocation6 [shape = 's32[1]{0}', space=sflag, size = 0x4, scoped, tag = 'scoped memory for _lambda_.1']
    #allocation7 [shape = 'u8[512]{0}', space=vmem, size = 0x400, scoped, tag = 'output window, operand 2, single buffered']
    %27 = vsyncpa [#allocation4], 0
    %28 = vsyncpa [#allocation6], 0
    // Predicated region
    $region2: #{_lambda_.1} parent=1 // pred_check
      _
    $region3: #{_lambda_.1} parent=1 // pred_check_branch
      %30 = sbr.rel (0) target = $region5
    $region4: #{_lambda_.1} parent=1 // pred_region
      _
    $region5: #{_lambda_.1} parent=1 // pred_fallthru
      _
    // Predicated region
    $region6: #{_lambda_.1} parent=1 // pred_check
      _
    $region7: #{_lambda_.1} parent=1 // pred_check_branch
      %32 = sbr.rel (0) target = $region9
    $region8: #{_lambda_.1} parent=1 // pred_region
      _
    $region9: #{_lambda_.1} parent=1 // pred_fallthru
      _
    // Predicated region
    $region10: #{_lambda_.1} parent=1 // pred_check
      _
    $region11: #{_lambda_.1} parent=1 // pred_check_branch
      %34 = sbr.rel (0) target = $region13
    $region12: #{_lambda_.1} parent=1 // pred_region
      _
    $region13: #{_lambda_.1} parent=1 // pred_fallthru
      _
    // Predicated region
    $region14: #{_lambda_.1} parent=1 // pred_check
      _
    $region15: #{_lambda_.1} parent=1 // pred_check_branch
      %36 = sbr.rel (0) target = $region17
    $region16: #{_lambda_.1} parent=1 // pred_region
      _
    $region17: #{_lambda_.1} parent=1 // pred_fallthru
      _
    // Predicated region
    $region18: #{_lambda_.1} parent=1 // pred_check
      _
    $region19: #{_lambda_.1} parent=1 // pred_check_branch
      %38 = sbr.rel (0) target = $region21
    $region20: #{_lambda_.1} parent=1 // pred_region
      _
    $region21: #{_lambda_.1} parent=1 // pred_fallthru
      _
    // Predicated region
    $region22: #{_lambda_.1} parent=1 // pred_check
      _
    $region23: #{_lambda_.1} parent=1 // pred_check_branch
      %40 = sbr.rel (0) target = $region25
    $region24: #{_lambda_.1} parent=1 // pred_region
      _
    $region25: #{_lambda_.1} parent=1 // pred_fallthru
      _
    // Predicated region
    $region26: #{_lambda_.1} parent=1 // pred_check
      _
    $region27: #{_lambda_.1} parent=1 // pred_check_branch
      %42 = sbr.rel (0) target = $region29
    $region28: #{_lambda_.1} parent=1 // pred_region
      _
    $region29: #{_lambda_.1} parent=1 // pred_fallthru
      _
    // Predicated region
    $region30: #{_lambda_.1} parent=1 // pred_check
      _
    $region31: #{_lambda_.1} parent=1 // pred_check_branch
      %44 = sbr.rel (0) target = $region33
    $region32: #{_lambda_.1} parent=1 // pred_region
      _
    $region33: #{_lambda_.1} parent=1 // pred_fallthru
      _
    // Predicated region
    $region34: #{_lambda_.1} parent=1 // pred_check
      _
    $region35: #{_lambda_.1} parent=1 // pred_check_branch
      %46 = sbr.rel (0) target = $region37
    $region36: #{_lambda_.1} parent=1 // pred_region
      _
    $region37: #{_lambda_.1} parent=1 // pred_fallthru
      _
    // Predicated region
    $region38: #{_lambda_.1} parent=1 // pred_check
      _
    $region39: #{_lambda_.1} parent=1 // pred_check_branch
      %48 = sbr.rel (0) target = $region41
    $region40: #{_lambda_.1} parent=1 // pred_region
      _
    $region41: #{_lambda_.1} parent=1 // pred_fallthru
      _
    // Predicated region
    $region42: #{_lambda_.1} parent=1 // pred_check
      _
    $region43: #{_lambda_.1} parent=1 // pred_check_branch
      %50 = sbr.rel (0) target = $region45
    $region44: #{_lambda_.1} parent=1 // pred_region
      _
    $region45: #{_lambda_.1} parent=1 // pred_fallthru
      _
    // Predicated region
    $region46: #{_lambda_.1} parent=1 // pred_check
      _
    $region47: #{_lambda_.1} parent=1 // pred_check_branch
      %52 = sbr.rel (0) target = $region49
    $region48: #{_lambda_.1} parent=1 // pred_region
      _
    $region49: #{_lambda_.1} parent=1 // pred_fallthru
      _
    // Predicated region
    $region50: #{_lambda_.1} parent=1 // pred_check
      _
    $region51: #{_lambda_.1} parent=1 // pred_check_branch
      %54 = sbr.rel (0) target = $region53
    $region52: #{_lambda_.1} parent=1 // pred_region
      _
    $region53: #{_lambda_.1} parent=1 // pred_fallthru
      _
    // Predicated region
    $region54: #{_lambda_.1} parent=1 // pred_check
      _
    $region55: #{_lambda_.1} parent=1 // pred_check_branch
      %56 = sbr.rel (0) target = $region57
    $region56: #{_lambda_.1} parent=1 // pred_region
      _
    $region57: #{_lambda_.1} parent=1 // pred_fallthru
      _
    // Predicated region
    $region58: #{_lambda_.1} parent=1 // pred_check
      _
    $region59: #{_lambda_.1} parent=1 // pred_check_branch
      %58 = sbr.rel (0) target = $region61
    $region60: #{_lambda_.1} parent=1 // pred_region
      _
    $region61: #{_lambda_.1} parent=1 // pred_fallthru
      _
    // Predicated region
    $region62: #{_lambda_.1} parent=1 // pred_check
      _
    $region63: #{_lambda_.1} parent=1 // pred_check_branch
      %60 = sbr.rel (0) target = $region65
    $region64: #{_lambda_.1} parent=1 // pred_region
      _
    $region65: #{_lambda_.1} parent=1 // pred_fallthru
      _
    // Predicated region
    $region66: #{_lambda_.1} parent=1 // pred_check
      _
    $region67: #{_lambda_.1} parent=1 // pred_check_branch
      %62 = sbr.rel (0) target = $region69
    $region68: #{_lambda_.1} parent=1 // pred_region
      _
    $region69: #{_lambda_.1} parent=1 // pred_fallthru
      _
    // Predicated region
    $region70: #{_lambda_.1} parent=1 // pred_check
      _
    $region71: #{_lambda_.1} parent=1 // pred_check_branch
      %64 = sbr.rel (0) target = $region73
    $region72: #{_lambda_.1} parent=1 // pred_region
      _
    $region73: #{_lambda_.1} parent=1 // pred_fallthru
      _
    // Predicated region
    $region74: #{_lambda_.1} parent=1 // pred_check
      _
    $region75: #{_lambda_.1} parent=1 // pred_check_branch
      %66 = sbr.rel (0) target = $region77
    $region76: #{_lambda_.1} parent=1 // pred_region
      _
    $region77: #{_lambda_.1} parent=1 // pred_fallthru
      _
    %v68 = vld [vmem:[%s2] sm:$0xff]
    %v69 = vld [vmem:[%s2 + $0x8] sm:$0xff]
    %v70 = vld [vmem:[%s2 + $0x10] sm:$0xff]
    %v71 = vld [vmem:[%s2 + $0x18] sm:$0xff]
    %v72 = vld [vmem:[%s2 + $0x20] sm:$0xff]
    %v73 = vld [vmem:[%s2 + $0x28] sm:$0xff]
    %v74 = vld [vmem:[%s2 + $0x30] sm:$0xff]
    %v75 = vld [vmem:[%s2 + $0x38] sm:$0xff]
    %v76 = vld [vmem:[%s3] sm:$0x1]
    %v77 = vld [vmem:[%s0] sm:$0x3]
    %v78 = vld [vmem:[%s0 + $0x8] sm:$0x3]
    %v87 = vunpack.c.l.b16 %v68
    %v88 = vunpack.c.h.b16 %v68
    %v89 = vunpack.c.l.b16 %v69
    %v90 = vunpack.c.h.b16 %v69
    %v91 = vunpack.c.l.b16 %v70
    %v92 = vunpack.c.h.b16 %v70
    %v93 = vunpack.c.l.b16 %v71
    %v94 = vunpack.c.h.b16 %v71
    %v95 = vunpack.c.l.b16 %v72
    %v96 = vunpack.c.h.b16 %v72
    %v97 = vunpack.c.l.b16 %v73
    %v98 = vunpack.c.h.b16 %v73
    %v99 = vunpack.c.l.b16 %v74
    %v100 = vunpack.c.h.b16 %v74
    %v101 = vunpack.c.l.b16 %v75
    %v102 = vunpack.c.h.b16 %v75
    %v103 = vpack.c.b16 %v89, %v87
    %v104 = vpack.c.b16 %v90, %v88
    %v105 = vpack.c.b16 %v93, %v91
    %v106 = vpack.c.b16 %v94, %v92
    %v107 = vpack.c.b16 %v97, %v95
    %v108 = vpack.c.b16 %v98, %v96
    %v109 = vpack.c.b16 %v101, %v99
    %v110 = vpack.c.b16 %v102, %v100
    %vm119 = vcmask 523264
    %v121 = vsel %vm119, 0, 0
    %123 = vmatpush.bf16.msra.mxu0 0
    %124 = vmatpush.bf16.msra.mxu0 0
    %125 = vmatpush.bf16.msra.mxu0 0
    %126 = vmatpush.bf16.msra.mxu0 0
    %127 = vmatpush.bf16.msra.mxu0 %v109
    %128 = vmatpush.bf16.msra.mxu0 %v107
    %129 = vmatpush.bf16.msra.mxu0 %v105
    %130 = vmatpush.bf16.msra.mxu0 %v103
    %131 = vmatmul.bf16.gmra.mxu0 %v121
    %v132 = vpop.f32.mrf.mxu0
    %v133 = vadd.f32 0.0, %v132
    %v134 = vpop.f32.mrf.mxu0
    %135 = vdwg.mxu0
    %136 = vmatpush.bf16.msra.mxu0 0
    %137 = vmatpush.bf16.msra.mxu0 0
    %138 = vmatpush.bf16.msra.mxu0 0
    %139 = vmatpush.bf16.msra.mxu0 0
    %140 = vmatpush.bf16.msra.mxu0 %v110
    %141 = vmatpush.bf16.msra.mxu0 %v108
    %142 = vmatpush.bf16.msra.mxu0 %v106
    %143 = vmatpush.bf16.msra.mxu0 %v104
    %144 = vmatmul.bf16.gmra.mxu0 %v121
    %v145 = vpop.f32.mrf.mxu0
    %v146 = vadd.f32 0.0, %v145
    %v147 = vpop.f32.mrf.mxu0
    %148 = vdwg.mxu0
    %v149 = vadd.f32 %v77, %v133
    %v150 = vxor.u32 %v149, 2147483648
    %v151 = vmul.f32 %v150, 1.442695
    %v152 = vpow.pop %v151
    %v153 = vadd.f32 %v152, 1.0
    %v154 = vrcp.pop %v153
    %v155 = vmul.f32 %v153, %v154
    %v156 = vsub.f32 1.0, %v155
    %v157 = vmul.f32 %v154, %v156
    %v158 = vadd.f32 %v154, %v157
    %vm159 = vweird.f32 %v153
    %vm160 = vweird.f32 %v154
    %vm161 = vmor %vm159, %vm160
    %v162 = vsel %vm161, %v154, %v158
    %v163 = vand.u32 2147483647, %v153
    %vm164 = vcmp.eq.f32.partialorder %v163, 8.507059e+37
    %v165 = vand.u32 %v153, 2147483648
    %v166 = vor.u32 1.1754944e-38, %v165
    %v167 = vsel %vm164, %v166, %v162
    %v168 = vmul.f32 1.0, %v167
    %v170 = vperm.slane %v76, 0
    %v172 = vadd.f32 %v146, %v170
    %v173 = vmul.f32 %v168, %v172
    %v174 = vadd.f32 %v78, %v173
    %v175 = vtanh.pop %v174
    %v176 = vsub.f32 1.0, %v168
    %178 = vrot.lane.b32.xlu0 %v175, 64
    %v179 = vpop.permute.xlu0 %178
    %v181 = vmul.f32 %v176, %v179
    %v182 = vmul.f32 %v168, 0.0
    %v183 = vadd.f32 %v181, %v182
    %v184 = vld [vmem:[%s0] sm:$0xc]
    %v185 = vld [vmem:[%s0 + $0x8] sm:$0xc]
    %v186 = vpack.c.bf16 %v183, %v183
    %188 = vrot.lane.b32.xlu0 %v186, 64
    %v189 = vpop.permute.xlu0 %188
    %v191 = vsel %vm119, %v189, 0
    %193 = vmatpush.bf16.msra.mxu0 0
    %194 = vmatpush.bf16.msra.mxu0 0
    %195 = vmatpush.bf16.msra.mxu0 0
    %196 = vmatpush.bf16.msra.mxu0 0
    %197 = vmatpush.bf16.msra.mxu0 %v109
    %198 = vmatpush.bf16.msra.mxu0 %v107
    %199 = vmatpush.bf16.msra.mxu0 %v105
    %200 = vmatpush.bf16.msra.mxu0 %v103
    %201 = vmatmul.bf16.gmra.mxu0 %v191
    %v202 = vpop.f32.mrf.mxu0
    %v203 = vadd.f32 0.0, %v202
    %v204 = vpop.f32.mrf.mxu0
    %205 = vdwg.mxu0
    %206 = vmatpush.bf16.msra.mxu0 0
    %207 = vmatpush.bf16.msra.mxu0 0
    %208 = vmatpush.bf16.msra.mxu0 0
    %209 = vmatpush.bf16.msra.mxu0 0
    %210 = vmatpush.bf16.msra.mxu0 %v110
    %211 = vmatpush.bf16.msra.mxu0 %v108
    %212 = vmatpush.bf16.msra.mxu0 %v106
    %213 = vmatpush.bf16.msra.mxu0 %v104
    %214 = vmatmul.bf16.gmra.mxu0 %v191
    %v215 = vpop.f32.mrf.mxu0
    %v216 = vadd.f32 0.0, %v215
    %v217 = vpop.f32.mrf.mxu0
    %218 = vdwg.mxu0
    %v220 = vrot.slane %v203, 6
    %v222 = vadd.f32 %v184, %v220
    %v223 = vxor.u32 %v222, 2147483648
    %v224 = vmul.f32 %v223, 1.442695
    %v225 = vpow.pop %v224
    %v226 = vadd.f32 %v225, 1.0
    %v227 = vrcp.pop %v226
    %v228 = vmul.f32 %v226, %v227
    %v229 = vsub.f32 1.0, %v228
    %v230 = vmul.f32 %v227, %v229
    %v231 = vadd.f32 %v227, %v230
    %vm232 = vweird.f32 %v226
    %vm233 = vweird.f32 %v227
    %vm234 = vmor %vm232, %vm233
    %v235 = vsel %vm234, %v227, %v231
    %v236 = vand.u32 2147483647, %v226
    %vm237 = vcmp.eq.f32.partialorder %v236, 8.507059e+37
    %v238 = vand.u32 %v226, 2147483648
    %v239 = vor.u32 1.1754944e-38, %v238
    %v240 = vsel %vm237, %v239, %v235
    %v241 = vmul.f32 1.0, %v240
    %v242 = vadd.f32 %v216, %v170
    %v244 = vrot.slane %v242, 6
    %v246 = vmul.f32 %v241, %v244
    %v247 = vadd.f32 %v185, %v246
    %v248 = vtanh.pop %v247
    %v249 = vsub.f32 1.0, %v241
    %251 = vrot.lane.b32.xlu0 %v248, 64
    %v252 = vpop.permute.xlu0 %251
    %v254 = vmul.f32 %v249, %v252
    %v256 = vrot.slane %v183, 6
    %v258 = vmul.f32 %v241, %v256
    %v259 = vadd.f32 %v254, %v258
    %v260 = vld [vmem:[%s0] sm:$0x30]
    %v261 = vld [vmem:[%s0 + $0x8] sm:$0x30]
    %v262 = vpack.c.bf16 %v259, %v259
    %v264 = vrot.slane %v262, 1
    %265 = vrot.lane.b32.xlu0 %v264, 64
    %v266 = vpop.permute.xlu0 %265
    %v268 = vsel %vm119, %v266, 0
    %270 = vmatpush.bf16.msra.mxu0 0
    %271 = vmatpush.bf16.msra.mxu0 0
    %272 = vmatpush.bf16.msra.mxu0 0
    %273 = vmatpush.bf16.msra.mxu0 0
    %274 = vmatpush.bf16.msra.mxu0 %v109
    %275 = vmatpush.bf16.msra.mxu0 %v107
    %276 = vmatpush.bf16.msra.mxu0 %v105
    %277 = vmatpush.bf16.msra.mxu0 %v103
    %278 = vmatmul.bf16.gmra.mxu0 %v268
    %v279 = vpop.f32.mrf.mxu0
    %v280 = vadd.f32 0.0, %v279
    %v281 = vpop.f32.mrf.mxu0
    %282 = vdwg.mxu0
    %283 = vmatpush.bf16.msra.mxu0 0
    %284 = vmatpush.bf16.msra.mxu0 0
    %285 = vmatpush.bf16.msra.mxu0 0
    %286 = vmatpush.bf16.msra.mxu0 0
    %287 = vmatpush.bf16.msra.mxu0 %v110
    %288 = vmatpush.bf16.msra.mxu0 %v108
    %289 = vmatpush.bf16.msra.mxu0 %v106
    %290 = vmatpush.bf16.msra.mxu0 %v104
    %291 = vmatmul.bf16.gmra.mxu0 %v268
    %v292 = vpop.f32.mrf.mxu0
    %v293 = vadd.f32 0.0, %v292
    %v294 = vpop.f32.mrf.mxu0
    %295 = vdwg.mxu0
    %v297 = vrot.slane %v280, 4
    %v299 = vadd.f32 %v260, %v297
    %v300 = vxor.u32 %v299, 2147483648
    %v301 = vmul.f32 %v300, 1.442695
    %v302 = vpow.pop %v301
    %v303 = vadd.f32 %v302, 1.0
    %v304 = vrcp.pop %v303
    %v305 = vmul.f32 %v303, %v304
    %v306 = vsub.f32 1.0, %v305
    %v307 = vmul.f32 %v304, %v306
    %v308 = vadd.f32 %v304, %v307
    %vm309 = vweird.f32 %v303
    %vm310 = vweird.f32 %v304
    %vm311 = vmor %vm309, %vm310
    %v312 = vsel %vm311, %v304, %v308
    %v313 = vand.u32 2147483647, %v303
    %vm314 = vcmp.eq.f32.partialorder %v313, 8.507059e+37
    %v315 = vand.u32 %v303, 2147483648
    %v316 = vor.u32 1.1754944e-38, %v315
    %v317 = vsel %vm314, %v316, %v312
    %v318 = vmul.f32 1.0, %v317
    %v319 = vadd.f32 %v293, %v170
    %v321 = vrot.slane %v319, 4
    %v323 = vmul.f32 %v318, %v321
    %v324 = vadd.f32 %v261, %v323
    %v325 = vtanh.pop %v324
    %v326 = vsub.f32 1.0, %v318
    %328 = vrot.lane.b32.xlu0 %v325, 64
    %v329 = vpop.permute.xlu0 %328
    %v331 = vmul.f32 %v326, %v329
    %v333 = vrot.slane %v259, 6
    %v335 = vmul.f32 %v318, %v333
    %v336 = vadd.f32 %v331, %v335
    %v337 = vld [vmem:[%s0] sm:$0xc0]
    %v338 = vld [vmem:[%s0 + $0x8] sm:$0xc0]
    %v339 = vpack.c.bf16 %v336, %v336
    %v341 = vrot.slane %v339, 2
    %342 = vrot.lane.b32.xlu0 %v341, 64
    %v343 = vpop.permute.xlu0 %342
    %v345 = vsel %vm119, %v343, 0
    %347 = vmatpush.bf16.msra.mxu0 0
    %348 = vmatpush.bf16.msra.mxu0 0
    %349 = vmatpush.bf16.msra.mxu0 0
    %350 = vmatpush.bf16.msra.mxu0 0
    %351 = vmatpush.bf16.msra.mxu0 %v109
    %352 = vmatpush.bf16.msra.mxu0 %v107
    %353 = vmatpush.bf16.msra.mxu0 %v105
    %354 = vmatpush.bf16.msra.mxu0 %v103
    %355 = vmatmul.bf16.gmra.mxu0 %v345
    %v356 = vpop.f32.mrf.mxu0
    %v357 = vadd.f32 0.0, %v356
    %v358 = vpop.f32.mrf.mxu0
    %359 = vdwg.mxu0
    %360 = vmatpush.bf16.msra.mxu0 0
    %361 = vmatpush.bf16.msra.mxu0 0
    %362 = vmatpush.bf16.msra.mxu0 0
    %363 = vmatpush.bf16.msra.mxu0 0
    %364 = vmatpush.bf16.msra.mxu0 %v110
    %365 = vmatpush.bf16.msra.mxu0 %v108
    %366 = vmatpush.bf16.msra.mxu0 %v106
    %367 = vmatpush.bf16.msra.mxu0 %v104
    %368 = vmatmul.bf16.gmra.mxu0 %v345
    %v369 = vpop.f32.mrf.mxu0
    %v370 = vadd.f32 0.0, %v369
    %v371 = vpop.f32.mrf.mxu0
    %372 = vdwg.mxu0
    %v374 = vrot.slane %v357, 2
    %v376 = vadd.f32 %v337, %v374
    %v377 = vxor.u32 %v376, 2147483648
    %v378 = vmul.f32 %v377, 1.442695
    %v379 = vpow.pop %v378
    %v380 = vadd.f32 %v379, 1.0
    %v381 = vrcp.pop %v380
    %v382 = vmul.f32 %v380, %v381
    %v383 = vsub.f32 1.0, %v382
    %v384 = vmul.f32 %v381, %v383
    %v385 = vadd.f32 %v381, %v384
    %vm386 = vweird.f32 %v380
    %vm387 = vweird.f32 %v381
    %vm388 = vmor %vm386, %vm387
    %v389 = vsel %vm388, %v381, %v385
    %v390 = vand.u32 2147483647, %v380
    %vm391 = vcmp.eq.f32.partialorder %v390, 8.507059e+37
    %v392 = vand.u32 %v380, 2147483648
    %v393 = vor.u32 1.1754944e-38, %v392
    %v394 = vsel %vm391, %v393, %v389
    %v395 = vmul.f32 1.0, %v394
    %v396 = vadd.f32 %v370, %v170
    %v398 = vrot.slane %v396, 2
    %v400 = vmul.f32 %v395, %v398
    %v401 = vadd.f32 %v338, %v400
    %v402 = vtanh.pop %v401
    %v403 = vsub.f32 1.0, %v395
    %405 = vrot.lane.b32.xlu0 %v402, 64
    %v406 = vpop.permute.xlu0 %405
    %v408 = vmul.f32 %v403, %v406
    %v410 = vrot.slane %v336, 6
    %v412 = vmul.f32 %v395, %v410
    %v413 = vadd.f32 %v408, %v412
    %v414 = vld [vmem:[%s0 + $0x10] sm:$0x3]
    %v415 = vld [vmem:[%s0 + $0x18] sm:$0x3]
    %v416 = vpack.c.bf16 %v413, %v413
    %v418 = vrot.slane %v416, 3
    %419 = vrot.lane.b32.xlu0 %v418, 64
    %v420 = vpop.permute.xlu0 %419
    %v422 = vsel %vm119, %v420, 0
    %424 = vmatpush.bf16.msra.mxu0 0
    %425 = vmatpush.bf16.msra.mxu0 0
    %426 = vmatpush.bf16.msra.mxu0 0
    %427 = vmatpush.bf16.msra.mxu0 0
    %428 = vmatpush.bf16.msra.mxu0 %v109
    %429 = vmatpush.bf16.msra.mxu0 %v107
    %430 = vmatpush.bf16.msra.mxu0 %v105
    %431 = vmatpush.bf16.msra.mxu0 %v103
    %432 = vmatmul.bf16.gmra.mxu0 %v422
    %v433 = vpop.f32.mrf.mxu0
    %v434 = vadd.f32 0.0, %v433
    %v435 = vpop.f32.mrf.mxu0
    %436 = vdwg.mxu0
    %437 = vmatpush.bf16.msra.mxu0 0
    %438 = vmatpush.bf16.msra.mxu0 0
    %439 = vmatpush.bf16.msra.mxu0 0
    %440 = vmatpush.bf16.msra.mxu0 0
    %441 = vmatpush.bf16.msra.mxu0 %v110
    %442 = vmatpush.bf16.msra.mxu0 %v108
    %443 = vmatpush.bf16.msra.mxu0 %v106
    %444 = vmatpush.bf16.msra.mxu0 %v104
    %445 = vmatmul.bf16.gmra.mxu0 %v422
    %v446 = vpop.f32.mrf.mxu0
    %v447 = vadd.f32 0.0, %v446
    %v448 = vpop.f32.mrf.mxu0
    %449 = vdwg.mxu0
    %v450 = vadd.f32 %v414, %v434
    %v451 = vxor.u32 %v450, 2147483648
    %v452 = vmul.f32 %v451, 1.442695
    %v453 = vpow.pop %v452
    %v454 = vadd.f32 %v453, 1.0
    %v455 = vrcp.pop %v454
    %v456 = vmul.f32 %v454, %v455
    %v457 = vsub.f32 1.0, %v456
    %v458 = vmul.f32 %v455, %v457
    %v459 = vadd.f32 %v455, %v458
    %vm460 = vweird.f32 %v454
    %vm461 = vweird.f32 %v455
    %vm462 = vmor %vm460, %vm461
    %v463 = vsel %vm462, %v455, %v459
    %v464 = vand.u32 2147483647, %v454
    %vm465 = vcmp.eq.f32.partialorder %v464, 8.507059e+37
    %v466 = vand.u32 %v454, 2147483648
    %v467 = vor.u32 1.1754944e-38, %v466
    %v468 = vsel %vm465, %v467, %v463
    %v469 = vmul.f32 1.0, %v468
    %v470 = vadd.f32 %v447, %v170
    %v471 = vmul.f32 %v469, %v470
    %v472 = vadd.f32 %v415, %v471
    %v473 = vtanh.pop %v472
    %v474 = vsub.f32 1.0, %v469
    %476 = vrot.lane.b32.xlu0 %v473, 64
    %v477 = vpop.permute.xlu0 %476
    %v479 = vmul.f32 %v474, %v477
    %v481 = vrot.slane %v413, 6
    %v483 = vmul.f32 %v469, %v481
    %v484 = vadd.f32 %v479, %v483
    %v485 = vld [vmem:[%s0 + $0x10] sm:$0xc]
    %v486 = vld [vmem:[%s0 + $0x18] sm:$0xc]
    %v487 = vpack.c.bf16 %v484, %v484
    %489 = vrot.lane.b32.xlu0 %v487, 64
    %v490 = vpop.permute.xlu0 %489
    %v492 = vsel %vm119, %v490, 0
    %494 = vmatpush.bf16.msra.mxu0 0
    %495 = vmatpush.bf16.msra.mxu0 0
    %496 = vmatpush.bf16.msra.mxu0 0
    %497 = vmatpush.bf16.msra.mxu0 0
    %498 = vmatpush.bf16.msra.mxu0 %v109
    %499 = vmatpush.bf16.msra.mxu0 %v107
    %500 = vmatpush.bf16.msra.mxu0 %v105
    %501 = vmatpush.bf16.msra.mxu0 %v103
    %502 = vmatmul.bf16.gmra.mxu0 %v492
    %v503 = vpop.f32.mrf.mxu0
    %v504 = vadd.f32 0.0, %v503
    %v505 = vpop.f32.mrf.mxu0
    %506 = vdwg.mxu0
    %507 = vmatpush.bf16.msra.mxu0 0
    %508 = vmatpush.bf16.msra.mxu0 0
    %509 = vmatpush.bf16.msra.mxu0 0
    %510 = vmatpush.bf16.msra.mxu0 0
    %511 = vmatpush.bf16.msra.mxu0 %v110
    %512 = vmatpush.bf16.msra.mxu0 %v108
    %513 = vmatpush.bf16.msra.mxu0 %v106
    %514 = vmatpush.bf16.msra.mxu0 %v104
    %515 = vmatmul.bf16.gmra.mxu0 %v492
    %v516 = vpop.f32.mrf.mxu0
    %v517 = vadd.f32 0.0, %v516
    %v518 = vpop.f32.mrf.mxu0
    %519 = vdwg.mxu0
    %v521 = vrot.slane %v504, 6
    %v523 = vadd.f32 %v485, %v521
    %v524 = vxor.u32 %v523, 2147483648
    %v525 = vmul.f32 %v524, 1.442695
    %v526 = vpow.pop %v525
    %v527 = vadd.f32 %v526, 1.0
    %v528 = vrcp.pop %v527
    %v529 = vmul.f32 %v527, %v528
    %v530 = vsub.f32 1.0, %v529
    %v531 = vmul.f32 %v528, %v530
    %v532 = vadd.f32 %v528, %v531
    %vm533 = vweird.f32 %v527
    %vm534 = vweird.f32 %v528
    %vm535 = vmor %vm533, %vm534
    %v536 = vsel %vm535, %v528, %v532
    %v537 = vand.u32 2147483647, %v527
    %vm538 = vcmp.eq.f32.partialorder %v537, 8.507059e+37
    %v539 = vand.u32 %v527, 2147483648
    %v540 = vor.u32 1.1754944e-38, %v539
    %v541 = vsel %vm538, %v540, %v536
    %v542 = vmul.f32 1.0, %v541
    %v543 = vadd.f32 %v517, %v170
    %v545 = vrot.slane %v543, 6
    %v547 = vmul.f32 %v542, %v545
    %v548 = vadd.f32 %v486, %v547
    %v549 = vtanh.pop %v548
    %v550 = vsub.f32 1.0, %v542
    %552 = vrot.lane.b32.xlu0 %v549, 64
    %v553 = vpop.permute.xlu0 %552
    %v555 = vmul.f32 %v550, %v553
    %v557 = vrot.slane %v484, 6
    %v559 = vmul.f32 %v542, %v557
    %v560 = vadd.f32 %v555, %v559
    %v561 = vld [vmem:[%s0 + $0x10] sm:$0x30]
    %v562 = vld [vmem:[%s0 + $0x18] sm:$0x30]
    %v563 = vpack.c.bf16 %v560, %v560
    %v565 = vrot.slane %v563, 1
    %566 = vrot.lane.b32.xlu0 %v565, 64
    %v567 = vpop.permute.xlu0 %566
    %v569 = vsel %vm119, %v567, 0
    %571 = vmatpush.bf16.msra.mxu0 0
    %572 = vmatpush.bf16.msra.mxu0 0
    %573 = vmatpush.bf16.msra.mxu0 0
    %574 = vmatpush.bf16.msra.mxu0 0
    %575 = vmatpush.bf16.msra.mxu0 %v109
    %576 = vmatpush.bf16.msra.mxu0 %v107
    %577 = vmatpush.bf16.msra.mxu0 %v105
    %578 = vmatpush.bf16.msra.mxu0 %v103
    %579 = vmatmul.bf16.gmra.mxu0 %v569
    %v580 = vpop.f32.mrf.mxu0
    %v581 = vadd.f32 0.0, %v580
    %v582 = vpop.f32.mrf.mxu0
    %583 = vdwg.mxu0
    %584 = vmatpush.bf16.msra.mxu0 0
    %585 = vmatpush.bf16.msra.mxu0 0
    %586 = vmatpush.bf16.msra.mxu0 0
    %587 = vmatpush.bf16.msra.mxu0 0
    %588 = vmatpush.bf16.msra.mxu0 %v110
    %589 = vmatpush.bf16.msra.mxu0 %v108
    %590 = vmatpush.bf16.msra.mxu0 %v106
    %591 = vmatpush.bf16.msra.mxu0 %v104
    %592 = vmatmul.bf16.gmra.mxu0 %v569
    %v593 = vpop.f32.mrf.mxu0
    %v594 = vadd.f32 0.0, %v593
    %v595 = vpop.f32.mrf.mxu0
    %596 = vdwg.mxu0
    %v598 = vrot.slane %v581, 4
    %v600 = vadd.f32 %v561, %v598
    %v601 = vxor.u32 %v600, 2147483648
    %v602 = vmul.f32 %v601, 1.442695
    %v603 = vpow.pop %v602
    %v604 = vadd.f32 %v603, 1.0
    %v605 = vrcp.pop %v604
    %v606 = vmul.f32 %v604, %v605
    %v607 = vsub.f32 1.0, %v606
    %v608 = vmul.f32 %v605, %v607
    %v609 = vadd.f32 %v605, %v608
    %vm610 = vweird.f32 %v604
    %vm611 = vweird.f32 %v605
    %vm612 = vmor %vm610, %vm611
    %v613 = vsel %vm612, %v605, %v609
    %v614 = vand.u32 2147483647, %v604
    %vm615 = vcmp.eq.f32.partialorder %v614, 8.507059e+37
    %v616 = vand.u32 %v604, 2147483648
    %v617 = vor.u32 1.1754944e-38, %v616
    %v618 = vsel %vm615, %v617, %v613
    %v619 = vmul.f32 1.0, %v618
    %v620 = vadd.f32 %v594, %v170
    %v622 = vrot.slane %v620, 4
    %v624 = vmul.f32 %v619, %v622
    %v625 = vadd.f32 %v562, %v624
    %v626 = vtanh.pop %v625
    %v627 = vsub.f32 1.0, %v619
    %629 = vrot.lane.b32.xlu0 %v626, 64
    %v630 = vpop.permute.xlu0 %629
    %v632 = vmul.f32 %v627, %v630
    %v634 = vrot.slane %v560, 6
    %v636 = vmul.f32 %v619, %v634
    %v637 = vadd.f32 %v632, %v636
    %v638 = vld [vmem:[%s0 + $0x10] sm:$0xc0]
    %v639 = vld [vmem:[%s0 + $0x18] sm:$0xc0]
    %v640 = vpack.c.bf16 %v637, %v637
    %v642 = vrot.slane %v640, 2
    %643 = vrot.lane.b32.xlu0 %v642, 64
    %v644 = vpop.permute.xlu0 %643
    %v646 = vsel %vm119, %v644, 0
    %648 = vmatpush.bf16.msra.mxu0 0
    %649 = vmatpush.bf16.msra.mxu0 0
    %650 = vmatpush.bf16.msra.mxu0 0
    %651 = vmatpush.bf16.msra.mxu0 0
    %652 = vmatpush.bf16.msra.mxu0 %v109
    %653 = vmatpush.bf16.msra.mxu0 %v107
    %654 = vmatpush.bf16.msra.mxu0 %v105
    %655 = vmatpush.bf16.msra.mxu0 %v103
    %656 = vmatmul.bf16.gmra.mxu0 %v646
    %v657 = vpop.f32.mrf.mxu0
    %v658 = vadd.f32 0.0, %v657
    %v659 = vpop.f32.mrf.mxu0
    %660 = vdwg.mxu0
    %661 = vmatpush.bf16.msra.mxu0 0
    %662 = vmatpush.bf16.msra.mxu0 0
    %663 = vmatpush.bf16.msra.mxu0 0
    %664 = vmatpush.bf16.msra.mxu0 0
    %665 = vmatpush.bf16.msra.mxu0 %v110
    %666 = vmatpush.bf16.msra.mxu0 %v108
    %667 = vmatpush.bf16.msra.mxu0 %v106
    %668 = vmatpush.bf16.msra.mxu0 %v104
    %669 = vmatmul.bf16.gmra.mxu0 %v646
    %v670 = vpop.f32.mrf.mxu0
    %v671 = vadd.f32 0.0, %v670
    %v672 = vpop.f32.mrf.mxu0
    %673 = vdwg.mxu0
    %v675 = vrot.slane %v658, 2
    %v677 = vadd.f32 %v638, %v675
    %v678 = vxor.u32 %v677, 2147483648
    %v679 = vmul.f32 %v678, 1.442695
    %v680 = vpow.pop %v679
    %v681 = vadd.f32 %v680, 1.0
    %v682 = vrcp.pop %v681
    %v683 = vmul.f32 %v681, %v682
    %v684 = vsub.f32 1.0, %v683
    %v685 = vmul.f32 %v682, %v684
    %v686 = vadd.f32 %v682, %v685
    %vm687 = vweird.f32 %v681
    %vm688 = vweird.f32 %v682
    %vm689 = vmor %vm687, %vm688
    %v690 = vsel %vm689, %v682, %v686
    %v691 = vand.u32 2147483647, %v681
    %vm692 = vcmp.eq.f32.partialorder %v691, 8.507059e+37
    %v693 = vand.u32 %v681, 2147483648
    %v694 = vor.u32 1.1754944e-38, %v693
    %v695 = vsel %vm692, %v694, %v690
    %v696 = vmul.f32 1.0, %v695
    %v697 = vadd.f32 %v671, %v170
    %v699 = vrot.slane %v697, 2
    %v701 = vmul.f32 %v696, %v699
    %v702 = vadd.f32 %v639, %v701
    %v703 = vtanh.pop %v702
    %v704 = vsub.f32 1.0, %v696
    %706 = vrot.lane.b32.xlu0 %v703, 64
    %v707 = vpop.permute.xlu0 %706
    %v709 = vmul.f32 %v704, %v707
    %v711 = vrot.slane %v637, 6
    %v713 = vmul.f32 %v696, %v711
    %v714 = vadd.f32 %v709, %v713
    %v715 = vld [vmem:[%s4] sm:$0xff]
    %v716 = vld [vmem:[%s4 + $0x8] sm:$0xff]
    %v717 = vld [vmem:[%s4 + $0x10] sm:$0xff]
    %v718 = vld [vmem:[%s4 + $0x18] sm:$0xff]
    %v719 = vld [vmem:[%s4 + $0x20] sm:$0xff]
    %v720 = vld [vmem:[%s4 + $0x28] sm:$0xff]
    %v721 = vld [vmem:[%s4 + $0x30] sm:$0xff]
    %v722 = vld [vmem:[%s4 + $0x38] sm:$0xff]
    %v723 = vld [vmem:[%s5] sm:$0x1]
    %v724 = vld [vmem:[%s1] sm:$0x3]
    %v725 = vld [vmem:[%s1 + $0x8] sm:$0x3]
    %v726 = vpack.c.bf16 %v714, %v714
    %v728 = vrot.slane %v726, 3
    %729 = vrot.lane.b32.xlu0 %v728, 64
    %v730 = vpop.permute.xlu0 %729
    %v739 = vunpack.c.l.b16 %v715
    %v740 = vunpack.c.h.b16 %v715
    %v741 = vunpack.c.l.b16 %v716
    %v742 = vunpack.c.h.b16 %v716
    %v743 = vunpack.c.l.b16 %v717
    %v744 = vunpack.c.h.b16 %v717
    %v745 = vunpack.c.l.b16 %v718
    %v746 = vunpack.c.h.b16 %v718
    %v747 = vunpack.c.l.b16 %v719
    %v748 = vunpack.c.h.b16 %v719
    %v749 = vunpack.c.l.b16 %v720
    %v750 = vunpack.c.h.b16 %v720
    %v751 = vunpack.c.l.b16 %v721
    %v752 = vunpack.c.h.b16 %v721
    %v753 = vunpack.c.l.b16 %v722
    %v754 = vunpack.c.h.b16 %v722
    %v755 = vpack.c.b16 %v741, %v739
    %v756 = vpack.c.b16 %v742, %v740
    %v757 = vpack.c.b16 %v745, %v743
    %v758 = vpack.c.b16 %v746, %v744
    %v759 = vpack.c.b16 %v749, %v747
    %v760 = vpack.c.b16 %v750, %v748
    %v761 = vpack.c.b16 %v753, %v751
    %v762 = vpack.c.b16 %v754, %v752
    %v772 = vsel %vm119, %v730, 0
    %774 = vmatpush.bf16.msra.mxu0 0
    %775 = vmatpush.bf16.msra.mxu0 0
    %776 = vmatpush.bf16.msra.mxu0 0
    %777 = vmatpush.bf16.msra.mxu0 0
    %778 = vmatpush.bf16.msra.mxu0 %v761
    %779 = vmatpush.bf16.msra.mxu0 %v759
    %780 = vmatpush.bf16.msra.mxu0 %v757
    %781 = vmatpush.bf16.msra.mxu0 %v755
    %782 = vmatmul.bf16.gmra.mxu0 %v772
    %v783 = vpop.f32.mrf.mxu0
    %v784 = vadd.f32 0.0, %v783
    %v785 = vpop.f32.mrf.mxu0
    %786 = vdwg.mxu0
    %787 = vmatpush.bf16.msra.mxu0 0
    %788 = vmatpush.bf16.msra.mxu0 0
    %789 = vmatpush.bf16.msra.mxu0 0
    %790 = vmatpush.bf16.msra.mxu0 0
    %791 = vmatpush.bf16.msra.mxu0 %v762
    %792 = vmatpush.bf16.msra.mxu0 %v760
    %793 = vmatpush.bf16.msra.mxu0 %v758
    %794 = vmatpush.bf16.msra.mxu0 %v756
    %795 = vmatmul.bf16.gmra.mxu0 %v772
    %v796 = vpop.f32.mrf.mxu0
    %v797 = vadd.f32 0.0, %v796
    %v798 = vpop.f32.mrf.mxu0
    %799 = vdwg.mxu0
    %v800 = vadd.f32 %v724, %v784
    %v801 = vxor.u32 %v800, 2147483648
    %v802 = vmul.f32 %v801, 1.442695
    %v803 = vpow.pop %v802
    %v804 = vadd.f32 %v803, 1.0
    %v805 = vrcp.pop %v804
    %v806 = vmul.f32 %v804, %v805
    %v807 = vsub.f32 1.0, %v806
    %v808 = vmul.f32 %v805, %v807
    %v809 = vadd.f32 %v805, %v808
    %vm810 = vweird.f32 %v804
    %vm811 = vweird.f32 %v805
    %vm812 = vmor %vm810, %vm811
    %v813 = vsel %vm812, %v805, %v809
    %v814 = vand.u32 2147483647, %v804
    %vm815 = vcmp.eq.f32.partialorder %v814, 8.507059e+37
    %v816 = vand.u32 %v804, 2147483648
    %v817 = vor.u32 1.1754944e-38, %v816
    %v818 = vsel %vm815, %v817, %v813
    %v819 = vmul.f32 1.0, %v818
    %v821 = vperm.slane %v723, 0
    %v823 = vadd.f32 %v797, %v821
    %v824 = vmul.f32 %v819, %v823
    %v825 = vadd.f32 %v725, %v824
    %v826 = vtanh.pop %v825
    %v827 = vsub.f32 1.0, %v819
    %829 = vrot.lane.b32.xlu0 %v826, 64
    %v830 = vpop.permute.xlu0 %829
    %v832 = vmul.f32 %v827, %v830
    %v834 = vrot.slane %v714, 6
    %v836 = vmul.f32 %v819, %v834
    %v837 = vadd.f32 %v832, %v836
    %v838 = vld [vmem:[%s1] sm:$0xc]
    %v839 = vld [vmem:[%s1 + $0x8] sm:$0xc]
    %v840 = vpack.c.bf16 %v837, %v837
    %842 = vrot.lane.b32.xlu0 %v840, 64
    %v843 = vpop.permute.xlu0 %842
    %v845 = vsel %vm119, %v843, 0
    %847 = vmatpush.bf16.msra.mxu0 0
    %848 = vmatpush.bf16.msra.mxu0 0
    %849 = vmatpush.bf16.msra.mxu0 0
    %850 = vmatpush.bf16.msra.mxu0 0
    %851 = vmatpush.bf16.msra.mxu0 %v761
    %852 = vmatpush.bf16.msra.mxu0 %v759
    %853 = vmatpush.bf16.msra.mxu0 %v757
    %854 = vmatpush.bf16.msra.mxu0 %v755
    %855 = vmatmul.bf16.gmra.mxu0 %v845
    %v856 = vpop.f32.mrf.mxu0
    %v857 = vadd.f32 0.0, %v856
    %v858 = vpop.f32.mrf.mxu0
    %859 = vdwg.mxu0
    %860 = vmatpush.bf16.msra.mxu0 0
    %861 = vmatpush.bf16.msra.mxu0 0
    %862 = vmatpush.bf16.msra.mxu0 0
    %863 = vmatpush.bf16.msra.mxu0 0
    %864 = vmatpush.bf16.msra.mxu0 %v762
    %865 = vmatpush.bf16.msra.mxu0 %v760
    %866 = vmatpush.bf16.msra.mxu0 %v758
    %867 = vmatpush.bf16.msra.mxu0 %v756
    %868 = vmatmul.bf16.gmra.mxu0 %v845
    %v869 = vpop.f32.mrf.mxu0
    %v870 = vadd.f32 0.0, %v869
    %v871 = vpop.f32.mrf.mxu0
    %872 = vdwg.mxu0
    %v874 = vrot.slane %v857, 6
    %v876 = vadd.f32 %v838, %v874
    %v877 = vxor.u32 %v876, 2147483648
    %v878 = vmul.f32 %v877, 1.442695
    %v879 = vpow.pop %v878
    %v880 = vadd.f32 %v879, 1.0
    %v881 = vrcp.pop %v880
    %v882 = vmul.f32 %v880, %v881
    %v883 = vsub.f32 1.0, %v882
    %v884 = vmul.f32 %v881, %v883
    %v885 = vadd.f32 %v881, %v884
    %vm886 = vweird.f32 %v880
    %vm887 = vweird.f32 %v881
    %vm888 = vmor %vm886, %vm887
    %v889 = vsel %vm888, %v881, %v885
    %v890 = vand.u32 2147483647, %v880
    %vm891 = vcmp.eq.f32.partialorder %v890, 8.507059e+37
    %v892 = vand.u32 %v880, 2147483648
    %v893 = vor.u32 1.1754944e-38, %v892
    %v894 = vsel %vm891, %v893, %v889
    %v895 = vmul.f32 1.0, %v894
    %v896 = vadd.f32 %v870, %v821
    %v898 = vrot.slane %v896, 6
    %v900 = vmul.f32 %v895, %v898
    %v901 = vadd.f32 %v839, %v900
    %v902 = vtanh.pop %v901
    %v903 = vsub.f32 1.0, %v895
    %905 = vrot.lane.b32.xlu0 %v902, 64
    %v906 = vpop.permute.xlu0 %905
    %v908 = vmul.f32 %v903, %v906
    %v910 = vrot.slane %v837, 6
    %v912 = vmul.f32 %v895, %v910
    %v913 = vadd.f32 %v908, %v912
    %v914 = vld [vmem:[%s1] sm:$0x30]
    %v915 = vld [vmem:[%s1 + $0x8] sm:$0x30]
    %v916 = vpack.c.bf16 %v913, %v913
    %v918 = vrot.slane %v916, 1
    %919 = vrot.lane.b32.xlu0 %v918, 64
    %v920 = vpop.permute.xlu0 %919
    %v922 = vsel %vm119, %v920, 0
    %924 = vmatpush.bf16.msra.mxu0 0
    %925 = vmatpush.bf16.msra.mxu0 0
    %926 = vmatpush.bf16.msra.mxu0 0
    %927 = vmatpush.bf16.msra.mxu0 0
    %928 = vmatpush.bf16.msra.mxu0 %v761
    %929 = vmatpush.bf16.msra.mxu0 %v759
    %930 = vmatpush.bf16.msra.mxu0 %v757
    %931 = vmatpush.bf16.msra.mxu0 %v755
    %932 = vmatmul.bf16.gmra.mxu0 %v922
    %v933 = vpop.f32.mrf.mxu0
    %v934 = vadd.f32 0.0, %v933
    %v935 = vpop.f32.mrf.mxu0
    %936 = vdwg.mxu0
    %937 = vmatpush.bf16.msra.mxu0 0
    %938 = vmatpush.bf16.msra.mxu0 0
    %939 = vmatpush.bf16.msra.mxu0 0
    %940 = vmatpush.bf16.msra.mxu0 0
    %941 = vmatpush.bf16.msra.mxu0 %v762
    %942 = vmatpush.bf16.msra.mxu0 %v760
    %943 = vmatpush.bf16.msra.mxu0 %v758
    %944 = vmatpush.bf16.msra.mxu0 %v756
    %945 = vmatmul.bf16.gmra.mxu0 %v922
    %v946 = vpop.f32.mrf.mxu0
    %v947 = vadd.f32 0.0, %v946
    %v948 = vpop.f32.mrf.mxu0
    %949 = vdwg.mxu0
    %v951 = vrot.slane %v934, 4
    %v953 = vadd.f32 %v914, %v951
    %v954 = vxor.u32 %v953, 2147483648
    %v955 = vmul.f32 %v954, 1.442695
    %v956 = vpow.pop %v955
    %v957 = vadd.f32 %v956, 1.0
    %v958 = vrcp.pop %v957
    %v959 = vmul.f32 %v957, %v958
    %v960 = vsub.f32 1.0, %v959
    %v961 = vmul.f32 %v958, %v960
    %v962 = vadd.f32 %v958, %v961
    %vm963 = vweird.f32 %v957
    %vm964 = vweird.f32 %v958
    %vm965 = vmor %vm963, %vm964
    %v966 = vsel %vm965, %v958, %v962
    %v967 = vand.u32 2147483647, %v957
    %vm968 = vcmp.eq.f32.partialorder %v967, 8.507059e+37
    %v969 = vand.u32 %v957, 2147483648
    %v970 = vor.u32 1.1754944e-38, %v969
    %v971 = vsel %vm968, %v970, %v966
    %v972 = vmul.f32 1.0, %v971
    %v973 = vadd.f32 %v947, %v821
    %v975 = vrot.slane %v973, 4
    %v977 = vmul.f32 %v972, %v975
    %v978 = vadd.f32 %v915, %v977
    %v979 = vtanh.pop %v978
    %v980 = vsub.f32 1.0, %v972
    %982 = vrot.lane.b32.xlu0 %v979, 64
    %v983 = vpop.permute.xlu0 %982
    %v985 = vmul.f32 %v980, %v983
    %v987 = vrot.slane %v913, 6
    %v989 = vmul.f32 %v972, %v987
    %v990 = vadd.f32 %v985, %v989
    %v991 = vld [vmem:[%s1] sm:$0xc0]
    %v992 = vld [vmem:[%s1 + $0x8] sm:$0xc0]
    %v993 = vpack.c.bf16 %v990, %v990
    %v995 = vrot.slane %v993, 2
    %996 = vrot.lane.b32.xlu0 %v995, 64
    %v997 = vpop.permute.xlu0 %996
    %v999 = vsel %vm119, %v997, 0
    %1001 = vmatpush.bf16.msra.mxu0 0
    %1002 = vmatpush.bf16.msra.mxu0 0
    %1003 = vmatpush.bf16.msra.mxu0 0
    %1004 = vmatpush.bf16.msra.mxu0 0
    %1005 = vmatpush.bf16.msra.mxu0 %v761
    %1006 = vmatpush.bf16.msra.mxu0 %v759
    %1007 = vmatpush.bf16.msra.mxu0 %v757
    %1008 = vmatpush.bf16.msra.mxu0 %v755
    %1009 = vmatmul.bf16.gmra.mxu0 %v999
    %v1010 = vpop.f32.mrf.mxu0
    %v1011 = vadd.f32 0.0, %v1010
    %v1012 = vpop.f32.mrf.mxu0
    %1013 = vdwg.mxu0
    %1014 = vmatpush.bf16.msra.mxu0 0
    %1015 = vmatpush.bf16.msra.mxu0 0
    %1016 = vmatpush.bf16.msra.mxu0 0
    %1017 = vmatpush.bf16.msra.mxu0 0
    %1018 = vmatpush.bf16.msra.mxu0 %v762
    %1019 = vmatpush.bf16.msra.mxu0 %v760
    %1020 = vmatpush.bf16.msra.mxu0 %v758
    %1021 = vmatpush.bf16.msra.mxu0 %v756
    %1022 = vmatmul.bf16.gmra.mxu0 %v999
    %v1023 = vpop.f32.mrf.mxu0
    %v1024 = vadd.f32 0.0, %v1023
    %v1025 = vpop.f32.mrf.mxu0
    %1026 = vdwg.mxu0
    %v1028 = vrot.slane %v1011, 2
    %v1030 = vadd.f32 %v991, %v1028
    %v1031 = vxor.u32 %v1030, 2147483648
    %v1032 = vmul.f32 %v1031, 1.442695
    %v1033 = vpow.pop %v1032
    %v1034 = vadd.f32 %v1033, 1.0
    %v1035 = vrcp.pop %v1034
    %v1036 = vmul.f32 %v1034, %v1035
    %v1037 = vsub.f32 1.0, %v1036
    %v1038 = vmul.f32 %v1035, %v1037
    %v1039 = vadd.f32 %v1035, %v1038
    %vm1040 = vweird.f32 %v1034
    %vm1041 = vweird.f32 %v1035
    %vm1042 = vmor %vm1040, %vm1041
    %v1043 = vsel %vm1042, %v1035, %v1039
    %v1044 = vand.u32 2147483647, %v1034
    %vm1045 = vcmp.eq.f32.partialorder %v1044, 8.507059e+37
    %v1046 = vand.u32 %v1034, 2147483648
    %v1047 = vor.u32 1.1754944e-38, %v1046
    %v1048 = vsel %vm1045, %v1047, %v1043
    %v1049 = vmul.f32 1.0, %v1048
    %v1050 = vadd.f32 %v1024, %v821
    %v1052 = vrot.slane %v1050, 2
    %v1054 = vmul.f32 %v1049, %v1052
    %v1055 = vadd.f32 %v992, %v1054
    %v1056 = vtanh.pop %v1055
    %v1057 = vsub.f32 1.0, %v1049
    %1059 = vrot.lane.b32.xlu0 %v1056, 64
    %v1060 = vpop.permute.xlu0 %1059
    %v1062 = vmul.f32 %v1057, %v1060
    %v1064 = vrot.slane %v990, 6
    %v1066 = vmul.f32 %v1049, %v1064
    %v1067 = vadd.f32 %v1062, %v1066
    %v1068 = vld [vmem:[%s1 + $0x10] sm:$0x3]
    %v1069 = vld [vmem:[%s1 + $0x18] sm:$0x3]
    %v1070 = vpack.c.bf16 %v1067, %v1067
    %v1072 = vrot.slane %v1070, 3
    %1073 = vrot.lane.b32.xlu0 %v1072, 64
    %v1074 = vpop.permute.xlu0 %1073
    %v1076 = vsel %vm119, %v1074, 0
    %1078 = vmatpush.bf16.msra.mxu0 0
    %1079 = vmatpush.bf16.msra.mxu0 0
    %1080 = vmatpush.bf16.msra.mxu0 0
    %1081 = vmatpush.bf16.msra.mxu0 0
    %1082 = vmatpush.bf16.msra.mxu0 %v761
    %1083 = vmatpush.bf16.msra.mxu0 %v759
    %1084 = vmatpush.bf16.msra.mxu0 %v757
    %1085 = vmatpush.bf16.msra.mxu0 %v755
    %1086 = vmatmul.bf16.gmra.mxu0 %v1076
    %v1087 = vpop.f32.mrf.mxu0
    %v1088 = vadd.f32 0.0, %v1087
    %v1089 = vpop.f32.mrf.mxu0
    %1090 = vdwg.mxu0
    %1091 = vmatpush.bf16.msra.mxu0 0
    %1092 = vmatpush.bf16.msra.mxu0 0
    %1093 = vmatpush.bf16.msra.mxu0 0
    %1094 = vmatpush.bf16.msra.mxu0 0
    %1095 = vmatpush.bf16.msra.mxu0 %v762
    %1096 = vmatpush.bf16.msra.mxu0 %v760
    %1097 = vmatpush.bf16.msra.mxu0 %v758
    %1098 = vmatpush.bf16.msra.mxu0 %v756
    %1099 = vmatmul.bf16.gmra.mxu0 %v1076
    %v1100 = vpop.f32.mrf.mxu0
    %v1101 = vadd.f32 0.0, %v1100
    %v1102 = vpop.f32.mrf.mxu0
    %1103 = vdwg.mxu0
    %v1104 = vadd.f32 %v1068, %v1088
    %v1105 = vxor.u32 %v1104, 2147483648
    %v1106 = vmul.f32 %v1105, 1.442695
    %v1107 = vpow.pop %v1106
    %v1108 = vadd.f32 %v1107, 1.0
    %v1109 = vrcp.pop %v1108
    %v1110 = vmul.f32 %v1108, %v1109
    %v1111 = vsub.f32 1.0, %v1110
    %v1112 = vmul.f32 %v1109, %v1111
    %v1113 = vadd.f32 %v1109, %v1112
    %vm1114 = vweird.f32 %v1108
    %vm1115 = vweird.f32 %v1109
    %vm1116 = vmor %vm1114, %vm1115
    %v1117 = vsel %vm1116, %v1109, %v1113
    %v1118 = vand.u32 2147483647, %v1108
    %vm1119 = vcmp.eq.f32.partialorder %v1118, 8.507059e+37
    %v1120 = vand.u32 %v1108, 2147483648
    %v1121 = vor.u32 1.1754944e-38, %v1120
    %v1122 = vsel %vm1119, %v1121, %v1117
    %v1123 = vmul.f32 1.0, %v1122
    %v1124 = vadd.f32 %v1101, %v821
    %v1125 = vmul.f32 %v1123, %v1124
    %v1126 = vadd.f32 %v1069, %v1125
    %v1127 = vtanh.pop %v1126
    %v1128 = vsub.f32 1.0, %v1123
    %1130 = vrot.lane.b32.xlu0 %v1127, 64
    %v1131 = vpop.permute.xlu0 %1130
    %v1133 = vmul.f32 %v1128, %v1131
    %v1135 = vrot.slane %v1067, 6
    %v1137 = vmul.f32 %v1123, %v1135
    %v1138 = vadd.f32 %v1133, %v1137
    %v1139 = vld [vmem:[%s1 + $0x10] sm:$0xc]
    %v1140 = vld [vmem:[%s1 + $0x18] sm:$0xc]
    %v1141 = vpack.c.bf16 %v1138, %v1138
    %1143 = vrot.lane.b32.xlu0 %v1141, 64
    %v1144 = vpop.permute.xlu0 %1143
    %v1146 = vsel %vm119, %v1144, 0
    %1148 = vmatpush.bf16.msra.mxu0 0
    %1149 = vmatpush.bf16.msra.mxu0 0
    %1150 = vmatpush.bf16.msra.mxu0 0
    %1151 = vmatpush.bf16.msra.mxu0 0
    %1152 = vmatpush.bf16.msra.mxu0 %v761
    %1153 = vmatpush.bf16.msra.mxu0 %v759
    %1154 = vmatpush.bf16.msra.mxu0 %v757
    %1155 = vmatpush.bf16.msra.mxu0 %v755
    %1156 = vmatmul.bf16.gmra.mxu0 %v1146
    %v1157 = vpop.f32.mrf.mxu0
    %v1158 = vadd.f32 0.0, %v1157
    %v1159 = vpop.f32.mrf.mxu0
    %1160 = vdwg.mxu0
    %1161 = vmatpush.bf16.msra.mxu0 0
    %1162 = vmatpush.bf16.msra.mxu0 0
    %1163 = vmatpush.bf16.msra.mxu0 0
    %1164 = vmatpush.bf16.msra.mxu0 0
    %1165 = vmatpush.bf16.msra.mxu0 %v762
    %1166 = vmatpush.bf16.msra.mxu0 %v760
    %1167 = vmatpush.bf16.msra.mxu0 %v758
    %1168 = vmatpush.bf16.msra.mxu0 %v756
    %1169 = vmatmul.bf16.gmra.mxu0 %v1146
    %v1170 = vpop.f32.mrf.mxu0
    %v1171 = vadd.f32 0.0, %v1170
    %v1172 = vpop.f32.mrf.mxu0
    %1173 = vdwg.mxu0
    %v1175 = vrot.slane %v1158, 6
    %v1177 = vadd.f32 %v1139, %v1175
    %v1178 = vxor.u32 %v1177, 2147483648
    %v1179 = vmul.f32 %v1178, 1.442695
    %v1180 = vpow.pop %v1179
    %v1181 = vadd.f32 %v1180, 1.0
    %v1182 = vrcp.pop %v1181
    %v1183 = vmul.f32 %v1181, %v1182
    %v1184 = vsub.f32 1.0, %v1183
    %v1185 = vmul.f32 %v1182, %v1184
    %v1186 = vadd.f32 %v1182, %v1185
    %vm1187 = vweird.f32 %v1181
    %vm1188 = vweird.f32 %v1182
    %vm1189 = vmor %vm1187, %vm1188
    %v1190 = vsel %vm1189, %v1182, %v1186
    %v1191 = vand.u32 2147483647, %v1181
    %vm1192 = vcmp.eq.f32.partialorder %v1191, 8.507059e+37
    %v1193 = vand.u32 %v1181, 2147483648
    %v1194 = vor.u32 1.1754944e-38, %v1193
    %v1195 = vsel %vm1192, %v1194, %v1190
    %v1196 = vmul.f32 1.0, %v1195
    %v1197 = vadd.f32 %v1171, %v821
    %v1199 = vrot.slane %v1197, 6
    %v1201 = vmul.f32 %v1196, %v1199
    %v1202 = vadd.f32 %v1140, %v1201
    %v1203 = vtanh.pop %v1202
    %v1204 = vsub.f32 1.0, %v1196
    %1206 = vrot.lane.b32.xlu0 %v1203, 64
    %v1207 = vpop.permute.xlu0 %1206
    %v1209 = vmul.f32 %v1204, %v1207
    %v1211 = vrot.slane %v1138, 6
    %v1213 = vmul.f32 %v1196, %v1211
    %v1214 = vadd.f32 %v1209, %v1213
    %v1215 = vld [vmem:[%s1 + $0x10] sm:$0x30]
    %v1216 = vld [vmem:[%s1 + $0x18] sm:$0x30]
    %v1217 = vpack.c.bf16 %v1214, %v1214
    %v1219 = vrot.slane %v1217, 1
    %1220 = vrot.lane.b32.xlu0 %v1219, 64
    %v1221 = vpop.permute.xlu0 %1220
    %v1223 = vsel %vm119, %v1221, 0
    %1225 = vmatpush.bf16.msra.mxu0 0
    %1226 = vmatpush.bf16.msra.mxu0 0
    %1227 = vmatpush.bf16.msra.mxu0 0
    %1228 = vmatpush.bf16.msra.mxu0 0
    %1229 = vmatpush.bf16.msra.mxu0 %v761
    %1230 = vmatpush.bf16.msra.mxu0 %v759
    %1231 = vmatpush.bf16.msra.mxu0 %v757
    %1232 = vmatpush.bf16.msra.mxu0 %v755
    %1233 = vmatmul.bf16.gmra.mxu0 %v1223
    %v1234 = vpop.f32.mrf.mxu0
    %v1235 = vadd.f32 0.0, %v1234
    %v1236 = vpop.f32.mrf.mxu0
    %1237 = vdwg.mxu0
    %1238 = vmatpush.bf16.msra.mxu0 0
    %1239 = vmatpush.bf16.msra.mxu0 0
    %1240 = vmatpush.bf16.msra.mxu0 0
    %1241 = vmatpush.bf16.msra.mxu0 0
    %1242 = vmatpush.bf16.msra.mxu0 %v762
    %1243 = vmatpush.bf16.msra.mxu0 %v760
    %1244 = vmatpush.bf16.msra.mxu0 %v758
    %1245 = vmatpush.bf16.msra.mxu0 %v756
    %1246 = vmatmul.bf16.gmra.mxu0 %v1223
    %v1247 = vpop.f32.mrf.mxu0
    %v1248 = vadd.f32 0.0, %v1247
    %v1249 = vpop.f32.mrf.mxu0
    %1250 = vdwg.mxu0
    %v1252 = vrot.slane %v1235, 4
    %v1254 = vadd.f32 %v1215, %v1252
    %v1255 = vxor.u32 %v1254, 2147483648
    %v1256 = vmul.f32 %v1255, 1.442695
    %v1257 = vpow.pop %v1256
    %v1258 = vadd.f32 %v1257, 1.0
    %v1259 = vrcp.pop %v1258
    %v1260 = vmul.f32 %v1258, %v1259
    %v1261 = vsub.f32 1.0, %v1260
    %v1262 = vmul.f32 %v1259, %v1261
    %v1263 = vadd.f32 %v1259, %v1262
    %vm1264 = vweird.f32 %v1258
    %vm1265 = vweird.f32 %v1259
    %vm1266 = vmor %vm1264, %vm1265
    %v1267 = vsel %vm1266, %v1259, %v1263
    %v1268 = vand.u32 2147483647, %v1258
    %vm1269 = vcmp.eq.f32.partialorder %v1268, 8.507059e+37
    %v1270 = vand.u32 %v1258, 2147483648
    %v1271 = vor.u32 1.1754944e-38, %v1270
    %v1272 = vsel %vm1269, %v1271, %v1267
    %v1273 = vmul.f32 1.0, %v1272
    %v1274 = vadd.f32 %v1248, %v821
    %v1276 = vrot.slane %v1274, 4
    %v1278 = vmul.f32 %v1273, %v1276
    %v1279 = vadd.f32 %v1216, %v1278
    %v1280 = vtanh.pop %v1279
    %v1281 = vsub.f32 1.0, %v1273
    %1283 = vrot.lane.b32.xlu0 %v1280, 64
    %v1284 = vpop.permute.xlu0 %1283
    %v1286 = vmul.f32 %v1281, %v1284
    %v1288 = vrot.slane %v1214, 6
    %v1290 = vmul.f32 %v1273, %v1288
    %v1291 = vadd.f32 %v1286, %v1290
    %v1292 = vld [vmem:[%s1 + $0x10] sm:$0xc0]
    %v1293 = vld [vmem:[%s1 + $0x18] sm:$0xc0]
    %v1294 = vpack.c.bf16 %v1291, %v1291
    %v1296 = vrot.slane %v1294, 2
    %1297 = vrot.lane.b32.xlu0 %v1296, 64
    %v1298 = vpop.permute.xlu0 %1297
    %v1300 = vsel %vm119, %v1298, 0
    %1302 = vmatpush.bf16.msra.mxu0 0
    %1303 = vmatpush.bf16.msra.mxu0 0
    %1304 = vmatpush.bf16.msra.mxu0 0
    %1305 = vmatpush.bf16.msra.mxu0 0
    %1306 = vmatpush.bf16.msra.mxu0 %v761
    %1307 = vmatpush.bf16.msra.mxu0 %v759
    %1308 = vmatpush.bf16.msra.mxu0 %v757
    %1309 = vmatpush.bf16.msra.mxu0 %v755
    %1310 = vmatmul.bf16.gmra.mxu0 %v1300
    %v1311 = vpop.f32.mrf.mxu0
    %v1312 = vadd.f32 0.0, %v1311
    %v1313 = vpop.f32.mrf.mxu0
    %1314 = vdwg.mxu0
    %1315 = vmatpush.bf16.msra.mxu0 0
    %1316 = vmatpush.bf16.msra.mxu0 0
    %1317 = vmatpush.bf16.msra.mxu0 0
    %1318 = vmatpush.bf16.msra.mxu0 0
    %1319 = vmatpush.bf16.msra.mxu0 %v762
    %1320 = vmatpush.bf16.msra.mxu0 %v760
    %1321 = vmatpush.bf16.msra.mxu0 %v758
    %1322 = vmatpush.bf16.msra.mxu0 %v756
    %1323 = vmatmul.bf16.gmra.mxu0 %v1300
    %v1324 = vpop.f32.mrf.mxu0
    %v1325 = vadd.f32 0.0, %v1324
    %v1326 = vpop.f32.mrf.mxu0
    %1327 = vdwg.mxu0
    %v1329 = vrot.slane %v1312, 2
    %v1331 = vadd.f32 %v1292, %v1329
    %v1332 = vxor.u32 %v1331, 2147483648
    %v1333 = vmul.f32 %v1332, 1.442695
    %v1334 = vpow.pop %v1333
    %v1335 = vadd.f32 %v1334, 1.0
    %v1336 = vrcp.pop %v1335
    %v1337 = vmul.f32 %v1335, %v1336
    %v1338 = vsub.f32 1.0, %v1337
    %v1339 = vmul.f32 %v1336, %v1338
    %v1340 = vadd.f32 %v1336, %v1339
    %vm1341 = vweird.f32 %v1335
    %vm1342 = vweird.f32 %v1336
    %vm1343 = vmor %vm1341, %vm1342
    %v1344 = vsel %vm1343, %v1336, %v1340
    %v1345 = vand.u32 2147483647, %v1335
    %vm1346 = vcmp.eq.f32.partialorder %v1345, 8.507059e+37
    %v1347 = vand.u32 %v1335, 2147483648
    %v1348 = vor.u32 1.1754944e-38, %v1347
    %v1349 = vsel %vm1346, %v1348, %v1344
    %v1350 = vmul.f32 1.0, %v1349
    %v1351 = vadd.f32 %v1325, %v821
    %v1353 = vrot.slane %v1351, 2
    %v1355 = vmul.f32 %v1350, %v1353
    %v1356 = vadd.f32 %v1293, %v1355
    %v1357 = vtanh.pop %v1356
    %v1358 = vsub.f32 1.0, %v1350
    %1360 = vrot.lane.b32.xlu0 %v1357, 64
    %v1361 = vpop.permute.xlu0 %1360
    %v1363 = vmul.f32 %v1358, %v1361
    %v1365 = vrot.slane %v1291, 6
    %v1367 = vmul.f32 %v1350, %v1365
    %v1368 = vadd.f32 %v1363, %v1367
    %v1369 = vpack.c.bf16 %v1368, %v1368
    %v1370 = vld [vmem:[%s6] sm:$0xf]
    %v1371 = vld [vmem:[%s6 + $0x4] sm:$0xf]
    %v1372 = vld [vmem:[%s6 + $0x8] sm:$0xf]
    %v1373 = vld [vmem:[%s6 + $0xc] sm:$0xf]
    %v1374 = vld [vmem:[%s6 + $0x10] sm:$0xf]
    %v1375 = vld [vmem:[%s6 + $0x14] sm:$0xf]
    %v1376 = vld [vmem:[%s6 + $0x18] sm:$0xf]
    %v1377 = vld [vmem:[%s6 + $0x1c] sm:$0xf]
    %v1378 = vld [vmem:[%s7] sm:$0x1]
    %v1380 = vperm.slane %v1378, 0
    %v1383 = vrot.slane %v1369, 3
    %1384 = vrot.lane.b32.xlu0 %v1383, 64
    %v1385 = vpop.permute.xlu0 %1384
    %v1394 = vunpack.c.l.b16 %v1370
    %v1395 = vunpack.c.l.b16 %v1371
    %v1396 = vunpack.c.l.b16 %v1372
    %v1397 = vunpack.c.l.b16 %v1373
    %v1398 = vunpack.c.l.b16 %v1374
    %v1399 = vunpack.c.l.b16 %v1375
    %v1400 = vunpack.c.l.b16 %v1376
    %v1401 = vunpack.c.l.b16 %v1377
    %v1402 = vpack.c.b16 %v1395, %v1394
    %v1403 = vpack.c.b16 %v1397, %v1396
    %v1404 = vpack.c.b16 %v1399, %v1398
    %v1405 = vpack.c.b16 %v1401, %v1400
    %v1411 = vsel %vm119, %v1385, 0
    %1413 = vmatpush.bf16.msra.mxu0 0
    %1414 = vmatpush.bf16.msra.mxu0 0
    %1415 = vmatpush.bf16.msra.mxu0 0
    %1416 = vmatpush.bf16.msra.mxu0 0
    %1417 = vmatpush.bf16.msra.mxu0 %v1405
    %1418 = vmatpush.bf16.msra.mxu0 %v1404
    %1419 = vmatpush.bf16.msra.mxu0 %v1403
    %1420 = vmatpush.bf16.msra.mxu0 %v1402
    %1421 = vmatmul.bf16.gmra.mxu0 %v1411
    %v1422 = vpop.f32.mrf.mxu0
    %v1423 = vadd.f32 %v1380, %v1422
    %v1424 = vpop.f32.mrf.mxu0
    %1425 = vdwg.mxu0
    %v1426 = vmul.f32 %v1423, 0.5
    %v1427 = vmul.f32 %v1426, 1.442695
    %v1428 = vpow.pop %v1427
    %v1429 = vld [vmem:[%s8] sm:$0x3]
    %1431 = vrot.lane.b32.xlu0 %v1428, 112
    %v1432 = vpop.permute.xlu0 %1431
    %v1434 = vmul.f32 %v1429, %v1432
    %v1435 = vadd.f32 %v1434, %v1423
    %v1436 = vmul.f32 %v1423, %v1423
    %1438 = vrot.lane.b32.xlu0 %v1436, 16
    %v1439 = vpop.permute.xlu0 %1438
    %v1441 = vsub.f32 %v1423, %v1439
    %v1442 = vmul.f32 %v1423, 1.442695
    %v1443 = vpow.pop %v1442
    %v1444 = vsub.f32 %v1441, %v1443
    %v1445 = vadd.f32 %v1444, 1.0
    %1447 = vrot.lane.b32.xlu0 %v1445, 112
    %v1448 = vpop.permute.xlu0 %1447
    %vm1450 = vcmask 123904
    %v1451 = vsel %vm1450, %v1448, 0.0
    %1452 = vadd.xlane.f32.xlu0 %v1451
    %v1453 = vpop.xlane.xlu0 %1452
    %v1454 = vrot.slane %v1453, 4
    %v1455 = vadd.f32 %v1453, %v1454
    %v1456 = vrot.slane %v1455, 2
    %v1457 = vadd.f32 %v1455, %v1456
    %v1458 = vrot.slane %v1457, 1
    %v1459 = vadd.f32 %v1457, %v1458
    %s1460 = vtos %v1459
    %v1461 = vstv %s1460
    %v1462 = vmul.f32 %v1461, -0.25
    %vm1463 = vcmask 0
    %1464 = vst.msk [vmem:[#allocation7] sm:$0x1] %vm1463, %v1462
    %v1465 = vpack.c.bf16 %v1435, %v1435
    %v1466 = vld [vmem:[%s10] sm:$0xf]
    %v1467 = vld [vmem:[%s10 + $0x4] sm:$0xf]
    %v1470 = vunpack.c.l.b16 %v1466
    %v1471 = vunpack.c.l.b16 %v1467
    %v1472 = vpack.c.b16 %v1471, %v1470
    %vm1474 = vcmask 130048
    %v1476 = vsel %vm1474, %v1465, 0
    %1478 = vmatpush.bf16.msra.mxu0 0
    %1479 = vmatpush.bf16.msra.mxu0 0
    %1480 = vmatpush.bf16.msra.mxu0 0
    %1481 = vmatpush.bf16.msra.mxu0 0
    %1482 = vmatpush.bf16.msra.mxu0 0
    %1483 = vmatpush.bf16.msra.mxu0 0
    %1484 = vmatpush.bf16.msra.mxu0 0
    %1485 = vmatpush.bf16.msra.mxu0 %v1472
    %1486 = vmatmul.bf16.gmra.mxu0 %v1476
    %v1487 = vpop.f32.mrf.mxu0
    %v1488 = vadd.f32 0.0, %v1487
    %v1489 = vpop.f32.mrf.mxu0
    %1490 = vdwg.mxu0
    %v1491 = vld [vmem:[%s11] sm:$0xf]
    %v1492 = vld [vmem:[%s11 + $0x4] sm:$0xf]
    %v1493 = vld [vmem:[%s11 + $0x8] sm:$0xf]
    %v1494 = vld [vmem:[%s11 + $0xc] sm:$0xf]
    %v1495 = vld [vmem:[%s12] sm:$0x1]
    %v1496 = vld [vmem:[%s13] sm:$0xf]
    %v1497 = vld [vmem:[%s13 + $0x4] sm:$0xf]
    %v1498 = vld [vmem:[%s13 + $0x8] sm:$0xf]
    %v1499 = vld [vmem:[%s13 + $0xc] sm:$0xf]
    %v1500 = vld [vmem:[%s14] sm:$0x1]
    %v1501 = vld [vmem:[%s15] sm:$0xf]
    %v1502 = vld [vmem:[%s15 + $0x4] sm:$0xf]
    %v1503 = vld [vmem:[%s15 + $0x8] sm:$0xf]
    %v1504 = vld [vmem:[%s15 + $0xc] sm:$0xf]
    %v1505 = vld [vmem:[%s16] sm:$0x1]
    %v1506 = vld [vmem:[%s9] sm:$0x3]
    %v1507 = vadd.f32 %v1506, %v1488
    %v1512 = vunpack.c.l.b16 %v1491
    %v1513 = vunpack.c.l.b16 %v1492
    %v1514 = vunpack.c.l.b16 %v1493
    %v1515 = vunpack.c.l.b16 %v1494
    %v1516 = vpack.c.b16 %v1513, %v1512
    %v1517 = vpack.c.b16 %v1515, %v1514
    %vm1520 = vcmask 261120
    %v1521 = vsel %vm1520, %v730, 0
    %1523 = vmatpush.bf16.msra.mxu0 0
    %1524 = vmatpush.bf16.msra.mxu0 0
    %1525 = vmatpush.bf16.msra.mxu0 0
    %1526 = vmatpush.bf16.msra.mxu0 0
    %1527 = vmatpush.bf16.msra.mxu0 0
    %1528 = vmatpush.bf16.msra.mxu0 0
    %1529 = vmatpush.bf16.msra.mxu0 %v1517
    %1530 = vmatpush.bf16.msra.mxu0 %v1516
    %1531 = vmatmul.bf16.gmra.mxu0 %v1521
    %v1532 = vpop.f32.mrf.mxu0
    %v1533 = vadd.f32 0.0, %v1532
    %v1534 = vpop.f32.mrf.mxu0
    %1535 = vdwg.mxu0
    %v1536 = vadd.f32 %v1507, %v1533
    %v1537 = vxor.u32 %v1536, 2147483648
    %v1538 = vmul.f32 %v1537, 1.442695
    %v1539 = vpow.pop %v1538
    %v1540 = vadd.f32 %v1539, 1.0
    %v1541 = vrcp.pop %v1540
    %v1542 = vmul.f32 %v1540, %v1541
    %v1543 = vsub.f32 1.0, %v1542
    %v1544 = vmul.f32 %v1541, %v1543
    %v1545 = vadd.f32 %v1541, %v1544
    %vm1546 = vweird.f32 %v1540
    %vm1547 = vweird.f32 %v1541
    %vm1548 = vmor %vm1546, %vm1547
    %v1549 = vsel %vm1548, %v1541, %v1545
    %v1550 = vand.u32 2147483647, %v1540
    %vm1551 = vcmp.eq.f32.partialorder %v1550, 8.507059e+37
    %v1552 = vand.u32 %v1540, 2147483648
    %v1553 = vor.u32 1.1754944e-38, %v1552
    %v1554 = vsel %vm1551, %v1553, %v1549
    %v1555 = vmul.f32 1.0, %v1554
    %v1557 = vperm.slane %v1495, 0
    %1558 = vrot.lane.b32.xlu0 %v1557, 64
    %v1559 = vpop.permute.xlu0 %1558
    %v1561 = vadd.f32 %v1533, %v1559
    %1563 = vrot.lane.b32.xlu0 %v1561, 64
    %v1564 = vpop.permute.xlu0 %1563
    %v1566 = vmul.f32 %v1555, %v1564
    %1568 = vrot.lane.b32.xlu0 %v1566, 64
    %v1569 = vpop.permute.xlu0 %1568
    %v1571 = vadd.f32 %v1507, %v1569
    %v1572 = vtanh.pop %v1571
    %v1573 = vsub.f32 1.0, %v1555
    %1575 = vrot.lane.b32.xlu0 %v1572, 96
    %v1576 = vpop.permute.xlu0 %1575
    %v1578 = vmul.f32 %v1573, %v1576
    %1579 = vrot.lane.b32.xlu0 %v834, 96
    %v1580 = vpop.permute.xlu0 %1579
    %v1582 = vmul.f32 %v1555, %v1580
    %v1583 = vadd.f32 %v1578, %v1582
    %v1584 = vpack.c.bf16 %v1583, %v1583
    %v1586 = vperm.slane %v1500, 0
    %1589 = vrot.lane.b32.xlu0 %v1584, 96
    %v1590 = vpop.permute.xlu0 %1589
    %v1595 = vunpack.c.l.b16 %v1496
    %v1596 = vunpack.c.l.b16 %v1497
    %v1597 = vunpack.c.l.b16 %v1498
    %v1598 = vunpack.c.l.b16 %v1499
    %v1599 = vpack.c.b16 %v1596, %v1595
    %v1600 = vpack.c.b16 %v1598, %v1597
    %v1604 = vsel %vm1520, %v1590, 0
    %1606 = vmatpush.bf16.msra.mxu0 0
    %1607 = vmatpush.bf16.msra.mxu0 0
    %1608 = vmatpush.bf16.msra.mxu0 0
    %1609 = vmatpush.bf16.msra.mxu0 0
    %1610 = vmatpush.bf16.msra.mxu0 0
    %1611 = vmatpush.bf16.msra.mxu0 0
    %1612 = vmatpush.bf16.msra.mxu0 %v1600
    %1613 = vmatpush.bf16.msra.mxu0 %v1599
    %1614 = vmatmul.bf16.gmra.mxu0 %v1604
    %v1615 = vpop.f32.mrf.mxu0
    %v1616 = vadd.f32 %v1586, %v1615
    %v1617 = vpop.f32.mrf.mxu0
    %1618 = vdwg.mxu0
    %1619 = vrot.lane.b32.xlu0 %v728, 32
    %v1620 = vpop.permute.xlu0 %1619
    %v1625 = vunpack.c.l.b16 %v1501
    %v1626 = vunpack.c.l.b16 %v1502
    %v1627 = vunpack.c.l.b16 %v1503
    %v1628 = vunpack.c.l.b16 %v1504
    %v1629 = vpack.c.b16 %v1626, %v1625
    %v1630 = vpack.c.b16 %v1628, %v1627
    %v1634 = vsel %vm1520, %v1620, 0
    %1636 = vmatpush.bf16.msra.mxu0 0
    %1637 = vmatpush.bf16.msra.mxu0 0
    %1638 = vmatpush.bf16.msra.mxu0 0
    %1639 = vmatpush.bf16.msra.mxu0 0
    %1640 = vmatpush.bf16.msra.mxu0 0
    %1641 = vmatpush.bf16.msra.mxu0 0
    %1642 = vmatpush.bf16.msra.mxu0 %v1630
    %1643 = vmatpush.bf16.msra.mxu0 %v1629
    %1644 = vmatmul.bf16.gmra.mxu0 %v1634
    %v1645 = vpop.f32.mrf.mxu0
    %v1646 = vadd.f32 0.0, %v1645
    %v1647 = vpop.f32.mrf.mxu0
    %1648 = vdwg.mxu0
    %v1649 = vadd.f32 %v1616, %v1646
    %v1650 = vxor.u32 %v1649, 2147483648
    %v1651 = vmul.f32 %v1650, 1.442695
    %v1652 = vpow.pop %v1651
    %v1653 = vadd.f32 %v1652, 1.0
    %v1654 = vrcp.pop %v1653
    %v1655 = vmul.f32 %v1653, %v1654
    %v1656 = vsub.f32 1.0, %v1655
    %v1657 = vmul.f32 %v1654, %v1656
    %v1658 = vadd.f32 %v1654, %v1657
    %vm1659 = vweird.f32 %v1653
    %vm1660 = vweird.f32 %v1654
    %vm1661 = vmor %vm1659, %vm1660
    %v1662 = vsel %vm1661, %v1654, %v1658
    %v1663 = vand.u32 2147483647, %v1653
    %vm1664 = vcmp.eq.f32.partialorder %v1663, 8.507059e+37
    %v1665 = vand.u32 %v1653, 2147483648
    %v1666 = vor.u32 1.1754944e-38, %v1665
    %v1667 = vsel %vm1664, %v1666, %v1662
    %v1668 = vmul.f32 1.0, %v1667
    %v1670 = vperm.slane %v1505, 0
    %1671 = vrot.lane.b32.xlu0 %v1670, 64
    %v1672 = vpop.permute.xlu0 %1671
    %v1674 = vadd.f32 %v1646, %v1672
    %1676 = vrot.lane.b32.xlu0 %v1674, 64
    %v1677 = vpop.permute.xlu0 %1676
    %v1679 = vmul.f32 %v1668, %v1677
    %1681 = vrot.lane.b32.xlu0 %v1679, 64
    %v1682 = vpop.permute.xlu0 %1681
    %v1684 = vadd.f32 %v1616, %v1682
    %v1685 = vtanh.pop %v1684
    %v1686 = vsub.f32 1.0, %v1668
    %1688 = vrot.lane.b32.xlu0 %v1685, 96
    %v1689 = vpop.permute.xlu0 %1688
    %v1691 = vmul.f32 %v1686, %v1689
    %1692 = vrot.lane.b32.xlu0 %v834, 64
    %v1693 = vpop.permute.xlu0 %1692
    %v1695 = vmul.f32 %v1668, %v1693
    %v1696 = vadd.f32 %v1691, %v1695
    %v1698 = vrot.slane %v1696, 1
    %v1699 = vperm.slane %v1696, 0
    %v1700 = vperm.slane %v1698, 0
    %1701 = vrot.lane.b32.xlu0 %v1699, 96
    %v1702 = vpop.permute.xlu0 %1701
    %1703 = vrot.lane.b32.xlu0 %v1700, 96
    %v1704 = vpop.permute.xlu0 %1703
    %vm1707 = vcmask 253952
    %1708 = vst.msk [vmem:[#allocation2] sm:$0x1] %vm1707, %v1702
    %1709 = vst.msk [vmem:[#allocation2 + $0x8] sm:$0x1] %vm1707, %v1704
    %v1710 = vld [vmem:[%s9 + $0x2] sm:$0x3]
    %v1711 = vadd.f32 %v1710, %v1488
    %1712 = vmatpush.bf16.msra.mxu0 0
    %1713 = vmatpush.bf16.msra.mxu0 0
    %1714 = vmatpush.bf16.msra.mxu0 0
    %1715 = vmatpush.bf16.msra.mxu0 0
    %1716 = vmatpush.bf16.msra.mxu0 0
    %1717 = vmatpush.bf16.msra.mxu0 0
    %1718 = vmatpush.bf16.msra.mxu0 %v1517
    %1719 = vmatpush.bf16.msra.mxu0 %v1516
    %1720 = vmatmul.bf16.gmra.mxu0 %v1604
    %v1721 = vpop.f32.mrf.mxu0
    %v1722 = vadd.f32 0.0, %v1721
    %v1723 = vpop.f32.mrf.mxu0
    %1724 = vdwg.mxu0
    %v1725 = vadd.f32 %v1711, %v1722
    %v1726 = vxor.u32 %v1725, 2147483648
    %v1727 = vmul.f32 %v1726, 1.442695
    %v1728 = vpow.pop %v1727
    %v1729 = vadd.f32 %v1728, 1.0
    %v1730 = vrcp.pop %v1729
    %v1731 = vmul.f32 %v1729, %v1730
    %v1732 = vsub.f32 1.0, %v1731
    %v1733 = vmul.f32 %v1730, %v1732
    %v1734 = vadd.f32 %v1730, %v1733
    %vm1735 = vweird.f32 %v1729
    %vm1736 = vweird.f32 %v1730
    %vm1737 = vmor %vm1735, %vm1736
    %v1738 = vsel %vm1737, %v1730, %v1734
    %v1739 = vand.u32 2147483647, %v1729
    %vm1740 = vcmp.eq.f32.partialorder %v1739, 8.507059e+37
    %v1741 = vand.u32 %v1729, 2147483648
    %v1742 = vor.u32 1.1754944e-38, %v1741
    %v1743 = vsel %vm1740, %v1742, %v1738
    %v1744 = vmul.f32 1.0, %v1743
    %v1745 = vadd.f32 %v1722, %v1559
    %1747 = vrot.lane.b32.xlu0 %v1745, 64
    %v1748 = vpop.permute.xlu0 %1747
    %v1750 = vmul.f32 %v1744, %v1748
    %1752 = vrot.lane.b32.xlu0 %v1750, 64
    %v1753 = vpop.permute.xlu0 %1752
    %v1755 = vadd.f32 %v1711, %v1753
    %v1756 = vtanh.pop %v1755
    %v1757 = vsub.f32 1.0, %v1744
    %1759 = vrot.lane.b32.xlu0 %v1756, 96
    %v1760 = vpop.permute.xlu0 %1759
    %v1762 = vmul.f32 %v1757, %v1760
    %v1763 = vmul.f32 %v1744, %v1583
    %v1764 = vadd.f32 %v1762, %v1763
    %v1765 = vpack.c.bf16 %v1764, %v1764
    %1767 = vrot.lane.b32.xlu0 %v1765, 96
    %v1768 = vpop.permute.xlu0 %1767
    %v1770 = vsel %vm1520, %v1768, 0
    %1772 = vmatpush.bf16.msra.mxu0 0
    %1773 = vmatpush.bf16.msra.mxu0 0
    %1774 = vmatpush.bf16.msra.mxu0 0
    %1775 = vmatpush.bf16.msra.mxu0 0
    %1776 = vmatpush.bf16.msra.mxu0 0
    %1777 = vmatpush.bf16.msra.mxu0 0
    %1778 = vmatpush.bf16.msra.mxu0 %v1600
    %1779 = vmatpush.bf16.msra.mxu0 %v1599
    %1780 = vmatmul.bf16.gmra.mxu0 %v1770
    %v1781 = vpop.f32.mrf.mxu0
    %v1782 = vadd.f32 %v1586, %v1781
    %v1783 = vpop.f32.mrf.mxu0
    %1784 = vdwg.mxu0
    %v1785 = vpack.c.bf16 %v1696, %v1696
    %1787 = vrot.lane.b32.xlu0 %v1785, 96
    %v1788 = vpop.permute.xlu0 %1787
    %v1790 = vsel %vm1520, %v1788, 0
    %1792 = vmatpush.bf16.msra.mxu0 0
    %1793 = vmatpush.bf16.msra.mxu0 0
    %1794 = vmatpush.bf16.msra.mxu0 0
    %1795 = vmatpush.bf16.msra.mxu0 0
    %1796 = vmatpush.bf16.msra.mxu0 0
    %1797 = vmatpush.bf16.msra.mxu0 0
    %1798 = vmatpush.bf16.msra.mxu0 %v1630
    %1799 = vmatpush.bf16.msra.mxu0 %v1629
    %1800 = vmatmul.bf16.gmra.mxu0 %v1790
    %v1801 = vpop.f32.mrf.mxu0
    %v1802 = vadd.f32 0.0, %v1801
    %v1803 = vpop.f32.mrf.mxu0
    %1804 = vdwg.mxu0
    %v1805 = vadd.f32 %v1782, %v1802
    %v1806 = vxor.u32 %v1805, 2147483648
    %v1807 = vmul.f32 %v1806, 1.442695
    %v1808 = vpow.pop %v1807
    %v1809 = vadd.f32 %v1808, 1.0
    %v1810 = vrcp.pop %v1809
    %v1811 = vmul.f32 %v1809, %v1810
    %v1812 = vsub.f32 1.0, %v1811
    %v1813 = vmul.f32 %v1810, %v1812
    %v1814 = vadd.f32 %v1810, %v1813
    %vm1815 = vweird.f32 %v1809
    %vm1816 = vweird.f32 %v1810
    %vm1817 = vmor %vm1815, %vm1816
    %v1818 = vsel %vm1817, %v1810, %v1814
    %v1819 = vand.u32 2147483647, %v1809
    %vm1820 = vcmp.eq.f32.partialorder %v1819, 8.507059e+37
    %v1821 = vand.u32 %v1809, 2147483648
    %v1822 = vor.u32 1.1754944e-38, %v1821
    %v1823 = vsel %vm1820, %v1822, %v1818
    %v1824 = vmul.f32 1.0, %v1823
    %v1825 = vadd.f32 %v1802, %v1672
    %1827 = vrot.lane.b32.xlu0 %v1825, 64
    %v1828 = vpop.permute.xlu0 %1827
    %v1830 = vmul.f32 %v1824, %v1828
    %1832 = vrot.lane.b32.xlu0 %v1830, 64
    %v1833 = vpop.permute.xlu0 %1832
    %v1835 = vadd.f32 %v1782, %v1833
    %v1836 = vtanh.pop %v1835
    %v1837 = vsub.f32 1.0, %v1824
    %1839 = vrot.lane.b32.xlu0 %v1836, 96
    %v1840 = vpop.permute.xlu0 %1839
    %v1842 = vmul.f32 %v1837, %v1840
    %v1843 = vmul.f32 %v1824, %v1696
    %v1844 = vadd.f32 %v1842, %v1843
    %v1846 = vrot.slane %v1844, 1
    %v1847 = vperm.slane %v1844, 0
    %v1848 = vperm.slane %v1846, 0
    %1849 = vrot.lane.b32.xlu0 %v1847, 96
    %v1850 = vpop.permute.xlu0 %1849
    %1851 = vrot.lane.b32.xlu0 %v1848, 96
    %v1852 = vpop.permute.xlu0 %1851
    %1855 = vst.msk [vmem:[#allocation2 + $0x1] sm:$0x1] %vm1707, %v1850
    %1856 = vst.msk [vmem:[#allocation2 + $0x9] sm:$0x1] %vm1707, %v1852
    %v1857 = vld [vmem:[%s9 + $0x4] sm:$0x3]
    %v1858 = vadd.f32 %v1857, %v1488
    %1859 = vmatpush.bf16.msra.mxu0 0
    %1860 = vmatpush.bf16.msra.mxu0 0
    %1861 = vmatpush.bf16.msra.mxu0 0
    %1862 = vmatpush.bf16.msra.mxu0 0
    %1863 = vmatpush.bf16.msra.mxu0 0
    %1864 = vmatpush.bf16.msra.mxu0 0
    %1865 = vmatpush.bf16.msra.mxu0 %v1517
    %1866 = vmatpush.bf16.msra.mxu0 %v1516
    %1867 = vmatmul.bf16.gmra.mxu0 %v1770
    %v1868 = vpop.f32.mrf.mxu0
    %v1869 = vadd.f32 0.0, %v1868
    %v1870 = vpop.f32.mrf.mxu0
    %1871 = vdwg.mxu0
    %v1872 = vadd.f32 %v1858, %v1869
    %v1873 = vxor.u32 %v1872, 2147483648
    %v1874 = vmul.f32 %v1873, 1.442695
    %v1875 = vpow.pop %v1874
    %v1876 = vadd.f32 %v1875, 1.0
    %v1877 = vrcp.pop %v1876
    %v1878 = vmul.f32 %v1876, %v1877
    %v1879 = vsub.f32 1.0, %v1878
    %v1880 = vmul.f32 %v1877, %v1879
    %v1881 = vadd.f32 %v1877, %v1880
    %vm1882 = vweird.f32 %v1876
    %vm1883 = vweird.f32 %v1877
    %vm1884 = vmor %vm1882, %vm1883
    %v1885 = vsel %vm1884, %v1877, %v1881
    %v1886 = vand.u32 2147483647, %v1876
    %vm1887 = vcmp.eq.f32.partialorder %v1886, 8.507059e+37
    %v1888 = vand.u32 %v1876, 2147483648
    %v1889 = vor.u32 1.1754944e-38, %v1888
    %v1890 = vsel %vm1887, %v1889, %v1885
    %v1891 = vmul.f32 1.0, %v1890
    %v1892 = vadd.f32 %v1869, %v1559
    %1894 = vrot.lane.b32.xlu0 %v1892, 64
    %v1895 = vpop.permute.xlu0 %1894
    %v1897 = vmul.f32 %v1891, %v1895
    %1899 = vrot.lane.b32.xlu0 %v1897, 64
    %v1900 = vpop.permute.xlu0 %1899
    %v1902 = vadd.f32 %v1858, %v1900
    %v1903 = vtanh.pop %v1902
    %v1904 = vsub.f32 1.0, %v1891
    %1906 = vrot.lane.b32.xlu0 %v1903, 96
    %v1907 = vpop.permute.xlu0 %1906
    %v1909 = vmul.f32 %v1904, %v1907
    %v1910 = vmul.f32 %v1891, %v1764
    %v1911 = vadd.f32 %v1909, %v1910
    %v1912 = vpack.c.bf16 %v1911, %v1911
    %1914 = vrot.lane.b32.xlu0 %v1912, 96
    %v1915 = vpop.permute.xlu0 %1914
    %v1917 = vsel %vm1520, %v1915, 0
    %1919 = vmatpush.bf16.msra.mxu0 0
    %1920 = vmatpush.bf16.msra.mxu0 0
    %1921 = vmatpush.bf16.msra.mxu0 0
    %1922 = vmatpush.bf16.msra.mxu0 0
    %1923 = vmatpush.bf16.msra.mxu0 0
    %1924 = vmatpush.bf16.msra.mxu0 0
    %1925 = vmatpush.bf16.msra.mxu0 %v1600
    %1926 = vmatpush.bf16.msra.mxu0 %v1599
    %1927 = vmatmul.bf16.gmra.mxu0 %v1917
    %v1928 = vpop.f32.mrf.mxu0
    %v1929 = vadd.f32 %v1586, %v1928
    %v1930 = vpop.f32.mrf.mxu0
    %1931 = vdwg.mxu0
    %v1932 = vpack.c.bf16 %v1844, %v1844
    %1934 = vrot.lane.b32.xlu0 %v1932, 96
    %v1935 = vpop.permute.xlu0 %1934
    %v1937 = vsel %vm1520, %v1935, 0
    %1939 = vmatpush.bf16.msra.mxu0 0
    %1940 = vmatpush.bf16.msra.mxu0 0
    %1941 = vmatpush.bf16.msra.mxu0 0
    %1942 = vmatpush.bf16.msra.mxu0 0
    %1943 = vmatpush.bf16.msra.mxu0 0
    %1944 = vmatpush.bf16.msra.mxu0 0
    %1945 = vmatpush.bf16.msra.mxu0 %v1630
    %1946 = vmatpush.bf16.msra.mxu0 %v1629
    %1947 = vmatmul.bf16.gmra.mxu0 %v1937
    %v1948 = vpop.f32.mrf.mxu0
    %v1949 = vadd.f32 0.0, %v1948
    %v1950 = vpop.f32.mrf.mxu0
    %1951 = vdwg.mxu0
    %v1952 = vadd.f32 %v1929, %v1949
    %v1953 = vxor.u32 %v1952, 2147483648
    %v1954 = vmul.f32 %v1953, 1.442695
    %v1955 = vpow.pop %v1954
    %v1956 = vadd.f32 %v1955, 1.0
    %v1957 = vrcp.pop %v1956
    %v1958 = vmul.f32 %v1956, %v1957
    %v1959 = vsub.f32 1.0, %v1958
    %v1960 = vmul.f32 %v1957, %v1959
    %v1961 = vadd.f32 %v1957, %v1960
    %vm1962 = vweird.f32 %v1956
    %vm1963 = vweird.f32 %v1957
    %vm1964 = vmor %vm1962, %vm1963
    %v1965 = vsel %vm1964, %v1957, %v1961
    %v1966 = vand.u32 2147483647, %v1956
    %vm1967 = vcmp.eq.f32.partialorder %v1966, 8.507059e+37
    %v1968 = vand.u32 %v1956, 2147483648
    %v1969 = vor.u32 1.1754944e-38, %v1968
    %v1970 = vsel %vm1967, %v1969, %v1965
    %v1971 = vmul.f32 1.0, %v1970
    %v1972 = vadd.f32 %v1949, %v1672
    %1974 = vrot.lane.b32.xlu0 %v1972, 64
    %v1975 = vpop.permute.xlu0 %1974
    %v1977 = vmul.f32 %v1971, %v1975
    %1979 = vrot.lane.b32.xlu0 %v1977, 64
    %v1980 = vpop.permute.xlu0 %1979
    %v1982 = vadd.f32 %v1929, %v1980
    %v1983 = vtanh.pop %v1982
    %v1984 = vsub.f32 1.0, %v1971
    %1986 = vrot.lane.b32.xlu0 %v1983, 96
    %v1987 = vpop.permute.xlu0 %1986
    %v1989 = vmul.f32 %v1984, %v1987
    %v1990 = vmul.f32 %v1971, %v1844
    %v1991 = vadd.f32 %v1989, %v1990
    %v1993 = vrot.slane %v1991, 1
    %v1994 = vperm.slane %v1991, 0
    %v1995 = vperm.slane %v1993, 0
    %1996 = vrot.lane.b32.xlu0 %v1994, 96
    %v1997 = vpop.permute.xlu0 %1996
    %1998 = vrot.lane.b32.xlu0 %v1995, 96
    %v1999 = vpop.permute.xlu0 %1998
    %2002 = vst.msk [vmem:[#allocation2 + $0x2] sm:$0x1] %vm1707, %v1997
    %2003 = vst.msk [vmem:[#allocation2 + $0xa] sm:$0x1] %vm1707, %v1999
    %v2004 = vld [vmem:[%s9 + $0x6] sm:$0x3]
    %v2005 = vadd.f32 %v2004, %v1488
    %2006 = vmatpush.bf16.msra.mxu0 0
    %2007 = vmatpush.bf16.msra.mxu0 0
    %2008 = vmatpush.bf16.msra.mxu0 0
    %2009 = vmatpush.bf16.msra.mxu0 0
    %2010 = vmatpush.bf16.msra.mxu0 0
    %2011 = vmatpush.bf16.msra.mxu0 0
    %2012 = vmatpush.bf16.msra.mxu0 %v1517
    %2013 = vmatpush.bf16.msra.mxu0 %v1516
    %2014 = vmatmul.bf16.gmra.mxu0 %v1917
    %v2015 = vpop.f32.mrf.mxu0
    %v2016 = vadd.f32 0.0, %v2015
    %v2017 = vpop.f32.mrf.mxu0
    %2018 = vdwg.mxu0
    %v2019 = vadd.f32 %v2005, %v2016
    %v2020 = vxor.u32 %v2019, 2147483648
    %v2021 = vmul.f32 %v2020, 1.442695
    %v2022 = vpow.pop %v2021
    %v2023 = vadd.f32 %v2022, 1.0
    %v2024 = vrcp.pop %v2023
    %v2025 = vmul.f32 %v2023, %v2024
    %v2026 = vsub.f32 1.0, %v2025
    %v2027 = vmul.f32 %v2024, %v2026
    %v2028 = vadd.f32 %v2024, %v2027
    %vm2029 = vweird.f32 %v2023
    %vm2030 = vweird.f32 %v2024
    %vm2031 = vmor %vm2029, %vm2030
    %v2032 = vsel %vm2031, %v2024, %v2028
    %v2033 = vand.u32 2147483647, %v2023
    %vm2034 = vcmp.eq.f32.partialorder %v2033, 8.507059e+37
    %v2035 = vand.u32 %v2023, 2147483648
    %v2036 = vor.u32 1.1754944e-38, %v2035
    %v2037 = vsel %vm2034, %v2036, %v2032
    %v2038 = vmul.f32 1.0, %v2037
    %v2039 = vadd.f32 %v2016, %v1559
    %2041 = vrot.lane.b32.xlu0 %v2039, 64
    %v2042 = vpop.permute.xlu0 %2041
    %v2044 = vmul.f32 %v2038, %v2042
    %2046 = vrot.lane.b32.xlu0 %v2044, 64
    %v2047 = vpop.permute.xlu0 %2046
    %v2049 = vadd.f32 %v2005, %v2047
    %v2050 = vtanh.pop %v2049
    %v2051 = vsub.f32 1.0, %v2038
    %2053 = vrot.lane.b32.xlu0 %v2050, 96
    %v2054 = vpop.permute.xlu0 %2053
    %v2056 = vmul.f32 %v2051, %v2054
    %v2057 = vmul.f32 %v2038, %v1911
    %v2058 = vadd.f32 %v2056, %v2057
    %v2059 = vpack.c.bf16 %v2058, %v2058
    %2061 = vrot.lane.b32.xlu0 %v2059, 96
    %v2062 = vpop.permute.xlu0 %2061
    %v2064 = vsel %vm1520, %v2062, 0
    %2066 = vmatpush.bf16.msra.mxu0 0
    %2067 = vmatpush.bf16.msra.mxu0 0
    %2068 = vmatpush.bf16.msra.mxu0 0
    %2069 = vmatpush.bf16.msra.mxu0 0
    %2070 = vmatpush.bf16.msra.mxu0 0
    %2071 = vmatpush.bf16.msra.mxu0 0
    %2072 = vmatpush.bf16.msra.mxu0 %v1600
    %2073 = vmatpush.bf16.msra.mxu0 %v1599
    %2074 = vmatmul.bf16.gmra.mxu0 %v2064
    %v2075 = vpop.f32.mrf.mxu0
    %v2076 = vadd.f32 %v1586, %v2075
    %v2077 = vpop.f32.mrf.mxu0
    %2078 = vdwg.mxu0
    %v2079 = vpack.c.bf16 %v1991, %v1991
    %2081 = vrot.lane.b32.xlu0 %v2079, 96
    %v2082 = vpop.permute.xlu0 %2081
    %v2084 = vsel %vm1520, %v2082, 0
    %2086 = vmatpush.bf16.msra.mxu0 0
    %2087 = vmatpush.bf16.msra.mxu0 0
    %2088 = vmatpush.bf16.msra.mxu0 0
    %2089 = vmatpush.bf16.msra.mxu0 0
    %2090 = vmatpush.bf16.msra.mxu0 0
    %2091 = vmatpush.bf16.msra.mxu0 0
    %2092 = vmatpush.bf16.msra.mxu0 %v1630
    %2093 = vmatpush.bf16.msra.mxu0 %v1629
    %2094 = vmatmul.bf16.gmra.mxu0 %v2084
    %v2095 = vpop.f32.mrf.mxu0
    %v2096 = vadd.f32 0.0, %v2095
    %v2097 = vpop.f32.mrf.mxu0
    %2098 = vdwg.mxu0
    %v2099 = vadd.f32 %v2076, %v2096
    %v2100 = vxor.u32 %v2099, 2147483648
    %v2101 = vmul.f32 %v2100, 1.442695
    %v2102 = vpow.pop %v2101
    %v2103 = vadd.f32 %v2102, 1.0
    %v2104 = vrcp.pop %v2103
    %v2105 = vmul.f32 %v2103, %v2104
    %v2106 = vsub.f32 1.0, %v2105
    %v2107 = vmul.f32 %v2104, %v2106
    %v2108 = vadd.f32 %v2104, %v2107
    %vm2109 = vweird.f32 %v2103
    %vm2110 = vweird.f32 %v2104
    %vm2111 = vmor %vm2109, %vm2110
    %v2112 = vsel %vm2111, %v2104, %v2108
    %v2113 = vand.u32 2147483647, %v2103
    %vm2114 = vcmp.eq.f32.partialorder %v2113, 8.507059e+37
    %v2115 = vand.u32 %v2103, 2147483648
    %v2116 = vor.u32 1.1754944e-38, %v2115
    %v2117 = vsel %vm2114, %v2116, %v2112
    %v2118 = vmul.f32 1.0, %v2117
    %v2119 = vadd.f32 %v2096, %v1672
    %2121 = vrot.lane.b32.xlu0 %v2119, 64
    %v2122 = vpop.permute.xlu0 %2121
    %v2124 = vmul.f32 %v2118, %v2122
    %2126 = vrot.lane.b32.xlu0 %v2124, 64
    %v2127 = vpop.permute.xlu0 %2126
    %v2129 = vadd.f32 %v2076, %v2127
    %v2130 = vtanh.pop %v2129
    %v2131 = vsub.f32 1.0, %v2118
    %2133 = vrot.lane.b32.xlu0 %v2130, 96
    %v2134 = vpop.permute.xlu0 %2133
    %v2136 = vmul.f32 %v2131, %v2134
    %v2137 = vmul.f32 %v2118, %v1991
    %v2138 = vadd.f32 %v2136, %v2137
    %v2140 = vrot.slane %v2138, 1
    %v2141 = vperm.slane %v2138, 0
    %v2142 = vperm.slane %v2140, 0
    %2143 = vrot.lane.b32.xlu0 %v2141, 96
    %v2144 = vpop.permute.xlu0 %2143
    %2145 = vrot.lane.b32.xlu0 %v2142, 96
    %v2146 = vpop.permute.xlu0 %2145
    %2149 = vst.msk [vmem:[#allocation2 + $0x3] sm:$0x1] %vm1707, %v2144
    %2150 = vst.msk [vmem:[#allocation2 + $0xb] sm:$0x1] %vm1707, %v2146
    %v2151 = vld [vmem:[%s9 + $0x8] sm:$0x3]
    %v2152 = vadd.f32 %v2151, %v1488
    %2153 = vmatpush.bf16.msra.mxu0 0
    %2154 = vmatpush.bf16.msra.mxu0 0
    %2155 = vmatpush.bf16.msra.mxu0 0
    %2156 = vmatpush.bf16.msra.mxu0 0
    %2157 = vmatpush.bf16.msra.mxu0 0
    %2158 = vmatpush.bf16.msra.mxu0 0
    %2159 = vmatpush.bf16.msra.mxu0 %v1517
    %2160 = vmatpush.bf16.msra.mxu0 %v1516
    %2161 = vmatmul.bf16.gmra.mxu0 %v2064
    %v2162 = vpop.f32.mrf.mxu0
    %v2163 = vadd.f32 0.0, %v2162
    %v2164 = vpop.f32.mrf.mxu0
    %2165 = vdwg.mxu0
    %v2166 = vadd.f32 %v2152, %v2163
    %v2167 = vxor.u32 %v2166, 2147483648
    %v2168 = vmul.f32 %v2167, 1.442695
    %v2169 = vpow.pop %v2168
    %v2170 = vadd.f32 %v2169, 1.0
    %v2171 = vrcp.pop %v2170
    %v2172 = vmul.f32 %v2170, %v2171
    %v2173 = vsub.f32 1.0, %v2172
    %v2174 = vmul.f32 %v2171, %v2173
    %v2175 = vadd.f32 %v2171, %v2174
    %vm2176 = vweird.f32 %v2170
    %vm2177 = vweird.f32 %v2171
    %vm2178 = vmor %vm2176, %vm2177
    %v2179 = vsel %vm2178, %v2171, %v2175
    %v2180 = vand.u32 2147483647, %v2170
    %vm2181 = vcmp.eq.f32.partialorder %v2180, 8.507059e+37
    %v2182 = vand.u32 %v2170, 2147483648
    %v2183 = vor.u32 1.1754944e-38, %v2182
    %v2184 = vsel %vm2181, %v2183, %v2179
    %v2185 = vmul.f32 1.0, %v2184
    %v2186 = vadd.f32 %v2163, %v1559
    %2188 = vrot.lane.b32.xlu0 %v2186, 64
    %v2189 = vpop.permute.xlu0 %2188
    %v2191 = vmul.f32 %v2185, %v2189
    %2193 = vrot.lane.b32.xlu0 %v2191, 64
    %v2194 = vpop.permute.xlu0 %2193
    %v2196 = vadd.f32 %v2152, %v2194
    %v2197 = vtanh.pop %v2196
    %v2198 = vsub.f32 1.0, %v2185
    %2200 = vrot.lane.b32.xlu0 %v2197, 96
    %v2201 = vpop.permute.xlu0 %2200
    %v2203 = vmul.f32 %v2198, %v2201
    %v2204 = vmul.f32 %v2185, %v2058
    %v2205 = vadd.f32 %v2203, %v2204
    %v2206 = vpack.c.bf16 %v2205, %v2205
    %2208 = vrot.lane.b32.xlu0 %v2206, 96
    %v2209 = vpop.permute.xlu0 %2208
    %v2211 = vsel %vm1520, %v2209, 0
    %2213 = vmatpush.bf16.msra.mxu0 0
    %2214 = vmatpush.bf16.msra.mxu0 0
    %2215 = vmatpush.bf16.msra.mxu0 0
    %2216 = vmatpush.bf16.msra.mxu0 0
    %2217 = vmatpush.bf16.msra.mxu0 0
    %2218 = vmatpush.bf16.msra.mxu0 0
    %2219 = vmatpush.bf16.msra.mxu0 %v1600
    %2220 = vmatpush.bf16.msra.mxu0 %v1599
    %2221 = vmatmul.bf16.gmra.mxu0 %v2211
    %v2222 = vpop.f32.mrf.mxu0
    %v2223 = vadd.f32 %v1586, %v2222
    %v2224 = vpop.f32.mrf.mxu0
    %2225 = vdwg.mxu0
    %v2226 = vpack.c.bf16 %v2138, %v2138
    %2228 = vrot.lane.b32.xlu0 %v2226, 96
    %v2229 = vpop.permute.xlu0 %2228
    %v2231 = vsel %vm1520, %v2229, 0
    %2233 = vmatpush.bf16.msra.mxu0 0
    %2234 = vmatpush.bf16.msra.mxu0 0
    %2235 = vmatpush.bf16.msra.mxu0 0
    %2236 = vmatpush.bf16.msra.mxu0 0
    %2237 = vmatpush.bf16.msra.mxu0 0
    %2238 = vmatpush.bf16.msra.mxu0 0
    %2239 = vmatpush.bf16.msra.mxu0 %v1630
    %2240 = vmatpush.bf16.msra.mxu0 %v1629
    %2241 = vmatmul.bf16.gmra.mxu0 %v2231
    %v2242 = vpop.f32.mrf.mxu0
    %v2243 = vadd.f32 0.0, %v2242
    %v2244 = vpop.f32.mrf.mxu0
    %2245 = vdwg.mxu0
    %v2246 = vadd.f32 %v2223, %v2243
    %v2247 = vxor.u32 %v2246, 2147483648
    %v2248 = vmul.f32 %v2247, 1.442695
    %v2249 = vpow.pop %v2248
    %v2250 = vadd.f32 %v2249, 1.0
    %v2251 = vrcp.pop %v2250
    %v2252 = vmul.f32 %v2250, %v2251
    %v2253 = vsub.f32 1.0, %v2252
    %v2254 = vmul.f32 %v2251, %v2253
    %v2255 = vadd.f32 %v2251, %v2254
    %vm2256 = vweird.f32 %v2250
    %vm2257 = vweird.f32 %v2251
    %vm2258 = vmor %vm2256, %vm2257
    %v2259 = vsel %vm2258, %v2251, %v2255
    %v2260 = vand.u32 2147483647, %v2250
    %vm2261 = vcmp.eq.f32.partialorder %v2260, 8.507059e+37
    %v2262 = vand.u32 %v2250, 2147483648
    %v2263 = vor.u32 1.1754944e-38, %v2262
    %v2264 = vsel %vm2261, %v2263, %v2259
    %v2265 = vmul.f32 1.0, %v2264
    %v2266 = vadd.f32 %v2243, %v1672
    %2268 = vrot.lane.b32.xlu0 %v2266, 64
    %v2269 = vpop.permute.xlu0 %2268
    %v2271 = vmul.f32 %v2265, %v2269
    %2273 = vrot.lane.b32.xlu0 %v2271, 64
    %v2274 = vpop.permute.xlu0 %2273
    %v2276 = vadd.f32 %v2223, %v2274
    %v2277 = vtanh.pop %v2276
    %v2278 = vsub.f32 1.0, %v2265
    %2280 = vrot.lane.b32.xlu0 %v2277, 96
    %v2281 = vpop.permute.xlu0 %2280
    %v2283 = vmul.f32 %v2278, %v2281
    %v2284 = vmul.f32 %v2265, %v2138
    %v2285 = vadd.f32 %v2283, %v2284
    %v2287 = vrot.slane %v2285, 1
    %v2288 = vperm.slane %v2285, 0
    %v2289 = vperm.slane %v2287, 0
    %2290 = vrot.lane.b32.xlu0 %v2288, 96
    %v2291 = vpop.permute.xlu0 %2290
    %2292 = vrot.lane.b32.xlu0 %v2289, 96
    %v2293 = vpop.permute.xlu0 %2292
    %2296 = vst.msk [vmem:[#allocation2 + $0x4] sm:$0x1] %vm1707, %v2291
    %2297 = vst.msk [vmem:[#allocation2 + $0xc] sm:$0x1] %vm1707, %v2293
    %v2298 = vld [vmem:[%s9 + $0xa] sm:$0x3]
    %v2299 = vadd.f32 %v2298, %v1488
    %2300 = vmatpush.bf16.msra.mxu0 0
    %2301 = vmatpush.bf16.msra.mxu0 0
    %2302 = vmatpush.bf16.msra.mxu0 0
    %2303 = vmatpush.bf16.msra.mxu0 0
    %2304 = vmatpush.bf16.msra.mxu0 0
    %2305 = vmatpush.bf16.msra.mxu0 0
    %2306 = vmatpush.bf16.msra.mxu0 %v1517
    %2307 = vmatpush.bf16.msra.mxu0 %v1516
    %2308 = vmatmul.bf16.gmra.mxu0 %v2211
    %v2309 = vpop.f32.mrf.mxu0
    %v2310 = vadd.f32 0.0, %v2309
    %v2311 = vpop.f32.mrf.mxu0
    %2312 = vdwg.mxu0
    %v2313 = vadd.f32 %v2299, %v2310
    %v2314 = vxor.u32 %v2313, 2147483648
    %v2315 = vmul.f32 %v2314, 1.442695
    %v2316 = vpow.pop %v2315
    %v2317 = vadd.f32 %v2316, 1.0
    %v2318 = vrcp.pop %v2317
    %v2319 = vmul.f32 %v2317, %v2318
    %v2320 = vsub.f32 1.0, %v2319
    %v2321 = vmul.f32 %v2318, %v2320
    %v2322 = vadd.f32 %v2318, %v2321
    %vm2323 = vweird.f32 %v2317
    %vm2324 = vweird.f32 %v2318
    %vm2325 = vmor %vm2323, %vm2324
    %v2326 = vsel %vm2325, %v2318, %v2322
    %v2327 = vand.u32 2147483647, %v2317
    %vm2328 = vcmp.eq.f32.partialorder %v2327, 8.507059e+37
    %v2329 = vand.u32 %v2317, 2147483648
    %v2330 = vor.u32 1.1754944e-38, %v2329
    %v2331 = vsel %vm2328, %v2330, %v2326
    %v2332 = vmul.f32 1.0, %v2331
    %v2333 = vadd.f32 %v2310, %v1559
    %2335 = vrot.lane.b32.xlu0 %v2333, 64
    %v2336 = vpop.permute.xlu0 %2335
    %v2338 = vmul.f32 %v2332, %v2336
    %2340 = vrot.lane.b32.xlu0 %v2338, 64
    %v2341 = vpop.permute.xlu0 %2340
    %v2343 = vadd.f32 %v2299, %v2341
    %v2344 = vtanh.pop %v2343
    %v2345 = vsub.f32 1.0, %v2332
    %2347 = vrot.lane.b32.xlu0 %v2344, 96
    %v2348 = vpop.permute.xlu0 %2347
    %v2350 = vmul.f32 %v2345, %v2348
    %v2351 = vmul.f32 %v2332, %v2205
    %v2352 = vadd.f32 %v2350, %v2351
    %v2353 = vpack.c.bf16 %v2352, %v2352
    %2355 = vrot.lane.b32.xlu0 %v2353, 96
    %v2356 = vpop.permute.xlu0 %2355
    %v2358 = vsel %vm1520, %v2356, 0
    %2360 = vmatpush.bf16.msra.mxu0 0
    %2361 = vmatpush.bf16.msra.mxu0 0
    %2362 = vmatpush.bf16.msra.mxu0 0
    %2363 = vmatpush.bf16.msra.mxu0 0
    %2364 = vmatpush.bf16.msra.mxu0 0
    %2365 = vmatpush.bf16.msra.mxu0 0
    %2366 = vmatpush.bf16.msra.mxu0 %v1600
    %2367 = vmatpush.bf16.msra.mxu0 %v1599
    %2368 = vmatmul.bf16.gmra.mxu0 %v2358
    %v2369 = vpop.f32.mrf.mxu0
    %v2370 = vadd.f32 %v1586, %v2369
    %v2371 = vpop.f32.mrf.mxu0
    %2372 = vdwg.mxu0
    %v2373 = vpack.c.bf16 %v2285, %v2285
    %2375 = vrot.lane.b32.xlu0 %v2373, 96
    %v2376 = vpop.permute.xlu0 %2375
    %v2378 = vsel %vm1520, %v2376, 0
    %2380 = vmatpush.bf16.msra.mxu0 0
    %2381 = vmatpush.bf16.msra.mxu0 0
    %2382 = vmatpush.bf16.msra.mxu0 0
    %2383 = vmatpush.bf16.msra.mxu0 0
    %2384 = vmatpush.bf16.msra.mxu0 0
    %2385 = vmatpush.bf16.msra.mxu0 0
    %2386 = vmatpush.bf16.msra.mxu0 %v1630
    %2387 = vmatpush.bf16.msra.mxu0 %v1629
    %2388 = vmatmul.bf16.gmra.mxu0 %v2378
    %v2389 = vpop.f32.mrf.mxu0
    %v2390 = vadd.f32 0.0, %v2389
    %v2391 = vpop.f32.mrf.mxu0
    %2392 = vdwg.mxu0
    %v2393 = vadd.f32 %v2370, %v2390
    %v2394 = vxor.u32 %v2393, 2147483648
    %v2395 = vmul.f32 %v2394, 1.442695
    %v2396 = vpow.pop %v2395
    %v2397 = vadd.f32 %v2396, 1.0
    %v2398 = vrcp.pop %v2397
    %v2399 = vmul.f32 %v2397, %v2398
    %v2400 = vsub.f32 1.0, %v2399
    %v2401 = vmul.f32 %v2398, %v2400
    %v2402 = vadd.f32 %v2398, %v2401
    %vm2403 = vweird.f32 %v2397
    %vm2404 = vweird.f32 %v2398
    %vm2405 = vmor %vm2403, %vm2404
    %v2406 = vsel %vm2405, %v2398, %v2402
    %v2407 = vand.u32 2147483647, %v2397
    %vm2408 = vcmp.eq.f32.partialorder %v2407, 8.507059e+37
    %v2409 = vand.u32 %v2397, 2147483648
    %v2410 = vor.u32 1.1754944e-38, %v2409
    %v2411 = vsel %vm2408, %v2410, %v2406
    %v2412 = vmul.f32 1.0, %v2411
    %v2413 = vadd.f32 %v2390, %v1672
    %2415 = vrot.lane.b32.xlu0 %v2413, 64
    %v2416 = vpop.permute.xlu0 %2415
    %v2418 = vmul.f32 %v2412, %v2416
    %2420 = vrot.lane.b32.xlu0 %v2418, 64
    %v2421 = vpop.permute.xlu0 %2420
    %v2423 = vadd.f32 %v2370, %v2421
    %v2424 = vtanh.pop %v2423
    %v2425 = vsub.f32 1.0, %v2412
    %2427 = vrot.lane.b32.xlu0 %v2424, 96
    %v2428 = vpop.permute.xlu0 %2427
    %v2430 = vmul.f32 %v2425, %v2428
    %v2431 = vmul.f32 %v2412, %v2285
    %v2432 = vadd.f32 %v2430, %v2431
    %v2434 = vrot.slane %v2432, 1
    %v2435 = vperm.slane %v2432, 0
    %v2436 = vperm.slane %v2434, 0
    %2437 = vrot.lane.b32.xlu0 %v2435, 96
    %v2438 = vpop.permute.xlu0 %2437
    %2439 = vrot.lane.b32.xlu0 %v2436, 96
    %v2440 = vpop.permute.xlu0 %2439
    %2443 = vst.msk [vmem:[#allocation2 + $0x5] sm:$0x1] %vm1707, %v2438
    %2444 = vst.msk [vmem:[#allocation2 + $0xd] sm:$0x1] %vm1707, %v2440
    %v2445 = vld [vmem:[%s9 + $0xc] sm:$0x3]
    %v2446 = vadd.f32 %v2445, %v1488
    %2447 = vmatpush.bf16.msra.mxu0 0
    %2448 = vmatpush.bf16.msra.mxu0 0
    %2449 = vmatpush.bf16.msra.mxu0 0
    %2450 = vmatpush.bf16.msra.mxu0 0
    %2451 = vmatpush.bf16.msra.mxu0 0
    %2452 = vmatpush.bf16.msra.mxu0 0
    %2453 = vmatpush.bf16.msra.mxu0 %v1517
    %2454 = vmatpush.bf16.msra.mxu0 %v1516
    %2455 = vmatmul.bf16.gmra.mxu0 %v2358
    %v2456 = vpop.f32.mrf.mxu0
    %v2457 = vadd.f32 0.0, %v2456
    %v2458 = vpop.f32.mrf.mxu0
    %2459 = vdwg.mxu0
    %v2460 = vadd.f32 %v2446, %v2457
    %v2461 = vxor.u32 %v2460, 2147483648
    %v2462 = vmul.f32 %v2461, 1.442695
    %v2463 = vpow.pop %v2462
    %v2464 = vadd.f32 %v2463, 1.0
    %v2465 = vrcp.pop %v2464
    %v2466 = vmul.f32 %v2464, %v2465
    %v2467 = vsub.f32 1.0, %v2466
    %v2468 = vmul.f32 %v2465, %v2467
    %v2469 = vadd.f32 %v2465, %v2468
    %vm2470 = vweird.f32 %v2464
    %vm2471 = vweird.f32 %v2465
    %vm2472 = vmor %vm2470, %vm2471
    %v2473 = vsel %vm2472, %v2465, %v2469
    %v2474 = vand.u32 2147483647, %v2464
    %vm2475 = vcmp.eq.f32.partialorder %v2474, 8.507059e+37
    %v2476 = vand.u32 %v2464, 2147483648
    %v2477 = vor.u32 1.1754944e-38, %v2476
    %v2478 = vsel %vm2475, %v2477, %v2473
    %v2479 = vmul.f32 1.0, %v2478
    %v2480 = vadd.f32 %v2457, %v1559
    %2482 = vrot.lane.b32.xlu0 %v2480, 64
    %v2483 = vpop.permute.xlu0 %2482
    %v2485 = vmul.f32 %v2479, %v2483
    %2487 = vrot.lane.b32.xlu0 %v2485, 64
    %v2488 = vpop.permute.xlu0 %2487
    %v2490 = vadd.f32 %v2446, %v2488
    %v2491 = vtanh.pop %v2490
    %v2492 = vsub.f32 1.0, %v2479
    %2494 = vrot.lane.b32.xlu0 %v2491, 96
    %v2495 = vpop.permute.xlu0 %2494
    %v2497 = vmul.f32 %v2492, %v2495
    %v2498 = vmul.f32 %v2479, %v2352
    %v2499 = vadd.f32 %v2497, %v2498
    %v2500 = vpack.c.bf16 %v2499, %v2499
    %2502 = vrot.lane.b32.xlu0 %v2500, 96
    %v2503 = vpop.permute.xlu0 %2502
    %v2505 = vsel %vm1520, %v2503, 0
    %2507 = vmatpush.bf16.msra.mxu0 0
    %2508 = vmatpush.bf16.msra.mxu0 0
    %2509 = vmatpush.bf16.msra.mxu0 0
    %2510 = vmatpush.bf16.msra.mxu0 0
    %2511 = vmatpush.bf16.msra.mxu0 0
    %2512 = vmatpush.bf16.msra.mxu0 0
    %2513 = vmatpush.bf16.msra.mxu0 %v1600
    %2514 = vmatpush.bf16.msra.mxu0 %v1599
    %2515 = vmatmul.bf16.gmra.mxu0 %v2505
    %v2516 = vpop.f32.mrf.mxu0
    %v2517 = vadd.f32 %v1586, %v2516
    %v2518 = vpop.f32.mrf.mxu0
    %2519 = vdwg.mxu0
    %v2520 = vpack.c.bf16 %v2432, %v2432
    %2522 = vrot.lane.b32.xlu0 %v2520, 96
    %v2523 = vpop.permute.xlu0 %2522
    %v2525 = vsel %vm1520, %v2523, 0
    %2527 = vmatpush.bf16.msra.mxu0 0
    %2528 = vmatpush.bf16.msra.mxu0 0
    %2529 = vmatpush.bf16.msra.mxu0 0
    %2530 = vmatpush.bf16.msra.mxu0 0
    %2531 = vmatpush.bf16.msra.mxu0 0
    %2532 = vmatpush.bf16.msra.mxu0 0
    %2533 = vmatpush.bf16.msra.mxu0 %v1630
    %2534 = vmatpush.bf16.msra.mxu0 %v1629
    %2535 = vmatmul.bf16.gmra.mxu0 %v2525
    %v2536 = vpop.f32.mrf.mxu0
    %v2537 = vadd.f32 0.0, %v2536
    %v2538 = vpop.f32.mrf.mxu0
    %2539 = vdwg.mxu0
    %v2540 = vadd.f32 %v2517, %v2537
    %v2541 = vxor.u32 %v2540, 2147483648
    %v2542 = vmul.f32 %v2541, 1.442695
    %v2543 = vpow.pop %v2542
    %v2544 = vadd.f32 %v2543, 1.0
    %v2545 = vrcp.pop %v2544
    %v2546 = vmul.f32 %v2544, %v2545
    %v2547 = vsub.f32 1.0, %v2546
    %v2548 = vmul.f32 %v2545, %v2547
    %v2549 = vadd.f32 %v2545, %v2548
    %vm2550 = vweird.f32 %v2544
    %vm2551 = vweird.f32 %v2545
    %vm2552 = vmor %vm2550, %vm2551
    %v2553 = vsel %vm2552, %v2545, %v2549
    %v2554 = vand.u32 2147483647, %v2544
    %vm2555 = vcmp.eq.f32.partialorder %v2554, 8.507059e+37
    %v2556 = vand.u32 %v2544, 2147483648
    %v2557 = vor.u32 1.1754944e-38, %v2556
    %v2558 = vsel %vm2555, %v2557, %v2553
    %v2559 = vmul.f32 1.0, %v2558
    %v2560 = vadd.f32 %v2537, %v1672
    %2562 = vrot.lane.b32.xlu0 %v2560, 64
    %v2563 = vpop.permute.xlu0 %2562
    %v2565 = vmul.f32 %v2559, %v2563
    %2567 = vrot.lane.b32.xlu0 %v2565, 64
    %v2568 = vpop.permute.xlu0 %2567
    %v2570 = vadd.f32 %v2517, %v2568
    %v2571 = vtanh.pop %v2570
    %v2572 = vsub.f32 1.0, %v2559
    %2574 = vrot.lane.b32.xlu0 %v2571, 96
    %v2575 = vpop.permute.xlu0 %2574
    %v2577 = vmul.f32 %v2572, %v2575
    %v2578 = vmul.f32 %v2559, %v2432
    %v2579 = vadd.f32 %v2577, %v2578
    %v2581 = vrot.slane %v2579, 1
    %v2582 = vperm.slane %v2579, 0
    %v2583 = vperm.slane %v2581, 0
    %2584 = vrot.lane.b32.xlu0 %v2582, 96
    %v2585 = vpop.permute.xlu0 %2584
    %2586 = vrot.lane.b32.xlu0 %v2583, 96
    %v2587 = vpop.permute.xlu0 %2586
    %2590 = vst.msk [vmem:[#allocation2 + $0x6] sm:$0x1] %vm1707, %v2585
    %2591 = vst.msk [vmem:[#allocation2 + $0xe] sm:$0x1] %vm1707, %v2587
    %v2592 = vld [vmem:[%s9 + $0xe] sm:$0x3]
    %v2593 = vadd.f32 %v2592, %v1488
    %2594 = vmatpush.bf16.msra.mxu0 0
    %2595 = vmatpush.bf16.msra.mxu0 0
    %2596 = vmatpush.bf16.msra.mxu0 0
    %2597 = vmatpush.bf16.msra.mxu0 0
    %2598 = vmatpush.bf16.msra.mxu0 0
    %2599 = vmatpush.bf16.msra.mxu0 0
    %2600 = vmatpush.bf16.msra.mxu0 %v1517
    %2601 = vmatpush.bf16.msra.mxu0 %v1516
    %2602 = vmatmul.bf16.gmra.mxu0 %v2505
    %v2603 = vpop.f32.mrf.mxu0
    %v2604 = vadd.f32 0.0, %v2603
    %v2605 = vpop.f32.mrf.mxu0
    %2606 = vdwg.mxu0
    %v2607 = vadd.f32 %v2593, %v2604
    %v2608 = vxor.u32 %v2607, 2147483648
    %v2609 = vmul.f32 %v2608, 1.442695
    %v2610 = vpow.pop %v2609
    %v2611 = vadd.f32 %v2610, 1.0
    %v2612 = vrcp.pop %v2611
    %v2613 = vmul.f32 %v2611, %v2612
    %v2614 = vsub.f32 1.0, %v2613
    %v2615 = vmul.f32 %v2612, %v2614
    %v2616 = vadd.f32 %v2612, %v2615
    %vm2617 = vweird.f32 %v2611
    %vm2618 = vweird.f32 %v2612
    %vm2619 = vmor %vm2617, %vm2618
    %v2620 = vsel %vm2619, %v2612, %v2616
    %v2621 = vand.u32 2147483647, %v2611
    %vm2622 = vcmp.eq.f32.partialorder %v2621, 8.507059e+37
    %v2623 = vand.u32 %v2611, 2147483648
    %v2624 = vor.u32 1.1754944e-38, %v2623
    %v2625 = vsel %vm2622, %v2624, %v2620
    %v2626 = vmul.f32 1.0, %v2625
    %v2627 = vadd.f32 %v2604, %v1559
    %2629 = vrot.lane.b32.xlu0 %v2627, 64
    %v2630 = vpop.permute.xlu0 %2629
    %v2632 = vmul.f32 %v2626, %v2630
    %2634 = vrot.lane.b32.xlu0 %v2632, 64
    %v2635 = vpop.permute.xlu0 %2634
    %v2637 = vadd.f32 %v2593, %v2635
    %v2638 = vtanh.pop %v2637
    %v2639 = vsub.f32 1.0, %v2626
    %2641 = vrot.lane.b32.xlu0 %v2638, 96
    %v2642 = vpop.permute.xlu0 %2641
    %v2644 = vmul.f32 %v2639, %v2642
    %v2645 = vmul.f32 %v2626, %v2499
    %v2646 = vadd.f32 %v2644, %v2645
    %v2647 = vpack.c.bf16 %v2646, %v2646
    %2649 = vrot.lane.b32.xlu0 %v2647, 96
    %v2650 = vpop.permute.xlu0 %2649
    %v2652 = vsel %vm1520, %v2650, 0
    %2654 = vmatpush.bf16.msra.mxu0 0
    %2655 = vmatpush.bf16.msra.mxu0 0
    %2656 = vmatpush.bf16.msra.mxu0 0
    %2657 = vmatpush.bf16.msra.mxu0 0
    %2658 = vmatpush.bf16.msra.mxu0 0
    %2659 = vmatpush.bf16.msra.mxu0 0
    %2660 = vmatpush.bf16.msra.mxu0 %v1600
    %2661 = vmatpush.bf16.msra.mxu0 %v1599
    %2662 = vmatmul.bf16.gmra.mxu0 %v2652
    %v2663 = vpop.f32.mrf.mxu0
    %v2664 = vadd.f32 %v1586, %v2663
    %v2665 = vpop.f32.mrf.mxu0
    %2666 = vdwg.mxu0
    %v2667 = vpack.c.bf16 %v2579, %v2579
    %2669 = vrot.lane.b32.xlu0 %v2667, 96
    %v2670 = vpop.permute.xlu0 %2669
    %v2672 = vsel %vm1520, %v2670, 0
    %2674 = vmatpush.bf16.msra.mxu0 0
    %2675 = vmatpush.bf16.msra.mxu0 0
    %2676 = vmatpush.bf16.msra.mxu0 0
    %2677 = vmatpush.bf16.msra.mxu0 0
    %2678 = vmatpush.bf16.msra.mxu0 0
    %2679 = vmatpush.bf16.msra.mxu0 0
    %2680 = vmatpush.bf16.msra.mxu0 %v1630
    %2681 = vmatpush.bf16.msra.mxu0 %v1629
    %2682 = vmatmul.bf16.gmra.mxu0 %v2672
    %v2683 = vpop.f32.mrf.mxu0
    %v2684 = vadd.f32 0.0, %v2683
    %v2685 = vpop.f32.mrf.mxu0
    %2686 = vdwg.mxu0
    %v2687 = vadd.f32 %v2664, %v2684
    %v2688 = vxor.u32 %v2687, 2147483648
    %v2689 = vmul.f32 %v2688, 1.442695
    %v2690 = vpow.pop %v2689
    %v2691 = vadd.f32 %v2690, 1.0
    %v2692 = vrcp.pop %v2691
    %v2693 = vmul.f32 %v2691, %v2692
    %v2694 = vsub.f32 1.0, %v2693
    %v2695 = vmul.f32 %v2692, %v2694
    %v2696 = vadd.f32 %v2692, %v2695
    %vm2697 = vweird.f32 %v2691
    %vm2698 = vweird.f32 %v2692
    %vm2699 = vmor %vm2697, %vm2698
    %v2700 = vsel %vm2699, %v2692, %v2696
    %v2701 = vand.u32 2147483647, %v2691
    %vm2702 = vcmp.eq.f32.partialorder %v2701, 8.507059e+37
    %v2703 = vand.u32 %v2691, 2147483648
    %v2704 = vor.u32 1.1754944e-38, %v2703
    %v2705 = vsel %vm2702, %v2704, %v2700
    %v2706 = vmul.f32 1.0, %v2705
    %v2707 = vadd.f32 %v2684, %v1672
    %2709 = vrot.lane.b32.xlu0 %v2707, 64
    %v2710 = vpop.permute.xlu0 %2709
    %v2712 = vmul.f32 %v2706, %v2710
    %2714 = vrot.lane.b32.xlu0 %v2712, 64
    %v2715 = vpop.permute.xlu0 %2714
    %v2717 = vadd.f32 %v2664, %v2715
    %v2718 = vtanh.pop %v2717
    %v2719 = vsub.f32 1.0, %v2706
    %2721 = vrot.lane.b32.xlu0 %v2718, 96
    %v2722 = vpop.permute.xlu0 %2721
    %v2724 = vmul.f32 %v2719, %v2722
    %v2725 = vmul.f32 %v2706, %v2579
    %v2726 = vadd.f32 %v2724, %v2725
    %v2728 = vrot.slane %v2726, 1
    %v2729 = vperm.slane %v2726, 0
    %v2730 = vperm.slane %v2728, 0
    %2731 = vrot.lane.b32.xlu0 %v2729, 96
    %v2732 = vpop.permute.xlu0 %2731
    %2733 = vrot.lane.b32.xlu0 %v2730, 96
    %v2734 = vpop.permute.xlu0 %2733
    %2737 = vst.msk [vmem:[#allocation2 + $0x7] sm:$0x1] %vm1707, %v2732
    %2738 = vst.msk [vmem:[#allocation2 + $0xf] sm:$0x1] %vm1707, %v2734
    %v2739 = vld [vmem:[#allocation2] sm:$0xff]
    %v2740 = vld [vmem:[#allocation2 + $0x8] sm:$0xff]
    %v2741 = vpack.c.bf16 %v2740, %v2739
    %v2742 = vld [vmem:[%s17] sm:$0xf]
    %v2743 = vld [vmem:[%s17 + $0x4] sm:$0xf]
    %v2744 = vld [vmem:[%s17 + $0x8] sm:$0xf]
    %v2745 = vld [vmem:[%s17 + $0xc] sm:$0xf]
    %v2746 = vld [vmem:[%s18] sm:$0x1]
    %v2748 = vperm.slane %v2746, 0
    %v2754 = vunpack.c.l.b16 %v2742
    %v2755 = vunpack.c.l.b16 %v2743
    %v2756 = vunpack.c.l.b16 %v2744
    %v2757 = vunpack.c.l.b16 %v2745
    %v2758 = vpack.c.b16 %v2755, %v2754
    %v2759 = vpack.c.b16 %v2757, %v2756
    %v2763 = vsel %vm1520, %v2741, 0
    %2765 = vmatpush.bf16.msra.mxu0 0
    %2766 = vmatpush.bf16.msra.mxu0 0
    %2767 = vmatpush.bf16.msra.mxu0 0
    %2768 = vmatpush.bf16.msra.mxu0 0
    %2769 = vmatpush.bf16.msra.mxu0 0
    %2770 = vmatpush.bf16.msra.mxu0 0
    %2771 = vmatpush.bf16.msra.mxu0 %v2759
    %2772 = vmatpush.bf16.msra.mxu0 %v2758
    %2773 = vmatmul.bf16.gmra.mxu0 %v2763
    %v2774 = vpop.f32.mrf.mxu0
    %v2775 = vadd.f32 %v2748, %v2774
    %v2776 = vpop.f32.mrf.mxu0
    %v2777 = vadd.f32 %v2748, %v2776
    %2778 = vdwg.mxu0
    %2779 = vst [vmem:[#allocation3] sm:$0xff] %v2775
    %2780 = vst [vmem:[#allocation3 + $0x8] sm:$0xff] %v2777
    %2782 = vrot.lane.b32.xlu0 %v2646, 96
    %v2783 = vpop.permute.xlu0 %2782
    %vm2785 = vcmask 254976
    %2786 = vst.msk [vmem:[#allocation5] sm:$0x3] %vm2785, %v2783
    %2787 = vrot.lane.b32.xlu0 %v2726, 96
    %v2788 = vpop.permute.xlu0 %2787
    %s2790 = scalar_lea.vmem [#allocation5], 2
    %2791 = vst.msk [vmem:[%s2790] sm:$0x3] %vm2785, %v2788
    // Predicated region
    $region78: #{_lambda_.1} parent=1 // pred_check
      _
    $region79: #{_lambda_.1} parent=1 // pred_check_branch
      %2793 = sbr.rel (0) target = $region81
    $region80: #{_lambda_.1} parent=1 // pred_region
      %2795 = vsyncadd [#allocation4], 0
      %s2796 = sshll.u32 [#allocation3], 4
      %s2797 = int_to_ptr.vmem [resolvable:$true] %s2796
      %s2798 = sshll.u32 %s19, 4
      %s2799 = int_to_ptr.hbm [resolvable:$true] %s2798
      %2804 = dma.vmem_to_hbm [thread:$0]  %s2797, 256, %s2799, [#allocation4], 128, 128, 8
    $region81: #{_lambda_.1} parent=1 // pred_fallthru
      _
    // Predicated region
    $region82: #{_lambda_.1} parent=1 // pred_check
      _
    $region83: #{_lambda_.1} parent=1 // pred_check_branch
      %2806 = sbr.rel (0) target = $region85
    $region84: #{_lambda_.1} parent=1 // pred_region
      %2808 = vsyncadd [#allocation6], 0
      %s2809 = sshll.u32 [#allocation5], 4
      %s2810 = int_to_ptr.vmem [resolvable:$true] %s2809
      %s2811 = sshll.u32 %s20, 4
      %s2812 = int_to_ptr.hbm [resolvable:$true] %s2811
      %2817 = dma.vmem_to_hbm [thread:$0]  %s2810, 64, %s2812, [#allocation6], 32, 32, 2
    $region85: #{_lambda_.1} parent=1 // pred_fallthru
      _
    // Predicated region
    $region86: #{_lambda_.1} parent=1 // pred_check
      _
    $region87: #{_lambda_.1} parent=1 // pred_check_branch
      %2819 = sbr.rel (0) target = $region89
    $region88: #{_lambda_.1} parent=1 // pred_region
      %2821 = vsyncadd [#allocation6], 0
      %s2823 = sshll.u32 [#allocation7], 4
      %s2824 = int_to_ptr.vmem [resolvable:$true] %s2823
      %s2825 = sshll.u32 %s21, 4
      %s2826 = int_to_ptr.hbm [resolvable:$true] %s2825
      %2828 = dma.vmem_to_hbm [thread:$0]  %s2824, 16, %s2826, [#allocation6]
    $region89: #{_lambda_.1} parent=1 // pred_fallthru
      _
    // Predicated region
    $region90: #{_lambda_.1} parent=1 // pred_check
      _
    $region91: #{_lambda_.1} parent=1 // pred_check_branch
      %2830 = sbr.rel (0) target = $region93
    $region92: #{_lambda_.1} parent=1 // pred_region
      %2832 = dma.done [#allocation4], 256
    $region93: #{_lambda_.1} parent=1 // pred_fallthru
      _
    // Predicated region
    $region94: #{_lambda_.1} parent=1 // pred_check
      _
    $region95: #{_lambda_.1} parent=1 // pred_check_branch
      %2834 = sbr.rel (0) target = $region97
    $region96: #{_lambda_.1} parent=1 // pred_region
      %2836 = dma.done [#allocation6], 64
    $region97: #{_lambda_.1} parent=1 // pred_fallthru
      _
    // Predicated region
    $region98: #{_lambda_.1} parent=1 // pred_check
      _
    $region99: #{_lambda_.1} parent=1 // pred_check_branch
      %2838 = sbr.rel (0) target = $region101
    $region100: #{_lambda_.1} parent=1 // pred_region
      %2840 = dma.done [#allocation6], 16
    $region101: #{_lambda_.1} parent=1 // pred_fallthru
      _
    %2841 = vsyncpa [#allocation4], 1
    %2842 = vsyncpa [#allocation6], 1

</llo_original>
